<compile_context>
chip_gen: v6e
topology: v6e:2x2x1
jax: 0.10.0
libtpu: 0.0.40
codegen_flags: <defaults>
</compile_context>

<pallas_src>
import functools
import math

import jax
import jax.numpy as jnp
from jax.experimental import pallas as pl
from jax.experimental.pallas import tpu as pltpu


# ----------------------------- tiling helpers ------------------------------ #

def _pick_tile(dim, target, mult):
    """Largest divisor of `dim` that is <= target and a multiple of `mult`; else full dim."""
    if dim <= target:
        return dim
    t = (target // mult) * mult
    while t >= mult:
        if dim % t == 0:
            return t
        t -= mult
    return dim


def _pick_head_group(n_head, head_dim):
    """Smallest head group whose lane width (hg*head_dim) is a multiple of 128; else all heads."""
    for hg in range(1, n_head + 1):
        if n_head % hg == 0 and (hg * head_dim) % 128 == 0:
            return hg
    return n_head


# ----------------------------- Pallas kernels ------------------------------ #

def _ln_matmul_kernel(x_ref, g_ref, bln_ref, w_ref, b_ref, o_ref, *, apply_ln, activation, eps):
    # y = act( LayerNorm(x) @ W + b )   (GPT2 Conv1D semantics: W is [in, out], stored bf16)
    x = x_ref[...].astype(jnp.float32)
    if apply_ln:
        mu = jnp.mean(x, axis=-1, keepdims=True)
        var = jnp.mean((x - mu) * (x - mu), axis=-1, keepdims=True)
        x = (x - mu) * jax.lax.rsqrt(var + eps) * g_ref[...] + bln_ref[...]
    y = jnp.dot(x.astype(jnp.bfloat16), w_ref[...],
                preferred_element_type=jnp.float32) + b_ref[...]
    if activation == "gelu_new":
        # HF NewGELUActivation (tanh approximation)
        y = 0.5 * y * (1.0 + jnp.tanh(0.7978845608028654 * (y + 0.044715 * y * y * y)))
    o_ref[...] = y.astype(o_ref.dtype)


def _matmul_bias_res_kernel_single_k(x_ref, w_ref, b_ref, res_ref, o_ref):
    # Fast path: whole K in one block -> no scratch, no reduction grid axis.
    y = jnp.dot(x_ref[...].astype(jnp.bfloat16), w_ref[...],
                preferred_element_type=jnp.float32)
    o_ref[...] = (y + b_ref[...] + res_ref[...]).astype(o_ref.dtype)


def _matmul_bias_res_kernel_ktiled(x_ref, w_ref, b_ref, res_ref, o_ref, acc_ref):
    # y = x @ W + b + residual, K-tiled with an f32 VMEM accumulator.
    @pl.when(pl.program_id(2) == 0)
    def _():
        acc_ref[...] = jnp.zeros_like(acc_ref)

    acc_ref[...] += jnp.dot(x_ref[...].astype(jnp.bfloat16), w_ref[...],
                            preferred_element_type=jnp.float32)

    @pl.when(pl.program_id(2) == pl.num_programs(2) - 1)
    def _():
        o_ref[...] = (acc_ref[...] + b_ref[...] + res_ref[...]).astype(o_ref.dtype)


def _layernorm_kernel(x_ref, g_ref, b_ref, o_ref, *, eps):
    x = x_ref[...].astype(jnp.float32)
    mu = jnp.mean(x, axis=-1, keepdims=True)
    var = jnp.mean((x - mu) * (x - mu), axis=-1, keepdims=True)
    o_ref[...] = ((x - mu) * jax.lax.rsqrt(var + eps) * g_ref[...] + b_ref[...]).astype(o_ref.dtype)


def _attention_kernel(q_ref, k_ref, v_ref, ctx_ref, p_ref, *, scale, hg, causal):
    # q_ref: (1, 1, hg, T, D);  k_ref / v_ref: (1, 1, hg, S, D)
    # ctx_ref: (1, T, hg*D) — heads merged along lanes;  p_ref: (1, hg, T, S)
    T = q_ref.shape[3]
    S = k_ref.shape[3]
    if causal:
        row = jax.lax.broadcasted_iota(jnp.int32, (T, S), 0)
        col = jax.lax.broadcasted_iota(jnp.int32, (T, S), 1)
        allow = row >= col
    ctx_parts = []
    for h in range(hg):                                   # static unroll over the head group
        qh = q_ref[0, 0, h].astype(jnp.bfloat16)          # (T, D)
        kh = k_ref[0, 0, h].astype(jnp.bfloat16)          # (S, D)
        vh = v_ref[0, 0, h].astype(jnp.bfloat16)          # (S, D)
        s = jnp.dot(qh, kh.T, preferred_element_type=jnp.float32) * scale
        if causal:
            s = jnp.where(allow, s, -1e30)
        m = jnp.max(s, axis=-1, keepdims=True)
        e = jnp.exp(s - m)
        p = e * pl.reciprocal(jnp.sum(e, axis=-1, keepdims=True), approx=True)
        p_ref[0, h] = p
        ctx_parts.append(jnp.dot(p.astype(jnp.bfloat16), vh,
                                 preferred_element_type=jnp.float32))
    # single lane-dense store of the merged head-group context
    ctx_ref[0] = jnp.concatenate(ctx_parts, axis=-1).astype(ctx_ref.dtype)


# ------------------------------ Pallas wrappers ----------------------------- #

def pallas_ln_matmul(x, gamma, beta, w, b, *, apply_ln=True, activation=None,
                     eps=1e-5, out_dtype=jnp.float32, tm=256, tn=512):
    # Fused (optional) LayerNorm + projection.  K is kept whole per block (needed for LN);
    # M/N are tiled and both grid axes are "parallel" (megacore-shardable).
    M, K = x.shape
    N = w.shape[1]
    tm = _pick_tile(M, tm, 8)
    tn = _pick_tile(N, tn, 128)
    if gamma is None:
        gamma = jnp.ones((K,), jnp.float32)
    if beta is None:
        beta = jnp.zeros((K,), jnp.float32)
    return pl.pallas_call(
        functools.partial(_ln_matmul_kernel, apply_ln=apply_ln, activation=activation, eps=eps),
        grid=(M // tm, N // tn),
        in_specs=[
            pl.BlockSpec((tm, K), lambda i, j: (i, 0)),
            pl.BlockSpec((1, K), lambda i, j: (0, 0)),
            pl.BlockSpec((1, K), lambda i, j: (0, 0)),
            pl.BlockSpec((K, tn), lambda i, j: (0, j)),
            pl.BlockSpec((1, tn), lambda i, j: (0, j)),
        ],
        out_specs=pl.BlockSpec((tm, tn), lambda i, j: (i, j)),
        out_shape=jax.ShapeDtypeStruct((M, N), out_dtype),
        compiler_params=pltpu.CompilerParams(dimension_semantics=("parallel", "parallel")),
    )(x, gamma.reshape(1, K), beta.reshape(1, K), w, b.reshape(1, N))


def pallas_matmul_bias_res(x, w, b, res, *, out_dtype=jnp.float32, tm=256, tn=512, tk=512):
    # Fused projection + bias + residual add.  Single-K-tile fast path (no scratch,
    # fully parallel grid) when K fits; otherwise K-tiled with an f32 accumulator.
    M, K = x.shape
    N = w.shape[1]
    tm = _pick_tile(M, tm, 8)
    tn = _pick_tile(N, tn, 128)
    tk = _pick_tile(K, tk, 128)
    if tk == K:
        return pl.pallas_call(
            _matmul_bias_res_kernel_single_k,
            grid=(M // tm, N // tn),
            in_specs=[
                pl.BlockSpec((tm, K), lambda i, j: (i, 0)),
                pl.BlockSpec((K, tn), lambda i, j: (0, j)),
                pl.BlockSpec((1, tn), lambda i, j: (0, j)),
                pl.BlockSpec((tm, tn), lambda i, j: (i, j)),
            ],
            out_specs=pl.BlockSpec((tm, tn), lambda i, j: (i, j)),
            out_shape=jax.ShapeDtypeStruct((M, N), out_dtype),
            compiler_params=pltpu.CompilerParams(dimension_semantics=("parallel", "parallel")),
        )(x, w, b.reshape(1, N), res)
    return pl.pallas_call(
        _matmul_bias_res_kernel_ktiled,
        grid=(M // tm, N // tn, K // tk),
        in_specs=[
            pl.BlockSpec((tm, tk), lambda i, j, k: (i, k)),
            pl.BlockSpec((tk, tn), lambda i, j, k: (k, j)),
            pl.BlockSpec((1, tn), lambda i, j, k: (0, j)),
            pl.BlockSpec((tm, tn), lambda i, j, k: (i, j)),
        ],
        out_specs=pl.BlockSpec((tm, tn), lambda i, j, k: (i, j)),
        out_shape=jax.ShapeDtypeStruct((M, N), out_dtype),
        scratch_shapes=[pltpu.VMEM((tm, tn), jnp.float32)],
        compiler_params=pltpu.CompilerParams(
            dimension_semantics=("parallel", "parallel", "arbitrary")),
    )(x, w, b.reshape(1, N), res)


def pallas_layernorm(x, gamma, beta, eps=1e-5, tm=512):
    M, K = x.shape
    tm = _pick_tile(M, tm, 8)
    return pl.pallas_call(
        functools.partial(_layernorm_kernel, eps=eps),
        grid=(M // tm,),
        in_specs=[
            pl.BlockSpec((tm, K), lambda i: (i, 0)),
            pl.BlockSpec((1, K), lambda i: (0, 0)),
            pl.BlockSpec((1, K), lambda i: (0, 0)),
        ],
        out_specs=pl.BlockSpec((tm, K), lambda i: (i, 0)),
        out_shape=jax.ShapeDtypeStruct((M, K), jnp.float32),
        compiler_params=pltpu.CompilerParams(dimension_semantics=("parallel",)),
    )(x, gamma.reshape(1, K), beta.reshape(1, K))


def pallas_attention(q_arr, q_slot, kv_arr, k_slot, v_slot, *, causal, out_dtype=jnp.bfloat16):
    # q_arr: (B, Qslots, H, T, D) head-major; kv_arr: (B, KVslots, H, S, D).
    # Grid walks (batch, head-group); a head-group is chosen so the merged context
    # store is lane-dense (hg*D multiple of 128 when possible).
    B, _, H, T, D = q_arr.shape
    S = kv_arr.shape[3]
    hg = _pick_head_group(H, D)
    scale = 1.0 / math.sqrt(D)   # GPT2: divide scores by sqrt(head_dim)
    ctx, probs = pl.pallas_call(
        functools.partial(_attention_kernel, scale=scale, hg=hg, causal=causal),
        grid=(B, H // hg),
        in_specs=[
            pl.BlockSpec((1, 1, hg, T, D), lambda b, g, s=q_slot: (b, s, g, 0, 0)),
            pl.BlockSpec((1, 1, hg, S, D), lambda b, g, s=k_slot: (b, s, g, 0, 0)),
            pl.BlockSpec((1, 1, hg, S, D), lambda b, g, s=v_slot: (b, s, g, 0, 0)),
        ],
        out_specs=[
            pl.BlockSpec((1, T, hg * D), lambda b, g: (b, 0, g)),
            pl.BlockSpec((1, hg, T, S), lambda b, g: (b, g, 0, 0)),
        ],
        out_shape=[
            jax.ShapeDtypeStruct((B, T, H * D), out_dtype),   # merged context (no merge_heads needed)
            jax.ShapeDtypeStruct((B, H, T, S), jnp.float32),  # attention probabilities
        ],
        compiler_params=pltpu.CompilerParams(dimension_semantics=("parallel", "parallel")),
    )(q_arr, kv_arr, kv_arr)
    return ctx, probs


# ------------------------------ GPT2 decoder -------------------------------- #

def gpt2_decoder_forward(params, inputs_embeds, encoder_outputs, *, n_head, eps=1e-5):
    B, T, E = inputs_embeds.shape
    S = encoder_outputs.shape[1]
    H = n_head
    D = E // H

    h = (inputs_embeds + params["wpe"][:T][None, :, :]).reshape(B * T, E).astype(jnp.float32)
    enc_flat = encoder_outputs.reshape(B * S, E).astype(jnp.float32)

    all_hidden_states = []
    all_self_attns = []
    all_cross_attns = []
    presents = []

    for lp in params["layers"]:
        all_hidden_states.append(h.reshape(B, T, E))

        # --- self attention: fused ln_1 + c_attn projection ---
        qkv = pallas_ln_matmul(h, lp["ln_1_g"], lp["ln_1_b"],
                               lp["attn_c_attn_w"], lp["attn_c_attn_b"], eps=eps)      # (B*T, 3E)
        # single head-major transpose (replaces per-tensor split_heads/merge_heads + slices)
        qkv_t = jnp.transpose(qkv.reshape(B, T, 3, H, D), (0, 2, 3, 1, 4))             # (B, 3, H, T, D)
        ctx, attn_p = pallas_attention(qkv_t, 0, qkv_t, 1, 2, causal=True)
        presents.append((qkv_t[:, 1], qkv_t[:, 2]))                                    # (B, H, T, D) each
        all_self_attns.append(attn_p)
        h = pallas_matmul_bias_res(ctx.reshape(B * T, E),
                                   lp["attn_c_proj_w"], lp["attn_c_proj_b"], h)

        # --- cross attention: ln_cross + q proj; c_attn applied to encoder states (no LN) ---
        q = pallas_ln_matmul(h, lp["ln_cross_g"], lp["ln_cross_b"],
                             lp["cross_q_attn_w"], lp["cross_q_attn_b"],
                             eps=eps, out_dtype=jnp.bfloat16)                           # (B*T, E)
        kv = pallas_ln_matmul(enc_flat, None, None,
                              lp["cross_c_attn_w"], lp["cross_c_attn_b"],
                              apply_ln=False, out_dtype=jnp.bfloat16)                   # (B*S, 2E)
        q_t = jnp.transpose(q.reshape(B, T, 1, H, D), (0, 2, 3, 1, 4))                  # (B, 1, H, T, D)
        kv_t = jnp.transpose(kv.reshape(B, S, 2, H, D), (0, 2, 3, 1, 4))                # (B, 2, H, S, D)
        xctx, xattn_p = pallas_attention(q_t, 0, kv_t, 0, 1, causal=False)
        all_cross_attns.append(xattn_p)
        h = pallas_matmul_bias_res(xctx.reshape(B * T, E),
                                   lp["cross_c_proj_w"], lp["cross_c_proj_b"], h)

        # --- MLP: fused ln_2 + c_fc + gelu_new, then c_proj + bias + residual ---
        ff = pallas_ln_matmul(h, lp["ln_2_g"], lp["ln_2_b"],
                              lp["mlp_c_fc_w"], lp["mlp_c_fc_b"],
                              activation="gelu_new", eps=eps, out_dtype=jnp.bfloat16)   # (B*T, 4E)
        h = pallas_matmul_bias_res(ff, lp["mlp_c_proj_w"], lp["mlp_c_proj_b"], h)

    hf = pallas_layernorm(h, params["ln_f_g"], params["ln_f_b"], eps).reshape(B, T, E)
    all_hidden_states.append(hf)

    return hf, tuple(presents), tuple(all_hidden_states), tuple(all_self_attns), tuple(all_cross_attns)


# ------------------------------ parameter init ------------------------------ #

def init_params(key, n_layer, n_embd, n_positions):
    E = n_embd
    keys = iter(jax.random.split(key, 8 + n_layer * 16))

    def w(shape, scale=0.02):
        # matmul weights stored in bf16 (MXU-native); accumulation stays f32 in-kernel.
        return (scale * jax.random.normal(next(keys), shape)).astype(jnp.bfloat16)

    params = {
        "wpe": (0.02 * jax.random.normal(next(keys), (n_positions, E))).astype(jnp.float32),
        "ln_f_g": jnp.ones((E,), jnp.float32),
        "ln_f_b": jnp.zeros((E,), jnp.float32),
        "layers": [],
    }
    for _ in range(n_layer):
        params["layers"].append({
            "ln_1_g": jnp.ones((E,), jnp.float32), "ln_1_b": jnp.zeros((E,), jnp.float32),
            "attn_c_attn_w": w((E, 3 * E)), "attn_c_attn_b": jnp.zeros((3 * E,), jnp.float32),
            "attn_c_proj_w": w((E, E)), "attn_c_proj_b": jnp.zeros((E,), jnp.float32),
            "ln_cross_g": jnp.ones((E,), jnp.float32), "ln_cross_b": jnp.zeros((E,), jnp.float32),
            "cross_q_attn_w": w((E, E)), "cross_q_attn_b": jnp.zeros((E,), jnp.float32),
            "cross_c_attn_w": w((E, 2 * E)), "cross_c_attn_b": jnp.zeros((2 * E,), jnp.float32),
            "cross_c_proj_w": w((E, E)), "cross_c_proj_b": jnp.zeros((E,), jnp.float32),
            "ln_2_g": jnp.ones((E,), jnp.float32), "ln_2_b": jnp.zeros((E,), jnp.float32),
            "mlp_c_fc_w": w((E, 4 * E)), "mlp_c_fc_b": jnp.zeros((4 * E,), jnp.float32),
            "mlp_c_proj_w": w((4 * E, E)), "mlp_c_proj_b": jnp.zeros((E,), jnp.float32),
        })
    return params


# ----------------------------------- main ------------------------------------ #

if __name__ == "__main__":
    B, T, S_ENC = 2, 8, 16
    N_EMBD, N_HEAD, N_LAYER, N_POS = 32, 4, 2, 64

    key = jax.random.PRNGKey(0)
    k_params, k_emb, k_enc = jax.random.split(key, 3)

    params = init_params(k_params, N_LAYER, N_EMBD, N_POS)
    inputs_embeds = jax.random.normal(k_emb, (B, T, N_EMBD), jnp.float32)
    encoder_outputs = jax.random.normal(k_enc, (B, S_ENC, N_EMBD), jnp.float32)

    # jit the whole forward so XLA fuses the inter-kernel reshapes/transposes and
    # the many small pallas_calls dispatch without per-op Python overhead.
    fwd = jax.jit(functools.partial(gpt2_decoder_forward, n_head=N_HEAD))

    hidden_states, presents, all_hidden, all_self_attn, all_cross_attn = fwd(
        params, inputs_embeds, encoder_outputs)

    jax.block_until_ready(hidden_states)
    jax.block_until_ready(all_self_attn[-1])
    jax.block_until_ready(all_cross_attn[-1])

    assert hidden_states.shape == (B, T, N_EMBD)
    assert len(presents) == N_LAYER and presents[0][0].shape == (B, N_HEAD, T, N_EMBD // N_HEAD)
    assert len(all_hidden) == N_LAYER + 1
    assert all_self_attn[0].shape == (B, N_HEAD, T, T)
    assert all_cross_attn[0].shape == (B, N_HEAD, T, S_ENC)

    print("KERNEL_OK")
</pallas_src>

<mosaic_0001>
module attributes {stable_mosaic.version = 11 : i64} {
  func.func @_ln_matmul_kernel(%arg0: i32, %arg1: i32, %arg2: memref<16x32xf32, #tpu.memory_space<vmem>>, %arg3: memref<1x32xf32, #tpu.memory_space<vmem>>, %arg4: memref<1x32xf32, #tpu.memory_space<vmem>>, %arg5: memref<32x96xbf16, #tpu.memory_space<vmem>>, %arg6: memref<1x96xf32, #tpu.memory_space<vmem>>, %arg7: memref<16x96xf32, #tpu.memory_space<vmem>>) attributes {dimension_semantics = [#tpu.dimension_semantics<parallel>, #tpu.dimension_semantics<parallel>], iteration_bounds = array<i64: 1, 1>, scalar_prefetch = 0 : i64, scratch_operands = 0 : i64, tpu.core_type = #tpu.core_type<tc>, window_params = [{transform_indices = @transform_0, window_bounds = array<i64: 16, 32>}, {pipeline_mode = #tpu.pipeline_mode<synchronous>, transform_indices = @transform_1, window_bounds = array<i64: 1, 32>}, {pipeline_mode = #tpu.pipeline_mode<synchronous>, transform_indices = @transform_2, window_bounds = array<i64: 1, 32>}, {transform_indices = @transform_3, window_bounds = array<i64: 32, 96>}, {transform_indices = @transform_4, window_bounds = array<i64: 1, 96>}, {transform_indices = @transform_5, window_bounds = array<i64: 16, 96>}]} {
    %c0 = arith.constant 0 : index
    %c0_0 = arith.constant 0 : index
    %0 = vector.load %arg2[%c0, %c0_0] : memref<16x32xf32, #tpu.memory_space<vmem>>, vector<16x32xf32>
    %cst = arith.constant dense<0.000000e+00> : vector<16xf32>
    %1 = vector.multi_reduction <add>, %0, %cst [1] : vector<16x32xf32> to vector<16xf32>
    %2 = vector.shape_cast %1 : vector<16xf32> to vector<16x1xf32>
    %cst_1 = arith.constant 3.200000e+01 : f32
    %3 = vector.broadcast %cst_1 : f32 to vector<16x1xf32>
    %4 = arith.divf %2, %3 : vector<16x1xf32>
    %5 = vector.broadcast %4 : vector<16x1xf32> to vector<16x32xf32>
    %6 = arith.subf %0, %5 : vector<16x32xf32>
    %7 = vector.broadcast %4 : vector<16x1xf32> to vector<16x32xf32>
    %8 = arith.subf %0, %7 : vector<16x32xf32>
    %9 = arith.mulf %6, %8 : vector<16x32xf32>
    %cst_2 = arith.constant dense<0.000000e+00> : vector<16xf32>
    %10 = vector.multi_reduction <add>, %9, %cst_2 [1] : vector<16x32xf32> to vector<16xf32>
    %11 = vector.shape_cast %10 : vector<16xf32> to vector<16x1xf32>
    %cst_3 = arith.constant 3.200000e+01 : f32
    %12 = vector.broadcast %cst_3 : f32 to vector<16x1xf32>
    %13 = arith.divf %11, %12 : vector<16x1xf32>
    %14 = vector.broadcast %4 : vector<16x1xf32> to vector<16x32xf32>
    %15 = arith.subf %0, %14 : vector<16x32xf32>
    %cst_4 = arith.constant 9.99999974E-6 : f32
    %16 = vector.broadcast %cst_4 : f32 to vector<16x1xf32>
    %17 = arith.addf %13, %16 : vector<16x1xf32>
    %18 = math.rsqrt %17 : vector<16x1xf32>
    %19 = vector.broadcast %18 : vector<16x1xf32> to vector<16x32xf32>
    %20 = arith.mulf %15, %19 : vector<16x32xf32>
    %c0_5 = arith.constant 0 : index
    %c0_6 = arith.constant 0 : index
    %21 = vector.load %arg3[%c0_5, %c0_6] : memref<1x32xf32, #tpu.memory_space<vmem>>, vector<1x32xf32>
    %22 = vector.broadcast %21 : vector<1x32xf32> to vector<16x32xf32>
    %23 = arith.mulf %20, %22 : vector<16x32xf32>
    %c0_7 = arith.constant 0 : index
    %c0_8 = arith.constant 0 : index
    %24 = vector.load %arg4[%c0_7, %c0_8] : memref<1x32xf32, #tpu.memory_space<vmem>>, vector<1x32xf32>
    %25 = vector.broadcast %24 : vector<1x32xf32> to vector<16x32xf32>
    %26 = arith.addf %23, %25 : vector<16x32xf32>
    %27 = arith.truncf %26 : vector<16x32xf32> to vector<16x32xbf16>
    %c0_9 = arith.constant 0 : index
    %c0_10 = arith.constant 0 : index
    %28 = vector.load %arg5[%c0_9, %c0_10] : memref<32x96xbf16, #tpu.memory_space<vmem>>, vector<32x96xbf16>
    %cst_11 = arith.constant dense<0.000000e+00> : vector<16x96xf32>
    %29 = tpu.matmul %27, %28, %cst_11 {dimension_numbers = #tpu.dot_dimension_numbers<[1], [0], [0], [1], [0, 0, 1, 1], [], []>} : vector<16x32xbf16>, vector<32x96xbf16>, vector<16x96xf32> -> vector<16x96xf32>
    %c0_12 = arith.constant 0 : index
    %c0_13 = arith.constant 0 : index
    %30 = vector.load %arg6[%c0_12, %c0_13] : memref<1x96xf32, #tpu.memory_space<vmem>>, vector<1x96xf32>
    %31 = vector.broadcast %30 : vector<1x96xf32> to vector<16x96xf32>
    %32 = arith.addf %29, %31 : vector<16x96xf32>
    %c0_14 = arith.constant 0 : index
    %c0_15 = arith.constant 0 : index
    %33 = vector.load %arg7[%c0_14, %c0_15] : memref<16x96xf32, #tpu.memory_space<vmem>>, vector<16x96xf32>
    tpu.vector_store %arg7[%c0_14, %c0_15], %32 {strides = array<i32>} : memref<16x96xf32, #tpu.memory_space<vmem>>, vector<16x96xf32>,
    return
  }
  func.func @transform_0(%arg0: i32, %arg1: i32) -> (i32, i32) {
    %c0_i32 = arith.constant 0 : i32
    %c0_i32_0 = arith.constant 0 : i32
    return %arg0, %c0_i32 : i32, i32
  }
  func.func @transform_1(%arg0: i32, %arg1: i32) -> (i32, i32) {
    %c0_i32 = arith.constant 0 : i32
    %c0_i32_0 = arith.constant 0 : i32
    %c0_i32_1 = arith.constant 0 : i32
    return %c0_i32, %c0_i32_0 : i32, i32
  }
  func.func @transform_2(%arg0: i32, %arg1: i32) -> (i32, i32) {
    %c0_i32 = arith.constant 0 : i32
    %c0_i32_0 = arith.constant 0 : i32
    %c0_i32_1 = arith.constant 0 : i32
    return %c0_i32, %c0_i32_0 : i32, i32
  }
  func.func @transform_3(%arg0: i32, %arg1: i32) -> (i32, i32) {
    %c0_i32 = arith.constant 0 : i32
    %c0_i32_0 = arith.constant 0 : i32
    return %c0_i32, %arg1 : i32, i32
  }
  func.func @transform_4(%arg0: i32, %arg1: i32) -> (i32, i32) {
    %c0_i32 = arith.constant 0 : i32
    %c0_i32_0 = arith.constant 0 : i32
    return %c0_i32, %arg1 : i32, i32
  }
  func.func @transform_5(%arg0: i32, %arg1: i32) -> (i32, i32) {
    %c0_i32 = arith.constant 0 : i32
    return %arg0, %arg1 : i32, i32
  }
}

module attributes {stable_mosaic.version = 11 : i64} {
  func.func @_attention_kernel(%arg0: i32, %arg1: i32, %arg2: memref<1x1x4x8x8xf32, #tpu.memory_space<vmem>>, %arg3: memref<1x1x4x8x8xf32, #tpu.memory_space<vmem>>, %arg4: memref<1x1x4x8x8xf32, #tpu.memory_space<vmem>>, %arg5: memref<1x8x32xbf16, #tpu.memory_space<vmem>>, %arg6: memref<1x4x8x8xf32, #tpu.memory_space<vmem>>) attributes {dimension_semantics = [#tpu.dimension_semantics<parallel>, #tpu.dimension_semantics<parallel>], iteration_bounds = array<i64: 2, 1>, scalar_prefetch = 0 : i64, scratch_operands = 0 : i64, tpu.core_type = #tpu.core_type<tc>, window_params = [{transform_indices = @transform_0, window_bounds = array<i64: 1, 1, 4, 8, 8>}, {transform_indices = @transform_1, window_bounds = array<i64: 1, 1, 4, 8, 8>}, {transform_indices = @transform_2, window_bounds = array<i64: 1, 1, 4, 8, 8>}, {transform_indices = @transform_3, window_bounds = array<i64: 1, 8, 32>}, {transform_indices = @transform_4, window_bounds = array<i64: 1, 4, 8, 8>}]} {
    %0 = tpu.iota {dimensions = array<i32: 0>} : vector<8x8xi32>
    %1 = tpu.iota {dimensions = array<i32: 1>} : vector<8x8xi32>
    %2 = arith.cmpi sge, %0, %1 : vector<8x8xi32>
    %c0 = arith.constant 0 : index
    %c0_0 = arith.constant 0 : index
    %c0_1 = arith.constant 0 : index
    %c0_2 = arith.constant 0 : index
    %c0_3 = arith.constant 0 : index
    %3 = vector.load %arg2[%c0, %c0_0, %c0_1, %c0_2, %c0_3] : memref<1x1x4x8x8xf32, #tpu.memory_space<vmem>>, vector<1x1x1x8x8xf32>
    %4 = vector.shape_cast %3 : vector<1x1x1x8x8xf32> to vector<8x8xf32>
    %5 = arith.truncf %4 : vector<8x8xf32> to vector<8x8xbf16>
    %c0_4 = arith.constant 0 : index
    %c0_5 = arith.constant 0 : index
    %c0_6 = arith.constant 0 : index
    %c0_7 = arith.constant 0 : index
    %c0_8 = arith.constant 0 : index
    %6 = vector.load %arg3[%c0_4, %c0_5, %c0_6, %c0_7, %c0_8] : memref<1x1x4x8x8xf32, #tpu.memory_space<vmem>>, vector<1x1x1x8x8xf32>
    %7 = vector.shape_cast %6 : vector<1x1x1x8x8xf32> to vector<8x8xf32>
    %8 = arith.truncf %7 : vector<8x8xf32> to vector<8x8xbf16>
    %c0_9 = arith.constant 0 : index
    %c0_10 = arith.constant 0 : index
    %c0_11 = arith.constant 0 : index
    %c0_12 = arith.constant 0 : index
    %c0_13 = arith.constant 0 : index
    %9 = vector.load %arg4[%c0_9, %c0_10, %c0_11, %c0_12, %c0_13] : memref<1x1x4x8x8xf32, #tpu.memory_space<vmem>>, vector<1x1x1x8x8xf32>
    %10 = vector.shape_cast %9 : vector<1x1x1x8x8xf32> to vector<8x8xf32>
    %11 = arith.truncf %10 : vector<8x8xf32> to vector<8x8xbf16>
    %12 = tpu.transpose %8, [1, 0] : vector<8x8xbf16> -> vector<8x8xbf16>
    %cst = arith.constant dense<0.000000e+00> : vector<8x8xf32>
    %13 = tpu.matmul %5, %12, %cst {dimension_numbers = #tpu.dot_dimension_numbers<[1], [0], [0], [1], [0, 0, 1, 1], [], []>} : vector<8x8xbf16>, vector<8x8xbf16>, vector<8x8xf32> -> vector<8x8xf32>
    %cst_14 = arith.constant 0.353553385 : f32
    %14 = vector.broadcast %cst_14 : f32 to vector<8x8xf32>
    %15 = arith.mulf %13, %14 : vector<8x8xf32>
    %cst_15 = arith.constant -1.000000e+30 : f32
    %16 = vector.broadcast %cst_15 : f32 to vector<8x8xf32>
    %17 = arith.select %2, %15, %16 : vector<8x8xi1>, vector<8x8xf32>
    %cst_16 = arith.constant dense<0xFF800000> : vector<8xf32>
    %18 = vector.multi_reduction <maximumf>, %17, %cst_16 [1] : vector<8x8xf32> to vector<8xf32>
    %19 = vector.shape_cast %18 : vector<8xf32> to vector<8x1xf32>
    %20 = vector.broadcast %19 : vector<8x1xf32> to vector<8x8xf32>
    %21 = arith.subf %17, %20 : vector<8x8xf32>
    %22 = math.exp %21 : vector<8x8xf32>
    %cst_17 = arith.constant dense<0.000000e+00> : vector<8xf32>
    %23 = vector.multi_reduction <add>, %22, %cst_17 [1] : vector<8x8xf32> to vector<8xf32>
    %24 = vector.shape_cast %23 : vector<8xf32> to vector<8x1xf32>
    %25 = tpu.reciprocal %24 {approx = true} : vector<8x1xf32> -> vector<8x1xf32>
    %26 = vector.broadcast %25 : vector<8x1xf32> to vector<8x8xf32>
    %27 = arith.mulf %22, %26 : vector<8x8xf32>
    %c0_18 = arith.constant 0 : index
    %c0_19 = arith.constant 0 : index
    %c0_20 = arith.constant 0 : index
    %c0_21 = arith.constant 0 : index
    %28 = vector.load %arg6[%c0_18, %c0_19, %c0_20, %c0_21] : memref<1x4x8x8xf32, #tpu.memory_space<vmem>>, vector<1x1x8x8xf32>
    %29 = vector.shape_cast %28 : vector<1x1x8x8xf32> to vector<8x8xf32>
    %30 = vector.shape_cast %27 : vector<8x8xf32> to vector<1x1x8x8xf32>
    tpu.vector_store %arg6[%c0_18, %c0_19, %c0_20, %c0_21], %30 {strides = array<i32>} : memref<1x4x8x8xf32, #tpu.memory_space<vmem>>, vector<1x1x8x8xf32>,
    %31 = arith.truncf %27 : vector<8x8xf32> to vector<8x8xbf16>
    %cst_22 = arith.constant dense<0.000000e+00> : vector<8x8xf32>
    %32 = tpu.matmul %31, %11, %cst_22 {dimension_numbers = #tpu.dot_dimension_numbers<[1], [0], [0], [1], [0, 0, 1, 1], [], []>} : vector<8x8xbf16>, vector<8x8xbf16>, vector<8x8xf32> -> vector<8x8xf32>
    %c0_23 = arith.constant 0 : index
    %c0_24 = arith.constant 0 : index
    %c1 = arith.constant 1 : index
    %c0_25 = arith.constant 0 : index
    %c0_26 = arith.constant 0 : index
    %33 = vector.load %arg2[%c0_23, %c0_24, %c1, %c0_25, %c0_26] : memref<1x1x4x8x8xf32, #tpu.memory_space<vmem>>, vector<1x1x1x8x8xf32>
    %34 = vector.shape_cast %33 : vector<1x1x1x8x8xf32> to vector<8x8xf32>
    %35 = arith.truncf %34 : vector<8x8xf32> to vector<8x8xbf16>
    %c0_27 = arith.constant 0 : index
    %c0_28 = arith.constant 0 : index
    %c1_29 = arith.constant 1 : index
    %c0_30 = arith.constant 0 : index
    %c0_31 = arith.constant 0 : index
    %36 = vector.load %arg3[%c0_27, %c0_28, %c1_29, %c0_30, %c0_31] : memref<1x1x4x8x8xf32, #tpu.memory_space<vmem>>, vector<1x1x1x8x8xf32>
    %37 = vector.shape_cast %36 : vector<1x1x1x8x8xf32> to vector<8x8xf32>
    %38 = arith.truncf %37 : vector<8x8xf32> to vector<8x8xbf16>
    %c0_32 = arith.constant 0 : index
    %c0_33 = arith.constant 0 : index
    %c1_34 = arith.constant 1 : index
    %c0_35 = arith.constant 0 : index
    %c0_36 = arith.constant 0 : index
    %39 = vector.load %arg4[%c0_32, %c0_33, %c1_34, %c0_35, %c0_36] : memref<1x1x4x8x8xf32, #tpu.memory_space<vmem>>, vector<1x1x1x8x8xf32>
    %40 = vector.shape_cast %39 : vector<1x1x1x8x8xf32> to vector<8x8xf32>
    %41 = arith.truncf %40 : vector<8x8xf32> to vector<8x8xbf16>
    %42 = tpu.transpose %38, [1, 0] : vector<8x8xbf16> -> vector<8x8xbf16>
    %cst_37 = arith.constant dense<0.000000e+00> : vector<8x8xf32>
    %43 = tpu.matmul %35, %42, %cst_37 {dimension_numbers = #tpu.dot_dimension_numbers<[1], [0], [0], [1], [0, 0, 1, 1], [], []>} : vector<8x8xbf16>, vector<8x8xbf16>, vector<8x8xf32> -> vector<8x8xf32>
    %cst_38 = arith.constant 0.353553385 : f32
    %44 = vector.broadcast %cst_38 : f32 to vector<8x8xf32>
    %45 = arith.mulf %43, %44 : vector<8x8xf32>
    %cst_39 = arith.constant -1.000000e+30 : f32
    %46 = vector.broadcast %cst_39 : f32 to vector<8x8xf32>
    %47 = arith.select %2, %45, %46 : vector<8x8xi1>, vector<8x8xf32>
    %cst_40 = arith.constant dense<0xFF800000> : vector<8xf32>
    %48 = vector.multi_reduction <maximumf>, %47, %cst_40 [1] : vector<8x8xf32> to vector<8xf32>
    %49 = vector.shape_cast %48 : vector<8xf32> to vector<8x1xf32>
    %50 = vector.broadcast %49 : vector<8x1xf32> to vector<8x8xf32>
    %51 = arith.subf %47, %50 : vector<8x8xf32>
    %52 = math.exp %51 : vector<8x8xf32>
    %cst_41 = arith.constant dense<0.000000e+00> : vector<8xf32>
    %53 = vector.multi_reduction <add>, %52, %cst_41 [1] : vector<8x8xf32> to vector<8xf32>
    %54 = vector.shape_cast %53 : vector<8xf32> to vector<8x1xf32>
    %55 = tpu.reciprocal %54 {approx = true} : vector<8x1xf32> -> vector<8x1xf32>
    %56 = vector.broadcast %55 : vector<8x1xf32> to vector<8x8xf32>
    %57 = arith.mulf %52, %56 : vector<8x8xf32>
    %c0_42 = arith.constant 0 : index
    %c1_43 = arith.constant 1 : index
    %c0_44 = arith.constant 0 : index
    %c0_45 = arith.constant 0 : index
    %58 = vector.load %arg6[%c0_42, %c1_43, %c0_44, %c0_45] : memref<1x4x8x8xf32, #tpu.memory_space<vmem>>, vector<1x1x8x8xf32>
    %59 = vector.shape_cast %58 : vector<1x1x8x8xf32> to vector<8x8xf32>
    %60 = vector.shape_cast %57 : vector<8x8xf32> to vector<1x1x8x8xf32>
    tpu.vector_store %arg6[%c0_42, %c1_43, %c0_44, %c0_45], %60 {strides = array<i32>} : memref<1x4x8x8xf32, #tpu.memory_space<vmem>>, vector<1x1x8x8xf32>,
    %61 = arith.truncf %57 : vector<8x8xf32> to vector<8x8xbf16>
    %cst_46 = arith.constant dense<0.000000e+00> : vector<8x8xf32>
    %62 = tpu.matmul %61, %41, %cst_46 {dimension_numbers = #tpu.dot_dimension_numbers<[1], [0], [0], [1], [0, 0, 1, 1], [], []>} : vector<8x8xbf16>, vector<8x8xbf16>, vector<8x8xf32> -> vector<8x8xf32>
    %c0_47 = arith.constant 0 : index
    %c0_48 = arith.constant 0 : index
    %c2 = arith.constant 2 : index
    %c0_49 = arith.constant 0 : index
    %c0_50 = arith.constant 0 : index
    %63 = vector.load %arg2[%c0_47, %c0_48, %c2, %c0_49, %c0_50] : memref<1x1x4x8x8xf32, #tpu.memory_space<vmem>>, vector<1x1x1x8x8xf32>
    %64 = vector.shape_cast %63 : vector<1x1x1x8x8xf32> to vector<8x8xf32>
    %65 = arith.truncf %64 : vector<8x8xf32> to vector<8x8xbf16>
    %c0_51 = arith.constant 0 : index
    %c0_52 = arith.constant 0 : index
    %c2_53 = arith.constant 2 : index
    %c0_54 = arith.constant 0 : index
    %c0_55 = arith.constant 0 : index
    %66 = vector.load %arg3[%c0_51, %c0_52, %c2_53, %c0_54, %c0_55] : memref<1x1x4x8x8xf32, #tpu.memory_space<vmem>>, vector<1x1x1x8x8xf32>
    %67 = vector.shape_cast %66 : vector<1x1x1x8x8xf32> to vector<8x8xf32>
    %68 = arith.truncf %67 : vector<8x8xf32> to vector<8x8xbf16>
    %c0_56 = arith.constant 0 : index
    %c0_57 = arith.constant 0 : index
    %c2_58 = arith.constant 2 : index
    %c0_59 = arith.constant 0 : index
    %c0_60 = arith.constant 0 : index
    %69 = vector.load %arg4[%c0_56, %c0_57, %c2_58, %c0_59, %c0_60] : memref<1x1x4x8x8xf32, #tpu.memory_space<vmem>>, vector<1x1x1x8x8xf32>
    %70 = vector.shape_cast %69 : vector<1x1x1x8x8xf32> to vector<8x8xf32>
    %71 = arith.truncf %70 : vector<8x8xf32> to vector<8x8xbf16>
    %72 = tpu.transpose %68, [1, 0] : vector<8x8xbf16> -> vector<8x8xbf16>
    %cst_61 = arith.constant dense<0.000000e+00> : vector<8x8xf32>
    %73 = tpu.matmul %65, %72, %cst_61 {dimension_numbers = #tpu.dot_dimension_numbers<[1], [0], [0], [1], [0, 0, 1, 1], [], []>} : vector<8x8xbf16>, vector<8x8xbf16>, vector<8x8xf32> -> vector<8x8xf32>
    %cst_62 = arith.constant 0.353553385 : f32
    %74 = vector.broadcast %cst_62 : f32 to vector<8x8xf32>
    %75 = arith.mulf %73, %74 : vector<8x8xf32>
    %cst_63 = arith.constant -1.000000e+30 : f32
    %76 = vector.broadcast %cst_63 : f32 to vector<8x8xf32>
    %77 = arith.select %2, %75, %76 : vector<8x8xi1>, vector<8x8xf32>
    %cst_64 = arith.constant dense<0xFF800000> : vector<8xf32>
    %78 = vector.multi_reduction <maximumf>, %77, %cst_64 [1] : vector<8x8xf32> to vector<8xf32>
    %79 = vector.shape_cast %78 : vector<8xf32> to vector<8x1xf32>
    %80 = vector.broadcast %79 : vector<8x1xf32> to vector<8x8xf32>
    %81 = arith.subf %77, %80 : vector<8x8xf32>
    %82 = math.exp %81 : vector<8x8xf32>
    %cst_65 = arith.constant dense<0.000000e+00> : vector<8xf32>
    %83 = vector.multi_reduction <add>, %82, %cst_65 [1] : vector<8x8xf32> to vector<8xf32>
    %84 = vector.shape_cast %83 : vector<8xf32> to vector<8x1xf32>
    %85 = tpu.reciprocal %84 {approx = true} : vector<8x1xf32> -> vector<8x1xf32>
    %86 = vector.broadcast %85 : vector<8x1xf32> to vector<8x8xf32>
    %87 = arith.mulf %82, %86 : vector<8x8xf32>
    %c0_66 = arith.constant 0 : index
    %c2_67 = arith.constant 2 : index
    %c0_68 = arith.constant 0 : index
    %c0_69 = arith.constant 0 : index
    %88 = vector.load %arg6[%c0_66, %c2_67, %c0_68, %c0_69] : memref<1x4x8x8xf32, #tpu.memory_space<vmem>>, vector<1x1x8x8xf32>
    %89 = vector.shape_cast %88 : vector<1x1x8x8xf32> to vector<8x8xf32>
    %90 = vector.shape_cast %87 : vector<8x8xf32> to vector<1x1x8x8xf32>
    tpu.vector_store %arg6[%c0_66, %c2_67, %c0_68, %c0_69], %90 {strides = array<i32>} : memref<1x4x8x8xf32, #tpu.memory_space<vmem>>, vector<1x1x8x8xf32>,
    %91 = arith.truncf %87 : vector<8x8xf32> to vector<8x8xbf16>
    %cst_70 = arith.constant dense<0.000000e+00> : vector<8x8xf32>
    %92 = tpu.matmul %91, %71, %cst_70 {dimension_numbers = #tpu.dot_dimension_numbers<[1], [0], [0], [1], [0, 0, 1, 1], [], []>} : vector<8x8xbf16>, vector<8x8xbf16>, vector<8x8xf32> -> vector<8x8xf32>
    %c0_71 = arith.constant 0 : index
    %c0_72 = arith.constant 0 : index
    %c3 = arith.constant 3 : index
    %c0_73 = arith.constant 0 : index
    %c0_74 = arith.constant 0 : index
    %93 = vector.load %arg2[%c0_71, %c0_72, %c3, %c0_73, %c0_74] : memref<1x1x4x8x8xf32, #tpu.memory_space<vmem>>, vector<1x1x1x8x8xf32>
    %94 = vector.shape_cast %93 : vector<1x1x1x8x8xf32> to vector<8x8xf32>
    %95 = arith.truncf %94 : vector<8x8xf32> to vector<8x8xbf16>
    %c0_75 = arith.constant 0 : index
    %c0_76 = arith.constant 0 : index
    %c3_77 = arith.constant 3 : index
    %c0_78 = arith.constant 0 : index
    %c0_79 = arith.constant 0 : index
    %96 = vector.load %arg3[%c0_75, %c0_76, %c3_77, %c0_78, %c0_79] : memref<1x1x4x8x8xf32, #tpu.memory_space<vmem>>, vector<1x1x1x8x8xf32>
    %97 = vector.shape_cast %96 : vector<1x1x1x8x8xf32> to vector<8x8xf32>
    %98 = arith.truncf %97 : vector<8x8xf32> to vector<8x8xbf16>
    %c0_80 = arith.constant 0 : index
    %c0_81 = arith.constant 0 : index
    %c3_82 = arith.constant 3 : index
    %c0_83 = arith.constant 0 : index
    %c0_84 = arith.constant 0 : index
    %99 = vector.load %arg4[%c0_80, %c0_81, %c3_82, %c0_83, %c0_84] : memref<1x1x4x8x8xf32, #tpu.memory_space<vmem>>, vector<1x1x1x8x8xf32>
    %100 = vector.shape_cast %99 : vector<1x1x1x8x8xf32> to vector<8x8xf32>
    %101 = arith.truncf %100 : vector<8x8xf32> to vector<8x8xbf16>
    %102 = tpu.transpose %98, [1, 0] : vector<8x8xbf16> -> vector<8x8xbf16>
    %cst_85 = arith.constant dense<0.000000e+00> : vector<8x8xf32>
    %103 = tpu.matmul %95, %102, %cst_85 {dimension_numbers = #tpu.dot_dimension_numbers<[1], [0], [0], [1], [0, 0, 1, 1], [], []>} : vector<8x8xbf16>, vector<8x8xbf16>, vector<8x8xf32> -> vector<8x8xf32>
    %cst_86 = arith.constant 0.353553385 : f32
    %104 = vector.broadcast %cst_86 : f32 to vector<8x8xf32>
    %105 = arith.mulf %103, %104 : vector<8x8xf32>
    %cst_87 = arith.constant -1.000000e+30 : f32
    %106 = vector.broadcast %cst_87 : f32 to vector<8x8xf32>
    %107 = arith.select %2, %105, %106 : vector<8x8xi1>, vector<8x8xf32>
    %cst_88 = arith.constant dense<0xFF800000> : vector<8xf32>
    %108 = vector.multi_reduction <maximumf>, %107, %cst_88 [1] : vector<8x8xf32> to vector<8xf32>
    %109 = vector.shape_cast %108 : vector<8xf32> to vector<8x1xf32>
    %110 = vector.broadcast %109 : vector<8x1xf32> to vector<8x8xf32>
    %111 = arith.subf %107, %110 : vector<8x8xf32>
    %112 = math.exp %111 : vector<8x8xf32>
    %cst_89 = arith.constant dense<0.000000e+00> : vector<8xf32>
    %113 = vector.multi_reduction <add>, %112, %cst_89 [1] : vector<8x8xf32> to vector<8xf32>
    %114 = vector.shape_cast %113 : vector<8xf32> to vector<8x1xf32>
    %115 = tpu.reciprocal %114 {approx = true} : vector<8x1xf32> -> vector<8x1xf32>
    %116 = vector.broadcast %115 : vector<8x1xf32> to vector<8x8xf32>
    %117 = arith.mulf %112, %116 : vector<8x8xf32>
    %c0_90 = arith.constant 0 : index
    %c3_91 = arith.constant 3 : index
    %c0_92 = arith.constant 0 : index
    %c0_93 = arith.constant 0 : index
    %118 = vector.load %arg6[%c0_90, %c3_91, %c0_92, %c0_93] : memref<1x4x8x8xf32, #tpu.memory_space<vmem>>, vector<1x1x8x8xf32>
    %119 = vector.shape_cast %118 : vector<1x1x8x8xf32> to vector<8x8xf32>
    %120 = vector.shape_cast %117 : vector<8x8xf32> to vector<1x1x8x8xf32>
    tpu.vector_store %arg6[%c0_90, %c3_91, %c0_92, %c0_93], %120 {strides = array<i32>} : memref<1x4x8x8xf32, #tpu.memory_space<vmem>>, vector<1x1x8x8xf32>,
    %121 = arith.truncf %117 : vector<8x8xf32> to vector<8x8xbf16>
    %cst_94 = arith.constant dense<0.000000e+00> : vector<8x8xf32>
    %122 = tpu.matmul %121, %101, %cst_94 {dimension_numbers = #tpu.dot_dimension_numbers<[1], [0], [0], [1], [0, 0, 1, 1], [], []>} : vector<8x8xbf16>, vector<8x8xbf16>, vector<8x8xf32> -> vector<8x8xf32>
    %123 = tpu.concatenate %32, %62, %92, %122 in 1 : vector<8x8xf32>, vector<8x8xf32>, vector<8x8xf32>, vector<8x8xf32> -> vector<8x32xf32>
    %124 = arith.truncf %123 : vector<8x32xf32> to vector<8x32xbf16>
    %c0_95 = arith.constant 0 : index
    %c0_96 = arith.constant 0 : index
    %c0_97 = arith.constant 0 : index
    %125 = vector.load %arg5[%c0_95, %c0_96, %c0_97] : memref<1x8x32xbf16, #tpu.memory_space<vmem>>, vector<1x8x32xbf16>
    %126 = vector.shape_cast %125 : vector<1x8x32xbf16> to vector<8x32xbf16>
    %127 = vector.shape_cast %124 : vector<8x32xbf16> to vector<1x8x32xbf16>
    tpu.vector_store %arg5[%c0_95, %c0_96, %c0_97], %127 {strides = array<i32>} : memref<1x8x32xbf16, #tpu.memory_space<vmem>>, vector<1x8x32xbf16>,
    return
  }
  func.func @transform_0(%arg0: i32, %arg1: i32) -> (i32, i32, i32, i32, i32) {
    %c0_i32 = arith.constant 0 : i32
    %c0_i32_0 = arith.constant 0 : i32
    %c0_i32_1 = arith.constant 0 : i32
    %c0_i32_2 = arith.constant 0 : i32
    return %arg0, %c0_i32, %arg1, %c0_i32_0, %c0_i32_1 : i32, i32, i32, i32, i32
  }
  func.func @transform_1(%arg0: i32, %arg1: i32) -> (i32, i32, i32, i32, i32) {
    %c1_i32 = arith.constant 1 : i32
    %c0_i32 = arith.constant 0 : i32
    %c0_i32_0 = arith.constant 0 : i32
    %c0_i32_1 = arith.constant 0 : i32
    return %arg0, %c1_i32, %arg1, %c0_i32, %c0_i32_0 : i32, i32, i32, i32, i32
  }
  func.func @transform_2(%arg0: i32, %arg1: i32) -> (i32, i32, i32, i32, i32) {
    %c2_i32 = arith.constant 2 : i32
    %c0_i32 = arith.constant 0 : i32
    %c0_i32_0 = arith.constant 0 : i32
    %c0_i32_1 = arith.constant 0 : i32
    return %arg0, %c2_i32, %arg1, %c0_i32, %c0_i32_0 : i32, i32, i32, i32, i32
  }
  func.func @transform_3(%arg0: i32, %arg1: i32) -> (i32, i32, i32) {
    %c0_i32 = arith.constant 0 : i32
    %c0_i32_0 = arith.constant 0 : i32
    return %arg0, %c0_i32, %arg1 : i32, i32, i32
  }
  func.func @transform_4(%arg0: i32, %arg1: i32) -> (i32, i32, i32, i32) {
    %c0_i32 = arith.constant 0 : i32
    %c0_i32_0 = arith.constant 0 : i32
    %c0_i32_1 = arith.constant 0 : i32
    return %arg0, %arg1, %c0_i32, %c0_i32_0 : i32, i32, i32, i32
  }
}

module attributes {stable_mosaic.version = 11 : i64} {
  func.func @_matmul_bias_res_kernel_single_k(%arg0: i32, %arg1: i32, %arg2: memref<16x32xbf16, #tpu.memory_space<vmem>>, %arg3: memref<32x32xbf16, #tpu.memory_space<vmem>>, %arg4: memref<1x32xf32, #tpu.memory_space<vmem>>, %arg5: memref<16x32xf32, #tpu.memory_space<vmem>>, %arg6: memref<16x32xf32, #tpu.memory_space<vmem>>) attributes {dimension_semantics = [#tpu.dimension_semantics<parallel>, #tpu.dimension_semantics<parallel>], iteration_bounds = array<i64: 1, 1>, scalar_prefetch = 0 : i64, scratch_operands = 0 : i64, tpu.core_type = #tpu.core_type<tc>, window_params = [{transform_indices = @transform_0, window_bounds = array<i64: 16, 32>}, {transform_indices = @transform_1, window_bounds = array<i64: 32, 32>}, {transform_indices = @transform_2, window_bounds = array<i64: 1, 32>}, {transform_indices = @transform_3, window_bounds = array<i64: 16, 32>}, {transform_indices = @transform_4, window_bounds = array<i64: 16, 32>}]} {
    %c0 = arith.constant 0 : index
    %c0_0 = arith.constant 0 : index
    %0 = vector.load %arg2[%c0, %c0_0] : memref<16x32xbf16, #tpu.memory_space<vmem>>, vector<16x32xbf16>
    %c0_1 = arith.constant 0 : index
    %c0_2 = arith.constant 0 : index
    %1 = vector.load %arg3[%c0_1, %c0_2] : memref<32x32xbf16, #tpu.memory_space<vmem>>, vector<32x32xbf16>
    %cst = arith.constant dense<0.000000e+00> : vector<16x32xf32>
    %2 = tpu.matmul %0, %1, %cst {dimension_numbers = #tpu.dot_dimension_numbers<[1], [0], [0], [1], [0, 0, 1, 1], [], []>} : vector<16x32xbf16>, vector<32x32xbf16>, vector<16x32xf32> -> vector<16x32xf32>
    %c0_3 = arith.constant 0 : index
    %c0_4 = arith.constant 0 : index
    %3 = vector.load %arg4[%c0_3, %c0_4] : memref<1x32xf32, #tpu.memory_space<vmem>>, vector<1x32xf32>
    %4 = vector.broadcast %3 : vector<1x32xf32> to vector<16x32xf32>
    %5 = arith.addf %2, %4 : vector<16x32xf32>
    %c0_5 = arith.constant 0 : index
    %c0_6 = arith.constant 0 : index
    %6 = vector.load %arg5[%c0_5, %c0_6] : memref<16x32xf32, #tpu.memory_space<vmem>>, vector<16x32xf32>
    %7 = arith.addf %5, %6 : vector<16x32xf32>
    %c0_7 = arith.constant 0 : index
    %c0_8 = arith.constant 0 : index
    %8 = vector.load %arg6[%c0_7, %c0_8] : memref<16x32xf32, #tpu.memory_space<vmem>>, vector<16x32xf32>
    tpu.vector_store %arg6[%c0_7, %c0_8], %7 {strides = array<i32>} : memref<16x32xf32, #tpu.memory_space<vmem>>, vector<16x32xf32>,
    return
  }
  func.func @transform_0(%arg0: i32, %arg1: i32) -> (i32, i32) {
    %c0_i32 = arith.constant 0 : i32
    %c0_i32_0 = arith.constant 0 : i32
    return %arg0, %c0_i32 : i32, i32
  }
  func.func @transform_1(%arg0: i32, %arg1: i32) -> (i32, i32) {
    %c0_i32 = arith.constant 0 : i32
    %c0_i32_0 = arith.constant 0 : i32
    return %c0_i32, %arg1 : i32, i32
  }
  func.func @transform_2(%arg0: i32, %arg1: i32) -> (i32, i32) {
    %c0_i32 = arith.constant 0 : i32
    %c0_i32_0 = arith.constant 0 : i32
    return %c0_i32, %arg1 : i32, i32
  }
  func.func @transform_3(%arg0: i32, %arg1: i32) -> (i32, i32) {
    %c0_i32 = arith.constant 0 : i32
    return %arg0, %arg1 : i32, i32
  }
  func.func @transform_4(%arg0: i32, %arg1: i32) -> (i32, i32) {
    %c0_i32 = arith.constant 0 : i32
    return %arg0, %arg1 : i32, i32
  }
}

module attributes {stable_mosaic.version = 11 : i64} {
  func.func @_ln_matmul_kernel(%arg0: i32, %arg1: i32, %arg2: memref<16x32xf32, #tpu.memory_space<vmem>>, %arg3: memref<1x32xf32, #tpu.memory_space<vmem>>, %arg4: memref<1x32xf32, #tpu.memory_space<vmem>>, %arg5: memref<32x32xbf16, #tpu.memory_space<vmem>>, %arg6: memref<1x32xf32, #tpu.memory_space<vmem>>, %arg7: memref<16x32xbf16, #tpu.memory_space<vmem>>) attributes {dimension_semantics = [#tpu.dimension_semantics<parallel>, #tpu.dimension_semantics<parallel>], iteration_bounds = array<i64: 1, 1>, scalar_prefetch = 0 : i64, scratch_operands = 0 : i64, tpu.core_type = #tpu.core_type<tc>, window_params = [{transform_indices = @transform_0, window_bounds = array<i64: 16, 32>}, {pipeline_mode = #tpu.pipeline_mode<synchronous>, transform_indices = @transform_1, window_bounds = array<i64: 1, 32>}, {pipeline_mode = #tpu.pipeline_mode<synchronous>, transform_indices = @transform_2, window_bounds = array<i64: 1, 32>}, {transform_indices = @transform_3, window_bounds = array<i64: 32, 32>}, {transform_indices = @transform_4, window_bounds = array<i64: 1, 32>}, {transform_indices = @transform_5, window_bounds = array<i64: 16, 32>}]} {
    %c0 = arith.constant 0 : index
    %c0_0 = arith.constant 0 : index
    %0 = vector.load %arg2[%c0, %c0_0] : memref<16x32xf32, #tpu.memory_space<vmem>>, vector<16x32xf32>
    %cst = arith.constant dense<0.000000e+00> : vector<16xf32>
    %1 = vector.multi_reduction <add>, %0, %cst [1] : vector<16x32xf32> to vector<16xf32>
    %2 = vector.shape_cast %1 : vector<16xf32> to vector<16x1xf32>
    %cst_1 = arith.constant 3.200000e+01 : f32
    %3 = vector.broadcast %cst_1 : f32 to vector<16x1xf32>
    %4 = arith.divf %2, %3 : vector<16x1xf32>
    %5 = vector.broadcast %4 : vector<16x1xf32> to vector<16x32xf32>
    %6 = arith.subf %0, %5 : vector<16x32xf32>
    %7 = vector.broadcast %4 : vector<16x1xf32> to vector<16x32xf32>
    %8 = arith.subf %0, %7 : vector<16x32xf32>
    %9 = arith.mulf %6, %8 : vector<16x32xf32>
    %cst_2 = arith.constant dense<0.000000e+00> : vector<16xf32>
    %10 = vector.multi_reduction <add>, %9, %cst_2 [1] : vector<16x32xf32> to vector<16xf32>
    %11 = vector.shape_cast %10 : vector<16xf32> to vector<16x1xf32>
    %cst_3 = arith.constant 3.200000e+01 : f32
    %12 = vector.broadcast %cst_3 : f32 to vector<16x1xf32>
    %13 = arith.divf %11, %12 : vector<16x1xf32>
    %14 = vector.broadcast %4 : vector<16x1xf32> to vector<16x32xf32>
    %15 = arith.subf %0, %14 : vector<16x32xf32>
    %cst_4 = arith.constant 9.99999974E-6 : f32
    %16 = vector.broadcast %cst_4 : f32 to vector<16x1xf32>
    %17 = arith.addf %13, %16 : vector<16x1xf32>
    %18 = math.rsqrt %17 : vector<16x1xf32>
    %19 = vector.broadcast %18 : vector<16x1xf32> to vector<16x32xf32>
    %20 = arith.mulf %15, %19 : vector<16x32xf32>
    %c0_5 = arith.constant 0 : index
    %c0_6 = arith.constant 0 : index
    %21 = vector.load %arg3[%c0_5, %c0_6] : memref<1x32xf32, #tpu.memory_space<vmem>>, vector<1x32xf32>
    %22 = vector.broadcast %21 : vector<1x32xf32> to vector<16x32xf32>
    %23 = arith.mulf %20, %22 : vector<16x32xf32>
    %c0_7 = arith.constant 0 : index
    %c0_8 = arith.constant 0 : index
    %24 = vector.load %arg4[%c0_7, %c0_8] : memref<1x32xf32, #tpu.memory_space<vmem>>, vector<1x32xf32>
    %25 = vector.broadcast %24 : vector<1x32xf32> to vector<16x32xf32>
    %26 = arith.addf %23, %25 : vector<16x32xf32>
    %27 = arith.truncf %26 : vector<16x32xf32> to vector<16x32xbf16>
    %c0_9 = arith.constant 0 : index
    %c0_10 = arith.constant 0 : index
    %28 = vector.load %arg5[%c0_9, %c0_10] : memref<32x32xbf16, #tpu.memory_space<vmem>>, vector<32x32xbf16>
    %cst_11 = arith.constant dense<0.000000e+00> : vector<16x32xf32>
    %29 = tpu.matmul %27, %28, %cst_11 {dimension_numbers = #tpu.dot_dimension_numbers<[1], [0], [0], [1], [0, 0, 1, 1], [], []>} : vector<16x32xbf16>, vector<32x32xbf16>, vector<16x32xf32> -> vector<16x32xf32>
    %c0_12 = arith.constant 0 : index
    %c0_13 = arith.constant 0 : index
    %30 = vector.load %arg6[%c0_12, %c0_13] : memref<1x32xf32, #tpu.memory_space<vmem>>, vector<1x32xf32>
    %31 = vector.broadcast %30 : vector<1x32xf32> to vector<16x32xf32>
    %32 = arith.addf %29, %31 : vector<16x32xf32>
    %33 = arith.truncf %32 : vector<16x32xf32> to vector<16x32xbf16>
    %c0_14 = arith.constant 0 : index
    %c0_15 = arith.constant 0 : index
    %34 = vector.load %arg7[%c0_14, %c0_15] : memref<16x32xbf16, #tpu.memory_space<vmem>>, vector<16x32xbf16>
    tpu.vector_store %arg7[%c0_14, %c0_15], %33 {strides = array<i32>} : memref<16x32xbf16, #tpu.memory_space<vmem>>, vector<16x32xbf16>,
    return
  }
  func.func @transform_0(%arg0: i32, %arg1: i32) -> (i32, i32) {
    %c0_i32 = arith.constant 0 : i32
    %c0_i32_0 = arith.constant 0 : i32
    return %arg0, %c0_i32 : i32, i32
  }
  func.func @transform_1(%arg0: i32, %arg1: i32) -> (i32, i32) {
    %c0_i32 = arith.constant 0 : i32
    %c0_i32_0 = arith.constant 0 : i32
    %c0_i32_1 = arith.constant 0 : i32
    return %c0_i32, %c0_i32_0 : i32, i32
  }
  func.func @transform_2(%arg0: i32, %arg1: i32) -> (i32, i32) {
    %c0_i32 = arith.constant 0 : i32
    %c0_i32_0 = arith.constant 0 : i32
    %c0_i32_1 = arith.constant 0 : i32
    return %c0_i32, %c0_i32_0 : i32, i32
  }
  func.func @transform_3(%arg0: i32, %arg1: i32) -> (i32, i32) {
    %c0_i32 = arith.constant 0 : i32
    %c0_i32_0 = arith.constant 0 : i32
    return %c0_i32, %arg1 : i32, i32
  }
  func.func @transform_4(%arg0: i32, %arg1: i32) -> (i32, i32) {
    %c0_i32 = arith.constant 0 : i32
    %c0_i32_0 = arith.constant 0 : i32
    return %c0_i32, %arg1 : i32, i32
  }
  func.func @transform_5(%arg0: i32, %arg1: i32) -> (i32, i32) {
    %c0_i32 = arith.constant 0 : i32
    return %arg0, %arg1 : i32, i32
  }
}

module attributes {stable_mosaic.version = 11 : i64} {
  func.func @_ln_matmul_kernel(%arg0: i32, %arg1: i32, %arg2: memref<32x32xf32, #tpu.memory_space<vmem>>, %arg3: memref<1x32xf32, #tpu.memory_space<vmem>>, %arg4: memref<1x32xf32, #tpu.memory_space<vmem>>, %arg5: memref<32x64xbf16, #tpu.memory_space<vmem>>, %arg6: memref<1x64xf32, #tpu.memory_space<vmem>>, %arg7: memref<32x64xbf16, #tpu.memory_space<vmem>>) attributes {dimension_semantics = [#tpu.dimension_semantics<parallel>, #tpu.dimension_semantics<parallel>], iteration_bounds = array<i64: 1, 1>, scalar_prefetch = 0 : i64, scratch_operands = 0 : i64, tpu.core_type = #tpu.core_type<tc>, window_params = [{transform_indices = @transform_0, window_bounds = array<i64: 32, 32>}, {pipeline_mode = #tpu.pipeline_mode<synchronous>, transform_indices = @transform_1, window_bounds = array<i64: 1, 32>}, {pipeline_mode = #tpu.pipeline_mode<synchronous>, transform_indices = @transform_2, window_bounds = array<i64: 1, 32>}, {transform_indices = @transform_3, window_bounds = array<i64: 32, 64>}, {transform_indices = @transform_4, window_bounds = array<i64: 1, 64>}, {transform_indices = @transform_5, window_bounds = array<i64: 32, 64>}]} {
    %c0 = arith.constant 0 : index
    %c0_0 = arith.constant 0 : index
    %0 = vector.load %arg2[%c0, %c0_0] : memref<32x32xf32, #tpu.memory_space<vmem>>, vector<32x32xf32>
    %1 = arith.truncf %0 : vector<32x32xf32> to vector<32x32xbf16>
    %c0_1 = arith.constant 0 : index
    %c0_2 = arith.constant 0 : index
    %2 = vector.load %arg5[%c0_1, %c0_2] : memref<32x64xbf16, #tpu.memory_space<vmem>>, vector<32x64xbf16>
    %cst = arith.constant dense<0.000000e+00> : vector<32x64xf32>
    %3 = tpu.matmul %1, %2, %cst {dimension_numbers = #tpu.dot_dimension_numbers<[1], [0], [0], [1], [0, 0, 1, 1], [], []>} : vector<32x32xbf16>, vector<32x64xbf16>, vector<32x64xf32> -> vector<32x64xf32>
    %c0_3 = arith.constant 0 : index
    %c0_4 = arith.constant 0 : index
    %4 = vector.load %arg6[%c0_3, %c0_4] : memref<1x64xf32, #tpu.memory_space<vmem>>, vector<1x64xf32>
    %5 = vector.broadcast %4 : vector<1x64xf32> to vector<32x64xf32>
    %6 = arith.addf %3, %5 : vector<32x64xf32>
    %7 = arith.truncf %6 : vector<32x64xf32> to vector<32x64xbf16>
    %c0_5 = arith.constant 0 : index
    %c0_6 = arith.constant 0 : index
    %8 = vector.load %arg7[%c0_5, %c0_6] : memref<32x64xbf16, #tpu.memory_space<vmem>>, vector<32x64xbf16>
    tpu.vector_store %arg7[%c0_5, %c0_6], %7 {strides = array<i32>} : memref<32x64xbf16, #tpu.memory_space<vmem>>, vector<32x64xbf16>,
    return
  }
  func.func @transform_0(%arg0: i32, %arg1: i32) -> (i32, i32) {
    %c0_i32 = arith.constant 0 : i32
    %c0_i32_0 = arith.constant 0 : i32
    return %arg0, %c0_i32 : i32, i32
  }
  func.func @transform_1(%arg0: i32, %arg1: i32) -> (i32, i32) {
    %c0_i32 = arith.constant 0 : i32
    %c0_i32_0 = arith.constant 0 : i32
    %c0_i32_1 = arith.constant 0 : i32
    return %c0_i32, %c0_i32_0 : i32, i32
  }
  func.func @transform_2(%arg0: i32, %arg1: i32) -> (i32, i32) {
    %c0_i32 = arith.constant 0 : i32
    %c0_i32_0 = arith.constant 0 : i32
    %c0_i32_1 = arith.constant 0 : i32
    return %c0_i32, %c0_i32_0 : i32, i32
  }
  func.func @transform_3(%arg0: i32, %arg1: i32) -> (i32, i32) {
    %c0_i32 = arith.constant 0 : i32
    %c0_i32_0 = arith.constant 0 : i32
    return %c0_i32, %arg1 : i32, i32
  }
  func.func @transform_4(%arg0: i32, %arg1: i32) -> (i32, i32) {
    %c0_i32 = arith.constant 0 : i32
    %c0_i32_0 = arith.constant 0 : i32
    return %c0_i32, %arg1 : i32, i32
  }
  func.func @transform_5(%arg0: i32, %arg1: i32) -> (i32, i32) {
    %c0_i32 = arith.constant 0 : i32
    return %arg0, %arg1 : i32, i32
  }
}

module attributes {stable_mosaic.version = 11 : i64} {
  func.func @_attention_kernel(%arg0: i32, %arg1: i32, %arg2: memref<1x1x4x8x8xbf16, #tpu.memory_space<vmem>>, %arg3: memref<1x1x4x16x8xbf16, #tpu.memory_space<vmem>>, %arg4: memref<1x1x4x16x8xbf16, #tpu.memory_space<vmem>>, %arg5: memref<1x8x32xbf16, #tpu.memory_space<vmem>>, %arg6: memref<1x4x8x16xf32, #tpu.memory_space<vmem>>) attributes {dimension_semantics = [#tpu.dimension_semantics<parallel>, #tpu.dimension_semantics<parallel>], iteration_bounds = array<i64: 2, 1>, scalar_prefetch = 0 : i64, scratch_operands = 0 : i64, tpu.core_type = #tpu.core_type<tc>, window_params = [{transform_indices = @transform_0, window_bounds = array<i64: 1, 1, 4, 8, 8>}, {transform_indices = @transform_1, window_bounds = array<i64: 1, 1, 4, 16, 8>}, {transform_indices = @transform_2, window_bounds = array<i64: 1, 1, 4, 16, 8>}, {transform_indices = @transform_3, window_bounds = array<i64: 1, 8, 32>}, {transform_indices = @transform_4, window_bounds = array<i64: 1, 4, 8, 16>}]} {
    %c0 = arith.constant 0 : index
    %c0_0 = arith.constant 0 : index
    %c0_1 = arith.constant 0 : index
    %c0_2 = arith.constant 0 : index
    %c0_3 = arith.constant 0 : index
    %0 = vector.load %arg2[%c0, %c0_0, %c0_1, %c0_2, %c0_3] : memref<1x1x4x8x8xbf16, #tpu.memory_space<vmem>>, vector<1x1x1x8x8xbf16>
    %1 = vector.shape_cast %0 : vector<1x1x1x8x8xbf16> to vector<8x8xbf16>
    %c0_4 = arith.constant 0 : index
    %c0_5 = arith.constant 0 : index
    %c0_6 = arith.constant 0 : index
    %c0_7 = arith.constant 0 : index
    %c0_8 = arith.constant 0 : index
    %2 = vector.load %arg3[%c0_4, %c0_5, %c0_6, %c0_7, %c0_8] : memref<1x1x4x16x8xbf16, #tpu.memory_space<vmem>>, vector<1x1x1x16x8xbf16>
    %3 = vector.shape_cast %2 : vector<1x1x1x16x8xbf16> to vector<16x8xbf16>
    %c0_9 = arith.constant 0 : index
    %c0_10 = arith.constant 0 : index
    %c0_11 = arith.constant 0 : index
    %c0_12 = arith.constant 0 : index
    %c0_13 = arith.constant 0 : index
    %4 = vector.load %arg4[%c0_9, %c0_10, %c0_11, %c0_12, %c0_13] : memref<1x1x4x16x8xbf16, #tpu.memory_space<vmem>>, vector<1x1x1x16x8xbf16>
    %5 = vector.shape_cast %4 : vector<1x1x1x16x8xbf16> to vector<16x8xbf16>
    %6 = tpu.transpose %3, [1, 0] : vector<16x8xbf16> -> vector<8x16xbf16>
    %cst = arith.constant dense<0.000000e+00> : vector<8x16xf32>
    %7 = tpu.matmul %1, %6, %cst {dimension_numbers = #tpu.dot_dimension_numbers<[1], [0], [0], [1], [0, 0, 1, 1], [], []>} : vector<8x8xbf16>, vector<8x16xbf16>, vector<8x16xf32> -> vector<8x16xf32>
    %cst_14 = arith.constant 0.353553385 : f32
    %8 = vector.broadcast %cst_14 : f32 to vector<8x16xf32>
    %9 = arith.mulf %7, %8 : vector<8x16xf32>
    %cst_15 = arith.constant dense<0xFF800000> : vector<8xf32>
    %10 = vector.multi_reduction <maximumf>, %9, %cst_15 [1] : vector<8x16xf32> to vector<8xf32>
    %11 = vector.shape_cast %10 : vector<8xf32> to vector<8x1xf32>
    %12 = vector.broadcast %11 : vector<8x1xf32> to vector<8x16xf32>
    %13 = arith.subf %9, %12 : vector<8x16xf32>
    %14 = math.exp %13 : vector<8x16xf32>
    %cst_16 = arith.constant dense<0.000000e+00> : vector<8xf32>
    %15 = vector.multi_reduction <add>, %14, %cst_16 [1] : vector<8x16xf32> to vector<8xf32>
    %16 = vector.shape_cast %15 : vector<8xf32> to vector<8x1xf32>
    %17 = tpu.reciprocal %16 {approx = true} : vector<8x1xf32> -> vector<8x1xf32>
    %18 = vector.broadcast %17 : vector<8x1xf32> to vector<8x16xf32>
    %19 = arith.mulf %14, %18 : vector<8x16xf32>
    %c0_17 = arith.constant 0 : index
    %c0_18 = arith.constant 0 : index
    %c0_19 = arith.constant 0 : index
    %c0_20 = arith.constant 0 : index
    %20 = vector.load %arg6[%c0_17, %c0_18, %c0_19, %c0_20] : memref<1x4x8x16xf32, #tpu.memory_space<vmem>>, vector<1x1x8x16xf32>
    %21 = vector.shape_cast %20 : vector<1x1x8x16xf32> to vector<8x16xf32>
    %22 = vector.shape_cast %19 : vector<8x16xf32> to vector<1x1x8x16xf32>
    tpu.vector_store %arg6[%c0_17, %c0_18, %c0_19, %c0_20], %22 {strides = array<i32>} : memref<1x4x8x16xf32, #tpu.memory_space<vmem>>, vector<1x1x8x16xf32>,
    %23 = arith.truncf %19 : vector<8x16xf32> to vector<8x16xbf16>
    %cst_21 = arith.constant dense<0.000000e+00> : vector<8x8xf32>
    %24 = tpu.matmul %23, %5, %cst_21 {dimension_numbers = #tpu.dot_dimension_numbers<[1], [0], [0], [1], [0, 0, 1, 1], [], []>} : vector<8x16xbf16>, vector<16x8xbf16>, vector<8x8xf32> -> vector<8x8xf32>
    %c0_22 = arith.constant 0 : index
    %c0_23 = arith.constant 0 : index
    %c1 = arith.constant 1 : index
    %c0_24 = arith.constant 0 : index
    %c0_25 = arith.constant 0 : index
    %25 = vector.load %arg2[%c0_22, %c0_23, %c1, %c0_24, %c0_25] : memref<1x1x4x8x8xbf16, #tpu.memory_space<vmem>>, vector<1x1x1x8x8xbf16>
    %26 = vector.shape_cast %25 : vector<1x1x1x8x8xbf16> to vector<8x8xbf16>
    %c0_26 = arith.constant 0 : index
    %c0_27 = arith.constant 0 : index
    %c1_28 = arith.constant 1 : index
    %c0_29 = arith.constant 0 : index
    %c0_30 = arith.constant 0 : index
    %27 = vector.load %arg3[%c0_26, %c0_27, %c1_28, %c0_29, %c0_30] : memref<1x1x4x16x8xbf16, #tpu.memory_space<vmem>>, vector<1x1x1x16x8xbf16>
    %28 = vector.shape_cast %27 : vector<1x1x1x16x8xbf16> to vector<16x8xbf16>
    %c0_31 = arith.constant 0 : index
    %c0_32 = arith.constant 0 : index
    %c1_33 = arith.constant 1 : index
    %c0_34 = arith.constant 0 : index
    %c0_35 = arith.constant 0 : index
    %29 = vector.load %arg4[%c0_31, %c0_32, %c1_33, %c0_34, %c0_35] : memref<1x1x4x16x8xbf16, #tpu.memory_space<vmem>>, vector<1x1x1x16x8xbf16>
    %30 = vector.shape_cast %29 : vector<1x1x1x16x8xbf16> to vector<16x8xbf16>
    %31 = tpu.transpose %28, [1, 0] : vector<16x8xbf16> -> vector<8x16xbf16>
    %cst_36 = arith.constant dense<0.000000e+00> : vector<8x16xf32>
    %32 = tpu.matmul %26, %31, %cst_36 {dimension_numbers = #tpu.dot_dimension_numbers<[1], [0], [0], [1], [0, 0, 1, 1], [], []>} : vector<8x8xbf16>, vector<8x16xbf16>, vector<8x16xf32> -> vector<8x16xf32>
    %cst_37 = arith.constant 0.353553385 : f32
    %33 = vector.broadcast %cst_37 : f32 to vector<8x16xf32>
    %34 = arith.mulf %32, %33 : vector<8x16xf32>
    %cst_38 = arith.constant dense<0xFF800000> : vector<8xf32>
    %35 = vector.multi_reduction <maximumf>, %34, %cst_38 [1] : vector<8x16xf32> to vector<8xf32>
    %36 = vector.shape_cast %35 : vector<8xf32> to vector<8x1xf32>
    %37 = vector.broadcast %36 : vector<8x1xf32> to vector<8x16xf32>
    %38 = arith.subf %34, %37 : vector<8x16xf32>
    %39 = math.exp %38 : vector<8x16xf32>
    %cst_39 = arith.constant dense<0.000000e+00> : vector<8xf32>
    %40 = vector.multi_reduction <add>, %39, %cst_39 [1] : vector<8x16xf32> to vector<8xf32>
    %41 = vector.shape_cast %40 : vector<8xf32> to vector<8x1xf32>
    %42 = tpu.reciprocal %41 {approx = true} : vector<8x1xf32> -> vector<8x1xf32>
    %43 = vector.broadcast %42 : vector<8x1xf32> to vector<8x16xf32>
    %44 = arith.mulf %39, %43 : vector<8x16xf32>
    %c0_40 = arith.constant 0 : index
    %c1_41 = arith.constant 1 : index
    %c0_42 = arith.constant 0 : index
    %c0_43 = arith.constant 0 : index
    %45 = vector.load %arg6[%c0_40, %c1_41, %c0_42, %c0_43] : memref<1x4x8x16xf32, #tpu.memory_space<vmem>>, vector<1x1x8x16xf32>
    %46 = vector.shape_cast %45 : vector<1x1x8x16xf32> to vector<8x16xf32>
    %47 = vector.shape_cast %44 : vector<8x16xf32> to vector<1x1x8x16xf32>
    tpu.vector_store %arg6[%c0_40, %c1_41, %c0_42, %c0_43], %47 {strides = array<i32>} : memref<1x4x8x16xf32, #tpu.memory_space<vmem>>, vector<1x1x8x16xf32>,
    %48 = arith.truncf %44 : vector<8x16xf32> to vector<8x16xbf16>
    %cst_44 = arith.constant dense<0.000000e+00> : vector<8x8xf32>
    %49 = tpu.matmul %48, %30, %cst_44 {dimension_numbers = #tpu.dot_dimension_numbers<[1], [0], [0], [1], [0, 0, 1, 1], [], []>} : vector<8x16xbf16>, vector<16x8xbf16>, vector<8x8xf32> -> vector<8x8xf32>
    %c0_45 = arith.constant 0 : index
    %c0_46 = arith.constant 0 : index
    %c2 = arith.constant 2 : index
    %c0_47 = arith.constant 0 : index
    %c0_48 = arith.constant 0 : index
    %50 = vector.load %arg2[%c0_45, %c0_46, %c2, %c0_47, %c0_48] : memref<1x1x4x8x8xbf16, #tpu.memory_space<vmem>>, vector<1x1x1x8x8xbf16>
    %51 = vector.shape_cast %50 : vector<1x1x1x8x8xbf16> to vector<8x8xbf16>
    %c0_49 = arith.constant 0 : index
    %c0_50 = arith.constant 0 : index
    %c2_51 = arith.constant 2 : index
    %c0_52 = arith.constant 0 : index
    %c0_53 = arith.constant 0 : index
    %52 = vector.load %arg3[%c0_49, %c0_50, %c2_51, %c0_52, %c0_53] : memref<1x1x4x16x8xbf16, #tpu.memory_space<vmem>>, vector<1x1x1x16x8xbf16>
    %53 = vector.shape_cast %52 : vector<1x1x1x16x8xbf16> to vector<16x8xbf16>
    %c0_54 = arith.constant 0 : index
    %c0_55 = arith.constant 0 : index
    %c2_56 = arith.constant 2 : index
    %c0_57 = arith.constant 0 : index
    %c0_58 = arith.constant 0 : index
    %54 = vector.load %arg4[%c0_54, %c0_55, %c2_56, %c0_57, %c0_58] : memref<1x1x4x16x8xbf16, #tpu.memory_space<vmem>>, vector<1x1x1x16x8xbf16>
    %55 = vector.shape_cast %54 : vector<1x1x1x16x8xbf16> to vector<16x8xbf16>
    %56 = tpu.transpose %53, [1, 0] : vector<16x8xbf16> -> vector<8x16xbf16>
    %cst_59 = arith.constant dense<0.000000e+00> : vector<8x16xf32>
    %57 = tpu.matmul %51, %56, %cst_59 {dimension_numbers = #tpu.dot_dimension_numbers<[1], [0], [0], [1], [0, 0, 1, 1], [], []>} : vector<8x8xbf16>, vector<8x16xbf16>, vector<8x16xf32> -> vector<8x16xf32>
    %cst_60 = arith.constant 0.353553385 : f32
    %58 = vector.broadcast %cst_60 : f32 to vector<8x16xf32>
    %59 = arith.mulf %57, %58 : vector<8x16xf32>
    %cst_61 = arith.constant dense<0xFF800000> : vector<8xf32>
    %60 = vector.multi_reduction <maximumf>, %59, %cst_61 [1] : vector<8x16xf32> to vector<8xf32>
    %61 = vector.shape_cast %60 : vector<8xf32> to vector<8x1xf32>
    %62 = vector.broadcast %61 : vector<8x1xf32> to vector<8x16xf32>
    %63 = arith.subf %59, %62 : vector<8x16xf32>
    %64 = math.exp %63 : vector<8x16xf32>
    %cst_62 = arith.constant dense<0.000000e+00> : vector<8xf32>
    %65 = vector.multi_reduction <add>, %64, %cst_62 [1] : vector<8x16xf32> to vector<8xf32>
    %66 = vector.shape_cast %65 : vector<8xf32> to vector<8x1xf32>
    %67 = tpu.reciprocal %66 {approx = true} : vector<8x1xf32> -> vector<8x1xf32>
    %68 = vector.broadcast %67 : vector<8x1xf32> to vector<8x16xf32>
    %69 = arith.mulf %64, %68 : vector<8x16xf32>
    %c0_63 = arith.constant 0 : index
    %c2_64 = arith.constant 2 : index
    %c0_65 = arith.constant 0 : index
    %c0_66 = arith.constant 0 : index
    %70 = vector.load %arg6[%c0_63, %c2_64, %c0_65, %c0_66] : memref<1x4x8x16xf32, #tpu.memory_space<vmem>>, vector<1x1x8x16xf32>
    %71 = vector.shape_cast %70 : vector<1x1x8x16xf32> to vector<8x16xf32>
    %72 = vector.shape_cast %69 : vector<8x16xf32> to vector<1x1x8x16xf32>
    tpu.vector_store %arg6[%c0_63, %c2_64, %c0_65, %c0_66], %72 {strides = array<i32>} : memref<1x4x8x16xf32, #tpu.memory_space<vmem>>, vector<1x1x8x16xf32>,
    %73 = arith.truncf %69 : vector<8x16xf32> to vector<8x16xbf16>
    %cst_67 = arith.constant dense<0.000000e+00> : vector<8x8xf32>
    %74 = tpu.matmul %73, %55, %cst_67 {dimension_numbers = #tpu.dot_dimension_numbers<[1], [0], [0], [1], [0, 0, 1, 1], [], []>} : vector<8x16xbf16>, vector<16x8xbf16>, vector<8x8xf32> -> vector<8x8xf32>
    %c0_68 = arith.constant 0 : index
    %c0_69 = arith.constant 0 : index
    %c3 = arith.constant 3 : index
    %c0_70 = arith.constant 0 : index
    %c0_71 = arith.constant 0 : index
    %75 = vector.load %arg2[%c0_68, %c0_69, %c3, %c0_70, %c0_71] : memref<1x1x4x8x8xbf16, #tpu.memory_space<vmem>>, vector<1x1x1x8x8xbf16>
    %76 = vector.shape_cast %75 : vector<1x1x1x8x8xbf16> to vector<8x8xbf16>
    %c0_72 = arith.constant 0 : index
    %c0_73 = arith.constant 0 : index
    %c3_74 = arith.constant 3 : index
    %c0_75 = arith.constant 0 : index
    %c0_76 = arith.constant 0 : index
    %77 = vector.load %arg3[%c0_72, %c0_73, %c3_74, %c0_75, %c0_76] : memref<1x1x4x16x8xbf16, #tpu.memory_space<vmem>>, vector<1x1x1x16x8xbf16>
    %78 = vector.shape_cast %77 : vector<1x1x1x16x8xbf16> to vector<16x8xbf16>
    %c0_77 = arith.constant 0 : index
    %c0_78 = arith.constant 0 : index
    %c3_79 = arith.constant 3 : index
    %c0_80 = arith.constant 0 : index
    %c0_81 = arith.constant 0 : index
    %79 = vector.load %arg4[%c0_77, %c0_78, %c3_79, %c0_80, %c0_81] : memref<1x1x4x16x8xbf16, #tpu.memory_space<vmem>>, vector<1x1x1x16x8xbf16>
    %80 = vector.shape_cast %79 : vector<1x1x1x16x8xbf16> to vector<16x8xbf16>
    %81 = tpu.transpose %78, [1, 0] : vector<16x8xbf16> -> vector<8x16xbf16>
    %cst_82 = arith.constant dense<0.000000e+00> : vector<8x16xf32>
    %82 = tpu.matmul %76, %81, %cst_82 {dimension_numbers = #tpu.dot_dimension_numbers<[1], [0], [0], [1], [0, 0, 1, 1], [], []>} : vector<8x8xbf16>, vector<8x16xbf16>, vector<8x16xf32> -> vector<8x16xf32>
    %cst_83 = arith.constant 0.353553385 : f32
    %83 = vector.broadcast %cst_83 : f32 to vector<8x16xf32>
    %84 = arith.mulf %82, %83 : vector<8x16xf32>
    %cst_84 = arith.constant dense<0xFF800000> : vector<8xf32>
    %85 = vector.multi_reduction <maximumf>, %84, %cst_84 [1] : vector<8x16xf32> to vector<8xf32>
    %86 = vector.shape_cast %85 : vector<8xf32> to vector<8x1xf32>
    %87 = vector.broadcast %86 : vector<8x1xf32> to vector<8x16xf32>
    %88 = arith.subf %84, %87 : vector<8x16xf32>
    %89 = math.exp %88 : vector<8x16xf32>
    %cst_85 = arith.constant dense<0.000000e+00> : vector<8xf32>
    %90 = vector.multi_reduction <add>, %89, %cst_85 [1] : vector<8x16xf32> to vector<8xf32>
    %91 = vector.shape_cast %90 : vector<8xf32> to vector<8x1xf32>
    %92 = tpu.reciprocal %91 {approx = true} : vector<8x1xf32> -> vector<8x1xf32>
    %93 = vector.broadcast %92 : vector<8x1xf32> to vector<8x16xf32>
    %94 = arith.mulf %89, %93 : vector<8x16xf32>
    %c0_86 = arith.constant 0 : index
    %c3_87 = arith.constant 3 : index
    %c0_88 = arith.constant 0 : index
    %c0_89 = arith.constant 0 : index
    %95 = vector.load %arg6[%c0_86, %c3_87, %c0_88, %c0_89] : memref<1x4x8x16xf32, #tpu.memory_space<vmem>>, vector<1x1x8x16xf32>
    %96 = vector.shape_cast %95 : vector<1x1x8x16xf32> to vector<8x16xf32>
    %97 = vector.shape_cast %94 : vector<8x16xf32> to vector<1x1x8x16xf32>
    tpu.vector_store %arg6[%c0_86, %c3_87, %c0_88, %c0_89], %97 {strides = array<i32>} : memref<1x4x8x16xf32, #tpu.memory_space<vmem>>, vector<1x1x8x16xf32>,
    %98 = arith.truncf %94 : vector<8x16xf32> to vector<8x16xbf16>
    %cst_90 = arith.constant dense<0.000000e+00> : vector<8x8xf32>
    %99 = tpu.matmul %98, %80, %cst_90 {dimension_numbers = #tpu.dot_dimension_numbers<[1], [0], [0], [1], [0, 0, 1, 1], [], []>} : vector<8x16xbf16>, vector<16x8xbf16>, vector<8x8xf32> -> vector<8x8xf32>
    %100 = tpu.concatenate %24, %49, %74, %99 in 1 : vector<8x8xf32>, vector<8x8xf32>, vector<8x8xf32>, vector<8x8xf32> -> vector<8x32xf32>
    %101 = arith.truncf %100 : vector<8x32xf32> to vector<8x32xbf16>
    %c0_91 = arith.constant 0 : index
    %c0_92 = arith.constant 0 : index
    %c0_93 = arith.constant 0 : index
    %102 = vector.load %arg5[%c0_91, %c0_92, %c0_93] : memref<1x8x32xbf16, #tpu.memory_space<vmem>>, vector<1x8x32xbf16>
    %103 = vector.shape_cast %102 : vector<1x8x32xbf16> to vector<8x32xbf16>
    %104 = vector.shape_cast %101 : vector<8x32xbf16> to vector<1x8x32xbf16>
    tpu.vector_store %arg5[%c0_91, %c0_92, %c0_93], %104 {strides = array<i32>} : memref<1x8x32xbf16, #tpu.memory_space<vmem>>, vector<1x8x32xbf16>,
    return
  }
  func.func @transform_0(%arg0: i32, %arg1: i32) -> (i32, i32, i32, i32, i32) {
    %c0_i32 = arith.constant 0 : i32
    %c0_i32_0 = arith.constant 0 : i32
    %c0_i32_1 = arith.constant 0 : i32
    %c0_i32_2 = arith.constant 0 : i32
    return %arg0, %c0_i32, %arg1, %c0_i32_0, %c0_i32_1 : i32, i32, i32, i32, i32
  }
  func.func @transform_1(%arg0: i32, %arg1: i32) -> (i32, i32, i32, i32, i32) {
    %c0_i32 = arith.constant 0 : i32
    %c0_i32_0 = arith.constant 0 : i32
    %c0_i32_1 = arith.constant 0 : i32
    %c0_i32_2 = arith.constant 0 : i32
    return %arg0, %c0_i32, %arg1, %c0_i32_0, %c0_i32_1 : i32, i32, i32, i32, i32
  }
  func.func @transform_2(%arg0: i32, %arg1: i32) -> (i32, i32, i32, i32, i32) {
    %c1_i32 = arith.constant 1 : i32
    %c0_i32 = arith.constant 0 : i32
    %c0_i32_0 = arith.constant 0 : i32
    %c0_i32_1 = arith.constant 0 : i32
    return %arg0, %c1_i32, %arg1, %c0_i32, %c0_i32_0 : i32, i32, i32, i32, i32
  }
  func.func @transform_3(%arg0: i32, %arg1: i32) -> (i32, i32, i32) {
    %c0_i32 = arith.constant 0 : i32
    %c0_i32_0 = arith.constant 0 : i32
    return %arg0, %c0_i32, %arg1 : i32, i32, i32
  }
  func.func @transform_4(%arg0: i32, %arg1: i32) -> (i32, i32, i32, i32) {
    %c0_i32 = arith.constant 0 : i32
    %c0_i32_0 = arith.constant 0 : i32
    %c0_i32_1 = arith.constant 0 : i32
    return %arg0, %arg1, %c0_i32, %c0_i32_0 : i32, i32, i32, i32
  }
}

module attributes {stable_mosaic.version = 11 : i64} {
  func.func @_ln_matmul_kernel(%arg0: i32, %arg1: i32, %arg2: memref<16x32xf32, #tpu.memory_space<vmem>>, %arg3: memref<1x32xf32, #tpu.memory_space<vmem>>, %arg4: memref<1x32xf32, #tpu.memory_space<vmem>>, %arg5: memref<32x128xbf16, #tpu.memory_space<vmem>>, %arg6: memref<1x128xf32, #tpu.memory_space<vmem>>, %arg7: memref<16x128xbf16, #tpu.memory_space<vmem>>) attributes {dimension_semantics = [#tpu.dimension_semantics<parallel>, #tpu.dimension_semantics<parallel>], iteration_bounds = array<i64: 1, 1>, scalar_prefetch = 0 : i64, scratch_operands = 0 : i64, tpu.core_type = #tpu.core_type<tc>, window_params = [{transform_indices = @transform_0, window_bounds = array<i64: 16, 32>}, {pipeline_mode = #tpu.pipeline_mode<synchronous>, transform_indices = @transform_1, window_bounds = array<i64: 1, 32>}, {pipeline_mode = #tpu.pipeline_mode<synchronous>, transform_indices = @transform_2, window_bounds = array<i64: 1, 32>}, {transform_indices = @transform_3, window_bounds = array<i64: 32, 128>}, {transform_indices = @transform_4, window_bounds = array<i64: 1, 128>}, {transform_indices = @transform_5, window_bounds = array<i64: 16, 128>}]} {
    %c0 = arith.constant 0 : index
    %c0_0 = arith.constant 0 : index
    %0 = vector.load %arg2[%c0, %c0_0] : memref<16x32xf32, #tpu.memory_space<vmem>>, vector<16x32xf32>
    %cst = arith.constant dense<0.000000e+00> : vector<16xf32>
    %1 = vector.multi_reduction <add>, %0, %cst [1] : vector<16x32xf32> to vector<16xf32>
    %2 = vector.shape_cast %1 : vector<16xf32> to vector<16x1xf32>
    %cst_1 = arith.constant 3.200000e+01 : f32
    %3 = vector.broadcast %cst_1 : f32 to vector<16x1xf32>
    %4 = arith.divf %2, %3 : vector<16x1xf32>
    %5 = vector.broadcast %4 : vector<16x1xf32> to vector<16x32xf32>
    %6 = arith.subf %0, %5 : vector<16x32xf32>
    %7 = vector.broadcast %4 : vector<16x1xf32> to vector<16x32xf32>
    %8 = arith.subf %0, %7 : vector<16x32xf32>
    %9 = arith.mulf %6, %8 : vector<16x32xf32>
    %cst_2 = arith.constant dense<0.000000e+00> : vector<16xf32>
    %10 = vector.multi_reduction <add>, %9, %cst_2 [1] : vector<16x32xf32> to vector<16xf32>
    %11 = vector.shape_cast %10 : vector<16xf32> to vector<16x1xf32>
    %cst_3 = arith.constant 3.200000e+01 : f32
    %12 = vector.broadcast %cst_3 : f32 to vector<16x1xf32>
    %13 = arith.divf %11, %12 : vector<16x1xf32>
    %14 = vector.broadcast %4 : vector<16x1xf32> to vector<16x32xf32>
    %15 = arith.subf %0, %14 : vector<16x32xf32>
    %cst_4 = arith.constant 9.99999974E-6 : f32
    %16 = vector.broadcast %cst_4 : f32 to vector<16x1xf32>
    %17 = arith.addf %13, %16 : vector<16x1xf32>
    %18 = math.rsqrt %17 : vector<16x1xf32>
    %19 = vector.broadcast %18 : vector<16x1xf32> to vector<16x32xf32>
    %20 = arith.mulf %15, %19 : vector<16x32xf32>
    %c0_5 = arith.constant 0 : index
    %c0_6 = arith.constant 0 : index
    %21 = vector.load %arg3[%c0_5, %c0_6] : memref<1x32xf32, #tpu.memory_space<vmem>>, vector<1x32xf32>
    %22 = vector.broadcast %21 : vector<1x32xf32> to vector<16x32xf32>
    %23 = arith.mulf %20, %22 : vector<16x32xf32>
    %c0_7 = arith.constant 0 : index
    %c0_8 = arith.constant 0 : index
    %24 = vector.load %arg4[%c0_7, %c0_8] : memref<1x32xf32, #tpu.memory_space<vmem>>, vector<1x32xf32>
    %25 = vector.broadcast %24 : vector<1x32xf32> to vector<16x32xf32>
    %26 = arith.addf %23, %25 : vector<16x32xf32>
    %27 = arith.truncf %26 : vector<16x32xf32> to vector<16x32xbf16>
    %c0_9 = arith.constant 0 : index
    %c0_10 = arith.constant 0 : index
    %28 = vector.load %arg5[%c0_9, %c0_10] : memref<32x128xbf16, #tpu.memory_space<vmem>>, vector<32x128xbf16>
    %cst_11 = arith.constant dense<0.000000e+00> : vector<16x128xf32>
    %29 = tpu.matmul %27, %28, %cst_11 {dimension_numbers = #tpu.dot_dimension_numbers<[1], [0], [0], [1], [0, 0, 1, 1], [], []>} : vector<16x32xbf16>, vector<32x128xbf16>, vector<16x128xf32> -> vector<16x128xf32>
    %c0_12 = arith.constant 0 : index
    %c0_13 = arith.constant 0 : index
    %30 = vector.load %arg6[%c0_12, %c0_13] : memref<1x128xf32, #tpu.memory_space<vmem>>, vector<1x128xf32>
    %31 = vector.broadcast %30 : vector<1x128xf32> to vector<16x128xf32>
    %32 = arith.addf %29, %31 : vector<16x128xf32>
    %cst_14 = arith.constant 5.000000e-01 : f32
    %33 = vector.broadcast %cst_14 : f32 to vector<16x128xf32>
    %34 = arith.mulf %33, %32 : vector<16x128xf32>
    %cst_15 = arith.constant 4.471500e-02 : f32
    %35 = vector.broadcast %cst_15 : f32 to vector<16x128xf32>
    %36 = arith.mulf %35, %32 : vector<16x128xf32>
    %37 = arith.mulf %36, %32 : vector<16x128xf32>
    %38 = arith.mulf %37, %32 : vector<16x128xf32>
    %39 = arith.addf %32, %38 : vector<16x128xf32>
    %cst_16 = arith.constant 0.797884583 : f32
    %40 = vector.broadcast %cst_16 : f32 to vector<16x128xf32>
    %41 = arith.mulf %40, %39 : vector<16x128xf32>
    %42 = math.tanh %41 : vector<16x128xf32>
    %cst_17 = arith.constant 1.000000e+00 : f32
    %43 = vector.broadcast %cst_17 : f32 to vector<16x128xf32>
    %44 = arith.addf %43, %42 : vector<16x128xf32>
    %45 = arith.mulf %34, %44 : vector<16x128xf32>
    %46 = arith.truncf %45 : vector<16x128xf32> to vector<16x128xbf16>
    %c0_18 = arith.constant 0 : index
    %c0_19 = arith.constant 0 : index
    %47 = vector.load %arg7[%c0_18, %c0_19] : memref<16x128xbf16, #tpu.memory_space<vmem>>, vector<16x128xbf16>
    tpu.vector_store %arg7[%c0_18, %c0_19], %46 {strides = array<i32>} : memref<16x128xbf16, #tpu.memory_space<vmem>>, vector<16x128xbf16>,
    return
  }
  func.func @transform_0(%arg0: i32, %arg1: i32) -> (i32, i32) {
    %c0_i32 = arith.constant 0 : i32
    %c0_i32_0 = arith.constant 0 : i32
    return %arg0, %c0_i32 : i32, i32
  }
  func.func @transform_1(%arg0: i32, %arg1: i32) -> (i32, i32) {
    %c0_i32 = arith.constant 0 : i32
    %c0_i32_0 = arith.constant 0 : i32
    %c0_i32_1 = arith.constant 0 : i32
    return %c0_i32, %c0_i32_0 : i32, i32
  }
  func.func @transform_2(%arg0: i32, %arg1: i32) -> (i32, i32) {
    %c0_i32 = arith.constant 0 : i32
    %c0_i32_0 = arith.constant 0 : i32
    %c0_i32_1 = arith.constant 0 : i32
    return %c0_i32, %c0_i32_0 : i32, i32
  }
  func.func @transform_3(%arg0: i32, %arg1: i32) -> (i32, i32) {
    %c0_i32 = arith.constant 0 : i32
    %c0_i32_0 = arith.constant 0 : i32
    return %c0_i32, %arg1 : i32, i32
  }
  func.func @transform_4(%arg0: i32, %arg1: i32) -> (i32, i32) {
    %c0_i32 = arith.constant 0 : i32
    %c0_i32_0 = arith.constant 0 : i32
    return %c0_i32, %arg1 : i32, i32
  }
  func.func @transform_5(%arg0: i32, %arg1: i32) -> (i32, i32) {
    %c0_i32 = arith.constant 0 : i32
    return %arg0, %arg1 : i32, i32
  }
}

module attributes {stable_mosaic.version = 11 : i64} {
  func.func @_matmul_bias_res_kernel_single_k(%arg0: i32, %arg1: i32, %arg2: memref<16x128xbf16, #tpu.memory_space<vmem>>, %arg3: memref<128x32xbf16, #tpu.memory_space<vmem>>, %arg4: memref<1x32xf32, #tpu.memory_space<vmem>>, %arg5: memref<16x32xf32, #tpu.memory_space<vmem>>, %arg6: memref<16x32xf32, #tpu.memory_space<vmem>>) attributes {dimension_semantics = [#tpu.dimension_semantics<parallel>, #tpu.dimension_semantics<parallel>], iteration_bounds = array<i64: 1, 1>, scalar_prefetch = 0 : i64, scratch_operands = 0 : i64, tpu.core_type = #tpu.core_type<tc>, window_params = [{transform_indices = @transform_0, window_bounds = array<i64: 16, 128>}, {transform_indices = @transform_1, window_bounds = array<i64: 128, 32>}, {transform_indices = @transform_2, window_bounds = array<i64: 1, 32>}, {transform_indices = @transform_3, window_bounds = array<i64: 16, 32>}, {transform_indices = @transform_4, window_bounds = array<i64: 16, 32>}]} {
    %c0 = arith.constant 0 : index
    %c0_0 = arith.constant 0 : index
    %0 = vector.load %arg2[%c0, %c0_0] : memref<16x128xbf16, #tpu.memory_space<vmem>>, vector<16x128xbf16>
    %c0_1 = arith.constant 0 : index
    %c0_2 = arith.constant 0 : index
    %1 = vector.load %arg3[%c0_1, %c0_2] : memref<128x32xbf16, #tpu.memory_space<vmem>>, vector<128x32xbf16>
    %cst = arith.constant dense<0.000000e+00> : vector<16x32xf32>
    %2 = tpu.matmul %0, %1, %cst {dimension_numbers = #tpu.dot_dimension_numbers<[1], [0], [0], [1], [0, 0, 1, 1], [], []>} : vector<16x128xbf16>, vector<128x32xbf16>, vector<16x32xf32> -> vector<16x32xf32>
    %c0_3 = arith.constant 0 : index
    %c0_4 = arith.constant 0 : index
    %3 = vector.load %arg4[%c0_3, %c0_4] : memref<1x32xf32, #tpu.memory_space<vmem>>, vector<1x32xf32>
    %4 = vector.broadcast %3 : vector<1x32xf32> to vector<16x32xf32>
    %5 = arith.addf %2, %4 : vector<16x32xf32>
    %c0_5 = arith.constant 0 : index
    %c0_6 = arith.constant 0 : index
    %6 = vector.load %arg5[%c0_5, %c0_6] : memref<16x32xf32, #tpu.memory_space<vmem>>, vector<16x32xf32>
    %7 = arith.addf %5, %6 : vector<16x32xf32>
    %c0_7 = arith.constant 0 : index
    %c0_8 = arith.constant 0 : index
    %8 = vector.load %arg6[%c0_7, %c0_8] : memref<16x32xf32, #tpu.memory_space<vmem>>, vector<16x32xf32>
    tpu.vector_store %arg6[%c0_7, %c0_8], %7 {strides = array<i32>} : memref<16x32xf32, #tpu.memory_space<vmem>>, vector<16x32xf32>,
    return
  }
  func.func @transform_0(%arg0: i32, %arg1: i32) -> (i32, i32) {
    %c0_i32 = arith.constant 0 : i32
    %c0_i32_0 = arith.constant 0 : i32
    return %arg0, %c0_i32 : i32, i32
  }
  func.func @transform_1(%arg0: i32, %arg1: i32) -> (i32, i32) {
    %c0_i32 = arith.constant 0 : i32
    %c0_i32_0 = arith.constant 0 : i32
    return %c0_i32, %arg1 : i32, i32
  }
  func.func @transform_2(%arg0: i32, %arg1: i32) -> (i32, i32) {
    %c0_i32 = arith.constant 0 : i32
    %c0_i32_0 = arith.constant 0 : i32
    return %c0_i32, %arg1 : i32, i32
  }
  func.func @transform_3(%arg0: i32, %arg1: i32) -> (i32, i32) {
    %c0_i32 = arith.constant 0 : i32
    return %arg0, %arg1 : i32, i32
  }
  func.func @transform_4(%arg0: i32, %arg1: i32) -> (i32, i32) {
    %c0_i32 = arith.constant 0 : i32
    return %arg0, %arg1 : i32, i32
  }
}

module attributes {stable_mosaic.version = 11 : i64} {
  func.func @_layernorm_kernel(%arg0: i32, %arg1: memref<16x32xf32, #tpu.memory_space<vmem>>, %arg2: memref<1x32xf32, #tpu.memory_space<vmem>>, %arg3: memref<1x32xf32, #tpu.memory_space<vmem>>, %arg4: memref<16x32xf32, #tpu.memory_space<vmem>>) attributes {dimension_semantics = [#tpu.dimension_semantics<parallel>], iteration_bounds = array<i64: 1>, scalar_prefetch = 0 : i64, scratch_operands = 0 : i64, tpu.core_type = #tpu.core_type<tc>, window_params = [{transform_indices = @transform_0, window_bounds = array<i64: 16, 32>}, {pipeline_mode = #tpu.pipeline_mode<synchronous>, transform_indices = @transform_1, window_bounds = array<i64: 1, 32>}, {pipeline_mode = #tpu.pipeline_mode<synchronous>, transform_indices = @transform_2, window_bounds = array<i64: 1, 32>}, {transform_indices = @transform_3, window_bounds = array<i64: 16, 32>}]} {
    %c0 = arith.constant 0 : index
    %c0_0 = arith.constant 0 : index
    %0 = vector.load %arg1[%c0, %c0_0] : memref<16x32xf32, #tpu.memory_space<vmem>>, vector<16x32xf32>
    %cst = arith.constant dense<0.000000e+00> : vector<16xf32>
    %1 = vector.multi_reduction <add>, %0, %cst [1] : vector<16x32xf32> to vector<16xf32>
    %2 = vector.shape_cast %1 : vector<16xf32> to vector<16x1xf32>
    %cst_1 = arith.constant 3.200000e+01 : f32
    %3 = vector.broadcast %cst_1 : f32 to vector<16x1xf32>
    %4 = arith.divf %2, %3 : vector<16x1xf32>
    %5 = vector.broadcast %4 : vector<16x1xf32> to vector<16x32xf32>
    %6 = arith.subf %0, %5 : vector<16x32xf32>
    %7 = vector.broadcast %4 : vector<16x1xf32> to vector<16x32xf32>
    %8 = arith.subf %0, %7 : vector<16x32xf32>
    %9 = arith.mulf %6, %8 : vector<16x32xf32>
    %cst_2 = arith.constant dense<0.000000e+00> : vector<16xf32>
    %10 = vector.multi_reduction <add>, %9, %cst_2 [1] : vector<16x32xf32> to vector<16xf32>
    %11 = vector.shape_cast %10 : vector<16xf32> to vector<16x1xf32>
    %cst_3 = arith.constant 3.200000e+01 : f32
    %12 = vector.broadcast %cst_3 : f32 to vector<16x1xf32>
    %13 = arith.divf %11, %12 : vector<16x1xf32>
    %14 = vector.broadcast %4 : vector<16x1xf32> to vector<16x32xf32>
    %15 = arith.subf %0, %14 : vector<16x32xf32>
    %cst_4 = arith.constant 9.99999974E-6 : f32
    %16 = vector.broadcast %cst_4 : f32 to vector<16x1xf32>
    %17 = arith.addf %13, %16 : vector<16x1xf32>
    %18 = math.rsqrt %17 : vector<16x1xf32>
    %19 = vector.broadcast %18 : vector<16x1xf32> to vector<16x32xf32>
    %20 = arith.mulf %15, %19 : vector<16x32xf32>
    %c0_5 = arith.constant 0 : index
    %c0_6 = arith.constant 0 : index
    %21 = vector.load %arg2[%c0_5, %c0_6] : memref<1x32xf32, #tpu.memory_space<vmem>>, vector<1x32xf32>
    %22 = vector.broadcast %21 : vector<1x32xf32> to vector<16x32xf32>
    %23 = arith.mulf %20, %22 : vector<16x32xf32>
    %c0_7 = arith.constant 0 : index
    %c0_8 = arith.constant 0 : index
    %24 = vector.load %arg3[%c0_7, %c0_8] : memref<1x32xf32, #tpu.memory_space<vmem>>, vector<1x32xf32>
    %25 = vector.broadcast %24 : vector<1x32xf32> to vector<16x32xf32>
    %26 = arith.addf %23, %25 : vector<16x32xf32>
    %c0_9 = arith.constant 0 : index
    %c0_10 = arith.constant 0 : index
    %27 = vector.load %arg4[%c0_9, %c0_10] : memref<16x32xf32, #tpu.memory_space<vmem>>, vector<16x32xf32>
    tpu.vector_store %arg4[%c0_9, %c0_10], %26 {strides = array<i32>} : memref<16x32xf32, #tpu.memory_space<vmem>>, vector<16x32xf32>,
    return
  }
  func.func @transform_0(%arg0: i32) -> (i32, i32) {
    %c0_i32 = arith.constant 0 : i32
    %c0_i32_0 = arith.constant 0 : i32
    return %arg0, %c0_i32 : i32, i32
  }
  func.func @transform_1(%arg0: i32) -> (i32, i32) {
    %c0_i32 = arith.constant 0 : i32
    %c0_i32_0 = arith.constant 0 : i32
    %c0_i32_1 = arith.constant 0 : i32
    return %c0_i32, %c0_i32_0 : i32, i32
  }
  func.func @transform_2(%arg0: i32) -> (i32, i32) {
    %c0_i32 = arith.constant 0 : i32
    %c0_i32_0 = arith.constant 0 : i32
    %c0_i32_1 = arith.constant 0 : i32
    return %c0_i32, %c0_i32_0 : i32, i32
  }
  func.func @transform_3(%arg0: i32) -> (i32, i32) {
    %c0_i32 = arith.constant 0 : i32
    %c0_i32_0 = arith.constant 0 : i32
    return %arg0, %c0_i32 : i32, i32
  }
}

</mosaic_0001>

<llo_original>
// kernel: gpt2_decoder_forward.21
$region0: #{gpt2_decoder_forward.21}
  #allocation0 [shape = 'u32[]', space=smem, size = 0x4, offset = 0x4, fixed_abs, tag = 'smem constant byte address 0x4 - core index']
  #allocation1 [shape = 'u32[144,128]{1,0:T(1,128)}', space=vmem, size = 0x12000, scoped, tag = 'internal scratch']
  %s0 = inlined_call_operand.vmem [shape: bf16[16,32], index: 0, kind: input, shape index: {}]
  %s1 = inlined_call_operand.vmem [shape: bf16[32,32], index: 1, kind: input, shape index: {}]
  %s2 = inlined_call_operand.vmem [shape: f32[1,32], index: 2, kind: input, shape index: {}]
  %s3 = inlined_call_operand.vmem [shape: f32[16,32], index: 3, kind: input, shape index: {}]
  %s4 = inlined_call_operand.vmem [shape: f32[16,32], index: 4, kind: output, shape index: {}]
  %s5 = sld [smem:[#allocation0]]
  $region26: #{gpt2_decoder_forward.21} parent=0
    _
  %s7 = ssub.s32 1, %s5
  %s8 = scalar_select 0, %s7, %s5
  // Predicated region
  $region2: #{gpt2_decoder_forward.21} parent=0 // pred_check
    _
  $region3: #{gpt2_decoder_forward.21} parent=0 // pred_check_branch
    %10 = sbr.rel (0) target = $region5
  $region4: #{gpt2_decoder_forward.21} parent=0 // pred_region
    _
  $region5: #{gpt2_decoder_forward.21} parent=0 // pred_fallthru
    _
  // Predicated region
  $region6: #{gpt2_decoder_forward.21} parent=0 // pred_check
    _
  $region7: #{gpt2_decoder_forward.21} parent=0 // pred_check_branch
    %12 = sbr.rel (0) target = $region9
  $region8: #{gpt2_decoder_forward.21} parent=0 // pred_region
    _
  $region9: #{gpt2_decoder_forward.21} parent=0 // pred_fallthru
    _
  // Predicated region
  $region10: #{gpt2_decoder_forward.21} parent=0 // pred_check
    _
  $region11: #{gpt2_decoder_forward.21} parent=0 // pred_check_branch
    %14 = sbr.rel (0) target = $region13
  $region12: #{gpt2_decoder_forward.21} parent=0 // pred_region
    _
  $region13: #{gpt2_decoder_forward.21} parent=0 // pred_fallthru
    _
  // Predicated region
  $region14: #{gpt2_decoder_forward.21} parent=0 // pred_check
    _
  $region15: #{gpt2_decoder_forward.21} parent=0 // pred_check_branch
    %16 = sbr.rel (0) target = $region17
  $region16: #{gpt2_decoder_forward.21} parent=0 // pred_region
    _
  $region17: #{gpt2_decoder_forward.21} parent=0 // pred_fallthru
    _
  %v18 = vld [vmem:[%s0] sm:$0xf]
  %v19 = vld [vmem:[%s0 + $0x4] sm:$0xf]
  %v20 = vld [vmem:[%s1] sm:$0xf]
  %v21 = vld [vmem:[%s1 + $0x4] sm:$0xf]
  %v22 = vld [vmem:[%s1 + $0x8] sm:$0xf]
  %v23 = vld [vmem:[%s1 + $0xc] sm:$0xf]
  %v24 = vld [vmem:[%s2] sm:$0x1]
  %v26 = vlaneseq
  %v27 = vshrl.u32 %v26, 7
  %v28 = vsub.s32 0, %v27
  %v29 = vrot.slane %v24, %v28
  %v33 = vunpack.c.l.b16 %v18
  %v34 = vunpack.c.l.b16 %v19
  %v35 = vpack.c.b16 %v34, %v33
  %v40 = vunpack.c.l.b16 %v20
  %v41 = vunpack.c.l.b16 %v21
  %v42 = vunpack.c.l.b16 %v22
  %v43 = vunpack.c.l.b16 %v23
  %v44 = vpack.c.b16 %v41, %v40
  %v45 = vpack.c.b16 %v43, %v42
  %vm48 = vcmask 261120
  %v50 = vsel %vm48, %v35, 0
  %52 = vmatprep.subr.bf16.mxu0 0
  %53 = vmatpush1.bf16.msra.mxu0 0
  %54 = vmatprep.subr.bf16.mxu0 0
  %55 = vmatpush1.bf16.msra.mxu0 0
  %56 = vmatprep.subr.bf16.mxu0 0
  %57 = vmatpush1.bf16.msra.mxu0 0
  %58 = vmatprep.subr.bf16.mxu0 0
  %59 = vmatpush1.bf16.msra.mxu0 0
  %60 = vmatprep.subr.bf16.mxu0 0
  %61 = vmatpush1.bf16.msra.mxu0 0
  %62 = vmatprep.subr.bf16.mxu0 0
  %63 = vmatpush1.bf16.msra.mxu0 0
  %64 = vmatprep.subr.bf16.mxu0 0
  %65 = vmatpush1.bf16.msra.mxu0 %v45
  %66 = vmatprep.subr.bf16.mxu0 0
  %67 = vmatpush1.bf16.msra.mxu0 %v44
  %68 = vmatprep.subr.bf16.mxu0 0
  %69 = vmatpush2.bf16.msra.mxu0 0
  %70 = vmatprep.subr.bf16.mxu0 0
  %71 = vmatpush2.bf16.msra.mxu0 0
  %72 = vmatprep.subr.bf16.mxu0 0
  %73 = vmatpush2.bf16.msra.mxu0 0
  %74 = vmatprep.subr.bf16.mxu0 0
  %75 = vmatpush2.bf16.msra.mxu0 0
  %76 = vmatprep.subr.bf16.mxu0 0
  %77 = vmatpush2.bf16.msra.mxu0 0
  %78 = vmatprep.subr.bf16.mxu0 0
  %79 = vmatpush2.bf16.msra.mxu0 0
  %80 = vmatprep.subr.bf16.mxu0 0
  %81 = vmatpush2.bf16.msra.mxu0 0
  %82 = vmatprep.subr.bf16.mxu0 0
  %83 = vmatpush2.bf16.msra.mxu0 0
  %84 = vmatprep.mubr.bf16.mxu0 0
  %85 = vmatmul.mubr.bf16.gmra.mxu0 %v50
  %v86 = vpop.f32.mrf.mxu0
  %v87 = vadd.f32 %v29, %v86
  %v88 = vpop.f32.mrf.mxu0
  %v89 = vpop.f32.mrf.mxu0
  %v90 = vadd.f32 %v29, %v89
  %v91 = vpop.f32.mrf.mxu0
  %92 = vdwg.mxu0
  %v93 = vld [vmem:[%s3] sm:$0xff]
  %v94 = vld [vmem:[%s3 + $0x8] sm:$0xff]
  %v95 = vadd.f32 %v87, %v93
  %v96 = vadd.f32 %v90, %v94
  %97 = vst.msk [vmem:[%s4] sm:$0xff] %vm48, %v95
  %98 = vst.msk [vmem:[%s4 + $0x8] sm:$0xff] %vm48, %v96
  // Predicated region
  $region18: #{gpt2_decoder_forward.21} parent=0 // pred_check
    _
  $region19: #{gpt2_decoder_forward.21} parent=0 // pred_check_branch
    %100 = sbr.rel (0) target = $region21
  $region20: #{gpt2_decoder_forward.21} parent=0 // pred_region
    _
  $region21: #{gpt2_decoder_forward.21} parent=0 // pred_fallthru
    _
  // Predicated region
  $region22: #{gpt2_decoder_forward.21} parent=0 // pred_check
    _
  $region23: #{gpt2_decoder_forward.21} parent=0 // pred_check_branch
    %102 = sbr.rel (0) target = $region25
  $region24: #{gpt2_decoder_forward.21} parent=0 // pred_region
    _
  $region25: #{gpt2_decoder_forward.21} parent=0 // pred_fallthru
    _

// kernel: gpt2_decoder_forward.19
$region0: #{gpt2_decoder_forward.19}
  #allocation0 [shape = 'u32[]', space=smem, size = 0x4, offset = 0x4, fixed_abs, tag = 'smem constant byte address 0x4 - core index']
  #allocation1 [shape = 'u32[144,128]{1,0:T(1,128)}', space=vmem, size = 0x12000, scoped, tag = 'internal scratch']
  %s0 = inlined_call_operand.vmem [shape: f32[16,32], index: 0, kind: input, shape index: {}]
  %s1 = inlined_call_operand.vmem [shape: f32[1,32], index: 1, kind: input, shape index: {}]
  %s2 = inlined_call_operand.vmem [shape: f32[1,32], index: 2, kind: input, shape index: {}]
  %s3 = inlined_call_operand.vmem [shape: bf16[32,96], index: 3, kind: input, shape index: {}]
  %s4 = inlined_call_operand.vmem [shape: f32[1,96], index: 4, kind: input, shape index: {}]
  %s5 = inlined_call_operand.vmem [shape: f32[16,96], index: 5, kind: output, shape index: {}]
  %s6 = sld [smem:[#allocation0]]
  $region30: #{gpt2_decoder_forward.19} parent=0
    _
  %s8 = ssub.s32 1, %s6
  %s9 = scalar_select 0, %s8, %s6
  // Predicated region
  $region2: #{gpt2_decoder_forward.19} parent=0 // pred_check
    _
  $region3: #{gpt2_decoder_forward.19} parent=0 // pred_check_branch
    %11 = sbr.rel (0) target = $region5
  $region4: #{gpt2_decoder_forward.19} parent=0 // pred_region
    _
  $region5: #{gpt2_decoder_forward.19} parent=0 // pred_fallthru
    _
  // Predicated region
  $region6: #{gpt2_decoder_forward.19} parent=0 // pred_check
    _
  $region7: #{gpt2_decoder_forward.19} parent=0 // pred_check_branch
    %13 = sbr.rel (0) target = $region9
  $region8: #{gpt2_decoder_forward.19} parent=0 // pred_region
    _
  $region9: #{gpt2_decoder_forward.19} parent=0 // pred_fallthru
    _
  // Predicated region
  $region10: #{gpt2_decoder_forward.19} parent=0 // pred_check
    _
  $region11: #{gpt2_decoder_forward.19} parent=0 // pred_check_branch
    %15 = sbr.rel (0) target = $region13
  $region12: #{gpt2_decoder_forward.19} parent=0 // pred_region
    _
  $region13: #{gpt2_decoder_forward.19} parent=0 // pred_fallthru
    _
  // Predicated region
  $region14: #{gpt2_decoder_forward.19} parent=0 // pred_check
    _
  $region15: #{gpt2_decoder_forward.19} parent=0 // pred_check_branch
    %17 = sbr.rel (0) target = $region17
  $region16: #{gpt2_decoder_forward.19} parent=0 // pred_region
    _
  $region17: #{gpt2_decoder_forward.19} parent=0 // pred_fallthru
    _
  // Predicated region
  $region18: #{gpt2_decoder_forward.19} parent=0 // pred_check
    _
  $region19: #{gpt2_decoder_forward.19} parent=0 // pred_check_branch
    %19 = sbr.rel (0) target = $region21
  $region20: #{gpt2_decoder_forward.19} parent=0 // pred_region
    _
  $region21: #{gpt2_decoder_forward.19} parent=0 // pred_fallthru
    _
  %v21 = vld [vmem:[%s0] sm:$0xff]
  %v22 = vld [vmem:[%s0 + $0x8] sm:$0xff]
  %vm23 = vcmask 261120
  %v24 = vsel %vm23, %v21, 0.0
  %25 = vadd.xlane.f32.xlu0 %v24
  %v26 = vpop.xlane.xlu0 %25
  %v27 = vsel %vm23, %v22, 0.0
  %28 = vadd.xlane.f32.xlu0 %v27
  %v29 = vpop.xlane.xlu0 %28
  %v30 = vrcp.pop 32.0
  %v31 = vmul.f32 %v26, %v30
  %v32 = vmul.f32 %v29, %v30
  %v33 = vsub.f32 %v21, %v31
  %v34 = vsub.f32 %v22, %v32
  %v35 = vmul.f32 %v33, %v33
  %v36 = vmul.f32 %v34, %v34
  %v37 = vsel %vm23, %v35, 0.0
  %38 = vadd.xlane.f32.xlu0 %v37
  %v39 = vpop.xlane.xlu0 %38
  %v40 = vsel %vm23, %v36, 0.0
  %41 = vadd.xlane.f32.xlu0 %v40
  %v42 = vpop.xlane.xlu0 %41
  %v43 = vmul.f32 %v39, %v30
  %v44 = vmul.f32 %v42, %v30
  %v45 = vadd.f32 %v43, 1e-05
  %v46 = vadd.f32 %v44, 1e-05
  %v47 = vrsqrt.pop %v45
  %v48 = vrsqrt.pop %v46
  %v49 = vmul.f32 %v33, %v47
  %v50 = vmul.f32 %v34, %v48
  %v51 = vld [vmem:[%s1] sm:$0x1]
  %v53 = vlaneseq
  %v54 = vshrl.u32 %v53, 7
  %v55 = vsub.s32 0, %v54
  %v56 = vrot.slane %v51, %v55
  %v58 = vmul.f32 %v49, %v56
  %v59 = vmul.f32 %v50, %v56
  %v60 = vld [vmem:[%s2] sm:$0x1]
  %v62 = vlaneseq
  %v63 = vshrl.u32 %v62, 7
  %v64 = vsub.s32 0, %v63
  %v65 = vrot.slane %v60, %v64
  %v67 = vadd.f32 %v58, %v65
  %v68 = vadd.f32 %v59, %v65
  %v69 = vpack.c.bf16 %v68, %v67
  %v70 = vld [vmem:[%s3] sm:$0xf]
  %v71 = vld [vmem:[%s3 + $0x4] sm:$0xf]
  %v72 = vld [vmem:[%s3 + $0x8] sm:$0xf]
  %v73 = vld [vmem:[%s3 + $0xc] sm:$0xf]
  %v74 = vld [vmem:[%s4] sm:$0x1]
  %v76 = vlaneseq
  %v77 = vshrl.u32 %v76, 7
  %v78 = vsub.s32 0, %v77
  %v79 = vrot.slane %v74, %v78
  %v85 = vunpack.c.l.b16 %v70
  %v86 = vunpack.c.l.b16 %v71
  %v87 = vunpack.c.l.b16 %v72
  %v88 = vunpack.c.l.b16 %v73
  %v89 = vpack.c.b16 %v86, %v85
  %v90 = vpack.c.b16 %v88, %v87
  %v94 = vsel %vm23, %v69, 0
  %96 = vmatprep.subr.bf16.mxu0 0
  %97 = vmatpush1.bf16.msra.mxu0 0
  %98 = vmatprep.subr.bf16.mxu0 0
  %99 = vmatpush1.bf16.msra.mxu0 0
  %100 = vmatprep.subr.bf16.mxu0 0
  %101 = vmatpush1.bf16.msra.mxu0 0
  %102 = vmatprep.subr.bf16.mxu0 0
  %103 = vmatpush1.bf16.msra.mxu0 0
  %104 = vmatprep.subr.bf16.mxu0 0
  %105 = vmatpush1.bf16.msra.mxu0 0
  %106 = vmatprep.subr.bf16.mxu0 0
  %107 = vmatpush1.bf16.msra.mxu0 0
  %108 = vmatprep.subr.bf16.mxu0 0
  %109 = vmatpush1.bf16.msra.mxu0 %v90
  %110 = vmatprep.subr.bf16.mxu0 0
  %111 = vmatpush1.bf16.msra.mxu0 %v89
  %112 = vmatprep.subr.bf16.mxu0 0
  %113 = vmatpush2.bf16.msra.mxu0 0
  %114 = vmatprep.subr.bf16.mxu0 0
  %115 = vmatpush2.bf16.msra.mxu0 0
  %116 = vmatprep.subr.bf16.mxu0 0
  %117 = vmatpush2.bf16.msra.mxu0 0
  %118 = vmatprep.subr.bf16.mxu0 0
  %119 = vmatpush2.bf16.msra.mxu0 0
  %120 = vmatprep.subr.bf16.mxu0 0
  %121 = vmatpush2.bf16.msra.mxu0 0
  %122 = vmatprep.subr.bf16.mxu0 0
  %123 = vmatpush2.bf16.msra.mxu0 0
  %124 = vmatprep.subr.bf16.mxu0 0
  %125 = vmatpush2.bf16.msra.mxu0 0
  %126 = vmatprep.subr.bf16.mxu0 0
  %127 = vmatpush2.bf16.msra.mxu0 0
  %128 = vmatprep.mubr.bf16.mxu0 0
  %129 = vmatmul.mubr.bf16.gmra.mxu0 %v94
  %v130 = vpop.f32.mrf.mxu0
  %v131 = vadd.f32 %v79, %v130
  %v132 = vpop.f32.mrf.mxu0
  %v133 = vpop.f32.mrf.mxu0
  %v134 = vadd.f32 %v79, %v133
  %v135 = vpop.f32.mrf.mxu0
  %136 = vdwg.mxu0
  %vm137 = vcmask 785408
  %138 = vst.msk [vmem:[%s5] sm:$0xff] %vm137, %v131
  %139 = vst.msk [vmem:[%s5 + $0x8] sm:$0xff] %vm137, %v134
  // Predicated region
  $region22: #{gpt2_decoder_forward.19} parent=0 // pred_check
    _
  $region23: #{gpt2_decoder_forward.19} parent=0 // pred_check_branch
    %141 = sbr.rel (0) target = $region25
  $region24: #{gpt2_decoder_forward.19} parent=0 // pred_region
    _
  $region25: #{gpt2_decoder_forward.19} parent=0 // pred_fallthru
    _
  // Predicated region
  $region26: #{gpt2_decoder_forward.19} parent=0 // pred_check
    _
  $region27: #{gpt2_decoder_forward.19} parent=0 // pred_check_branch
    %143 = sbr.rel (0) target = $region29
  $region28: #{gpt2_decoder_forward.19} parent=0 // pred_region
    _
  $region29: #{gpt2_decoder_forward.19} parent=0 // pred_fallthru
    _

// kernel: gpt2_decoder_forward.22
$region0: #{gpt2_decoder_forward.22}
  #allocation0 [shape = 'u32[]', space=smem, size = 0x4, offset = 0x4, fixed_abs, tag = 'smem constant byte address 0x4 - core index']
  #allocation1 [shape = 'u32[144,128]{1,0:T(1,128)}', space=vmem, size = 0x12000, scoped, tag = 'internal scratch']
  %s0 = inlined_call_operand.vmem [shape: f32[16,32], index: 0, kind: input, shape index: {}]
  %s1 = inlined_call_operand.vmem [shape: f32[1,32], index: 1, kind: input, shape index: {}]
  %s2 = inlined_call_operand.vmem [shape: f32[1,32], index: 2, kind: input, shape index: {}]
  %s3 = inlined_call_operand.vmem [shape: bf16[32,32], index: 3, kind: input, shape index: {}]
  %s4 = inlined_call_operand.vmem [shape: f32[1,32], index: 4, kind: input, shape index: {}]
  %s5 = inlined_call_operand.vmem [shape: bf16[16,32], index: 5, kind: output, shape index: {}]
  %s6 = sld [smem:[#allocation0]]
  $region30: #{gpt2_decoder_forward.22} parent=0
    _
  %s8 = ssub.s32 1, %s6
  %s9 = scalar_select 0, %s8, %s6
  // Predicated region
  $region2: #{gpt2_decoder_forward.22} parent=0 // pred_check
    _
  $region3: #{gpt2_decoder_forward.22} parent=0 // pred_check_branch
    %11 = sbr.rel (0) target = $region5
  $region4: #{gpt2_decoder_forward.22} parent=0 // pred_region
    _
  $region5: #{gpt2_decoder_forward.22} parent=0 // pred_fallthru
    _
  // Predicated region
  $region6: #{gpt2_decoder_forward.22} parent=0 // pred_check
    _
  $region7: #{gpt2_decoder_forward.22} parent=0 // pred_check_branch
    %13 = sbr.rel (0) target = $region9
  $region8: #{gpt2_decoder_forward.22} parent=0 // pred_region
    _
  $region9: #{gpt2_decoder_forward.22} parent=0 // pred_fallthru
    _
  // Predicated region
  $region10: #{gpt2_decoder_forward.22} parent=0 // pred_check
    _
  $region11: #{gpt2_decoder_forward.22} parent=0 // pred_check_branch
    %15 = sbr.rel (0) target = $region13
  $region12: #{gpt2_decoder_forward.22} parent=0 // pred_region
    _
  $region13: #{gpt2_decoder_forward.22} parent=0 // pred_fallthru
    _
  // Predicated region
  $region14: #{gpt2_decoder_forward.22} parent=0 // pred_check
    _
  $region15: #{gpt2_decoder_forward.22} parent=0 // pred_check_branch
    %17 = sbr.rel (0) target = $region17
  $region16: #{gpt2_decoder_forward.22} parent=0 // pred_region
    _
  $region17: #{gpt2_decoder_forward.22} parent=0 // pred_fallthru
    _
  // Predicated region
  $region18: #{gpt2_decoder_forward.22} parent=0 // pred_check
    _
  $region19: #{gpt2_decoder_forward.22} parent=0 // pred_check_branch
    %19 = sbr.rel (0) target = $region21
  $region20: #{gpt2_decoder_forward.22} parent=0 // pred_region
    _
  $region21: #{gpt2_decoder_forward.22} parent=0 // pred_fallthru
    _
  %v21 = vld [vmem:[%s0] sm:$0xff]
  %v22 = vld [vmem:[%s0 + $0x8] sm:$0xff]
  %vm23 = vcmask 261120
  %v24 = vsel %vm23, %v21, 0.0
  %25 = vadd.xlane.f32.xlu0 %v24
  %v26 = vpop.xlane.xlu0 %25
  %v27 = vsel %vm23, %v22, 0.0
  %28 = vadd.xlane.f32.xlu0 %v27
  %v29 = vpop.xlane.xlu0 %28
  %v30 = vrcp.pop 32.0
  %v31 = vmul.f32 %v26, %v30
  %v32 = vmul.f32 %v29, %v30
  %v33 = vsub.f32 %v21, %v31
  %v34 = vsub.f32 %v22, %v32
  %v35 = vmul.f32 %v33, %v33
  %v36 = vmul.f32 %v34, %v34
  %v37 = vsel %vm23, %v35, 0.0
  %38 = vadd.xlane.f32.xlu0 %v37
  %v39 = vpop.xlane.xlu0 %38
  %v40 = vsel %vm23, %v36, 0.0
  %41 = vadd.xlane.f32.xlu0 %v40
  %v42 = vpop.xlane.xlu0 %41
  %v43 = vmul.f32 %v39, %v30
  %v44 = vmul.f32 %v42, %v30
  %v45 = vadd.f32 %v43, 1e-05
  %v46 = vadd.f32 %v44, 1e-05
  %v47 = vrsqrt.pop %v45
  %v48 = vrsqrt.pop %v46
  %v49 = vmul.f32 %v33, %v47
  %v50 = vmul.f32 %v34, %v48
  %v51 = vld [vmem:[%s1] sm:$0x1]
  %v53 = vlaneseq
  %v54 = vshrl.u32 %v53, 7
  %v55 = vsub.s32 0, %v54
  %v56 = vrot.slane %v51, %v55
  %v58 = vmul.f32 %v49, %v56
  %v59 = vmul.f32 %v50, %v56
  %v60 = vld [vmem:[%s2] sm:$0x1]
  %v62 = vlaneseq
  %v63 = vshrl.u32 %v62, 7
  %v64 = vsub.s32 0, %v63
  %v65 = vrot.slane %v60, %v64
  %v67 = vadd.f32 %v58, %v65
  %v68 = vadd.f32 %v59, %v65
  %v69 = vpack.c.bf16 %v68, %v67
  %v70 = vld [vmem:[%s3] sm:$0xf]
  %v71 = vld [vmem:[%s3 + $0x4] sm:$0xf]
  %v72 = vld [vmem:[%s3 + $0x8] sm:$0xf]
  %v73 = vld [vmem:[%s3 + $0xc] sm:$0xf]
  %v74 = vld [vmem:[%s4] sm:$0x1]
  %v76 = vlaneseq
  %v77 = vshrl.u32 %v76, 7
  %v78 = vsub.s32 0, %v77
  %v79 = vrot.slane %v74, %v78
  %v85 = vunpack.c.l.b16 %v70
  %v86 = vunpack.c.l.b16 %v71
  %v87 = vunpack.c.l.b16 %v72
  %v88 = vunpack.c.l.b16 %v73
  %v89 = vpack.c.b16 %v86, %v85
  %v90 = vpack.c.b16 %v88, %v87
  %v94 = vsel %vm23, %v69, 0
  %96 = vmatprep.subr.bf16.mxu0 0
  %97 = vmatpush1.bf16.msra.mxu0 0
  %98 = vmatprep.subr.bf16.mxu0 0
  %99 = vmatpush1.bf16.msra.mxu0 0
  %100 = vmatprep.subr.bf16.mxu0 0
  %101 = vmatpush1.bf16.msra.mxu0 0
  %102 = vmatprep.subr.bf16.mxu0 0
  %103 = vmatpush1.bf16.msra.mxu0 0
  %104 = vmatprep.subr.bf16.mxu0 0
  %105 = vmatpush1.bf16.msra.mxu0 0
  %106 = vmatprep.subr.bf16.mxu0 0
  %107 = vmatpush1.bf16.msra.mxu0 0
  %108 = vmatprep.subr.bf16.mxu0 0
  %109 = vmatpush1.bf16.msra.mxu0 %v90
  %110 = vmatprep.subr.bf16.mxu0 0
  %111 = vmatpush1.bf16.msra.mxu0 %v89
  %112 = vmatprep.subr.bf16.mxu0 0
  %113 = vmatpush2.bf16.msra.mxu0 0
  %114 = vmatprep.subr.bf16.mxu0 0
  %115 = vmatpush2.bf16.msra.mxu0 0
  %116 = vmatprep.subr.bf16.mxu0 0
  %117 = vmatpush2.bf16.msra.mxu0 0
  %118 = vmatprep.subr.bf16.mxu0 0
  %119 = vmatpush2.bf16.msra.mxu0 0
  %120 = vmatprep.subr.bf16.mxu0 0
  %121 = vmatpush2.bf16.msra.mxu0 0
  %122 = vmatprep.subr.bf16.mxu0 0
  %123 = vmatpush2.bf16.msra.mxu0 0
  %124 = vmatprep.subr.bf16.mxu0 0
  %125 = vmatpush2.bf16.msra.mxu0 0
  %126 = vmatprep.subr.bf16.mxu0 0
  %127 = vmatpush2.bf16.msra.mxu0 0
  %128 = vmatprep.mubr.bf16.mxu0 0
  %129 = vmatmul.mubr.bf16.gmra.mxu0 %v94
  %v130 = vpop.f32.mrf.mxu0
  %v131 = vadd.f32 %v79, %v130
  %v132 = vpop.f32.mrf.mxu0
  %v133 = vpop.f32.mrf.mxu0
  %v134 = vadd.f32 %v79, %v133
  %v135 = vpop.f32.mrf.mxu0
  %136 = vdwg.mxu0
  %v137 = vpack.c.bf16 %v134, %v131
  %v139 = vunpack.c.l.b16 %v137
  %v140 = vunpack.c.h.b16 %v137
  %v141 = vpack.c.b16 %v139, %v139
  %v142 = vpack.c.b16 %v140, %v140
  %vm145 = vcmask 257024
  %146 = vst.msk [vmem:[%s5] sm:$0xf] %vm145, %v141
  %147 = vst.msk [vmem:[%s5 + $0x4] sm:$0xf] %vm145, %v142
  // Predicated region
  $region22: #{gpt2_decoder_forward.22} parent=0 // pred_check
    _
  $region23: #{gpt2_decoder_forward.22} parent=0 // pred_check_branch
    %149 = sbr.rel (0) target = $region25
  $region24: #{gpt2_decoder_forward.22} parent=0 // pred_region
    _
  $region25: #{gpt2_decoder_forward.22} parent=0 // pred_fallthru
    _
  // Predicated region
  $region26: #{gpt2_decoder_forward.22} parent=0 // pred_check
    _
  $region27: #{gpt2_decoder_forward.22} parent=0 // pred_check_branch
    %151 = sbr.rel (0) target = $region29
  $region28: #{gpt2_decoder_forward.22} parent=0 // pred_region
    _
  $region29: #{gpt2_decoder_forward.22} parent=0 // pred_fallthru
    _

// kernel: gpt2_decoder_forward.20
$region0: #{gpt2_decoder_forward.20}
  #allocation0 [shape = 'u32[]', space=smem, size = 0x4, offset = 0x4, fixed_abs, tag = 'smem constant byte address 0x4 - core index']
  #allocation1 [shape = 'u32[144,128]{1,0:T(1,128)}', space=vmem, size = 0x12000, scoped, tag = 'internal scratch']
  %s0 = inlined_call_operand.vmem [shape: f32[2,3,4,8,8], index: 0, kind: input, shape index: {}, may-alias: {0,1,2}]
  %s1 = inlined_call_operand.vmem [shape: f32[2,3,4,8,8], index: 1, kind: input, shape index: {}, may-alias: {0,1,2}]
  %s2 = inlined_call_operand.vmem [shape: f32[2,3,4,8,8], index: 2, kind: input, shape index: {}, may-alias: {0,1,2}]
  %s3 = inlined_call_operand.vmem [shape: bf16[2,8,32], index: 3, kind: output, shape index: {0}]
  %s4 = inlined_call_operand.hbm [shape: f32[2,4,8,8], index: 4, kind: output, shape index: {1}]
  %5 = xla_tuple %s3, %s4
  %s6 = sld [smem:[#allocation0]]
  $region53: #{gpt2_decoder_forward.20} parent=0
    _
  %s8 = ssub.s32 1, %s6
  %s9 = scalar_select 0, %s8, %s6
  $region1: #{gpt2_decoder_forward.20} parent=0
    #allocation2 [shape = 'u8[32768]{0}', space=vmem, size = 0x8000, scoped, tag = 'output window, operand 1']
    #allocation3 [shape = 's32[2]{0}', space=sflag, size = 0x8, scoped, tag = 'scoped memory for gpt2_decoder_forward.20']
    %10 = vsyncpa [#allocation3], 0
    %s11 = scalar_lea.sflag [#allocation3], 1
    %12 = vsyncpa %s11, 0
    loop: start=0, step=1, limit=4
    $region2: #{gpt2_decoder_forward.20} parent=1 // loop_pre_header
      _
    $region3: #{gpt2_decoder_forward.20} parent=1 // loop_header
      %s14 = sphi 0, %s18
      %p15 = scmp.ge.s32.totalorder %s14, 4
      %s21 = sphi 0, %s33
      %s22 = sphi 0, %s29
      %s23 = sphi 0, %s21
      %s24 = sphi 0, %s22
      %s25 = sphi 0, %s23
      %s26 = sphi 0, %s24
      %s38 = sphi 0, %s40
      %s41 = sphi 0, %s38
      %s42 = sphi 0, %s41
      %s58 = sphi 0, %s42
      %s66 = sphi 0, %s68
      %s69 = sphi 0, %s66
      %s70 = sphi 0, %s69
      %s86 = sphi 0, %s70
      %s94 = sphi 0, %s96
      %s97 = sphi 0, %s94
      %s98 = sphi 0, %s97
      %s114 = sphi 0, %s98
      %s122 = sphi 0, %s124
      %s125 = sphi 0, %s122
      %s126 = sphi 0, %s125
      %s142 = sphi 0, %s126
      %s150 = sphi 0, %s152
      %s153 = sphi 0, %s150
      %s154 = sphi 0, %s153
      %s170 = sphi 0, %s154
    $region4: #{gpt2_decoder_forward.20} parent=1 // loop_header_branch
      %17 = sbr.rel (%p15) target = $region8
    $region5: #{gpt2_decoder_forward.20} parent=1 // loop_body
      %s19 = ssub.s32 %s14, 1
      %s20 = ssub.s32 %s14, 2
      %s27 = sadd.s32 1, %s22
      %p28 = scmp.ge.s32.totalorder %s27, 1
      %s29 = scalar_select %p28, 0, %s27
      %s30 = sadd.s32 1, %s21
      %s31 = scalar_select %p28, %s30, %s21
      %p32 = scmp.ge.s32.totalorder %s31, 2
      %s33 = scalar_select %p32, 0, %s31
      %s34 = ssub.s32 %s21, %s33
      %s35 = ssub.s32 %s22, %s29
      %s36 = sor.u32 %s34, %s35
      %p37 = scmp.eq.s32.totalorder %s36, 0
      %s39 = sadd.s32 %s38, 1
      %s40 = scalar_select %p37, %s38, %s39
      %p43 = pneg %p37
      %p44 = scmp.eq.s32.totalorder %s14, 1
      %p45 = por %p43, %p44
      %p46 = scmp.ne.s32.totalorder %s38, %s41
      %p47 = scmp.eq.s32.totalorder %s14, 0
      %p48 = por %p46, %p47
      %p49 = scmp.ne.s32.totalorder %s38, %s41
      %p50 = scmp.eq.s32.totalorder %s19, 1
      %p51 = por %p49, %p50
      %p52 = scmp.ne.s32.totalorder %s41, %s42
      %p53 = scmp.eq.s32.totalorder %s19, 0
      %p54 = por %p52, %p53
      %p55 = scmp.ne.s32.totalorder %s41, %s42
      %p56 = scmp.eq.s32.totalorder %s20, 1
      %p57 = por %p55, %p56
      %p59 = scmp.ne.s32.totalorder %s42, %s58
      %p60 = scmp.eq.s32.totalorder %s20, 0
      %p61 = por %p59, %p60
      %s62 = ssub.s32 %s21, %s33
      %s63 = ssub.s32 %s22, %s29
      %s64 = sor.u32 %s62, %s63
      %p65 = scmp.eq.s32.totalorder %s64, 0
      %s67 = sadd.s32 %s66, 1
      %s68 = scalar_select %p65, %s66, %s67
      %p71 = pneg %p65
      %p72 = scmp.eq.s32.totalorder %s14, 1
      %p73 = por %p71, %p72
      %p74 = scmp.ne.s32.totalorder %s66, %s69
      %p75 = scmp.eq.s32.totalorder %s14, 0
      %p76 = por %p74, %p75
      %p77 = scmp.ne.s32.totalorder %s66, %s69
      %p78 = scmp.eq.s32.totalorder %s19, 1
      %p79 = por %p77, %p78
      %p80 = scmp.ne.s32.totalorder %s69, %s70
      %p81 = scmp.eq.s32.totalorder %s19, 0
      %p82 = por %p80, %p81
      %p83 = scmp.ne.s32.totalorder %s69, %s70
      %p84 = scmp.eq.s32.totalorder %s20, 1
      %p85 = por %p83, %p84
      %p87 = scmp.ne.s32.totalorder %s70, %s86
      %p88 = scmp.eq.s32.totalorder %s20, 0
      %p89 = por %p87, %p88
      %s90 = ssub.s32 %s21, %s33
      %s91 = ssub.s32 %s22, %s29
      %s92 = sor.u32 %s90, %s91
      %p93 = scmp.eq.s32.totalorder %s92, 0
      %s95 = sadd.s32 %s94, 1
      %s96 = scalar_select %p93, %s94, %s95
      %p99 = pneg %p93
      %p100 = scmp.eq.s32.totalorder %s14, 1
      %p101 = por %p99, %p100
      %p102 = scmp.ne.s32.totalorder %s94, %s97
      %p103 = scmp.eq.s32.totalorder %s14, 0
      %p104 = por %p102, %p103
      %p105 = scmp.ne.s32.totalorder %s94, %s97
      %p106 = scmp.eq.s32.totalorder %s19, 1
      %p107 = por %p105, %p106
      %p108 = scmp.ne.s32.totalorder %s97, %s98
      %p109 = scmp.eq.s32.totalorder %s19, 0
      %p110 = por %p108, %p109
      %p111 = scmp.ne.s32.totalorder %s97, %s98
      %p112 = scmp.eq.s32.totalorder %s20, 1
      %p113 = por %p111, %p112
      %p115 = scmp.ne.s32.totalorder %s98, %s114
      %p116 = scmp.eq.s32.totalorder %s20, 0
      %p117 = por %p115, %p116
      %s118 = ssub.s32 %s21, %s33
      %s119 = ssub.s32 %s22, %s29
      %s120 = sor.u32 %s118, %s119
      %p121 = scmp.eq.s32.totalorder %s120, 0
      %s123 = sadd.s32 %s122, 1
      %s124 = scalar_select %p121, %s122, %s123
      %p127 = pneg %p121
      %p128 = scmp.eq.s32.totalorder %s14, 1
      %p129 = por %p127, %p128
      %p130 = scmp.ne.s32.totalorder %s122, %s125
      %p131 = scmp.eq.s32.totalorder %s14, 0
      %p132 = por %p130, %p131
      %p133 = scmp.ne.s32.totalorder %s122, %s125
      %p134 = scmp.eq.s32.totalorder %s19, 1
      %p135 = por %p133, %p134
      %p136 = scmp.ne.s32.totalorder %s125, %s126
      %p137 = scmp.eq.s32.totalorder %s19, 0
      %p138 = por %p136, %p137
      %p139 = scmp.ne.s32.totalorder %s125, %s126
      %p140 = scmp.eq.s32.totalorder %s20, 1
      %p141 = por %p139, %p140
      %p143 = scmp.ne.s32.totalorder %s126, %s142
      %p144 = scmp.eq.s32.totalorder %s20, 0
      %p145 = por %p143, %p144
      %s146 = ssub.s32 %s21, %s33
      %s147 = ssub.s32 %s22, %s29
      %s148 = sor.u32 %s146, %s147
      %p149 = scmp.eq.s32.totalorder %s148, 0
      %s151 = sadd.s32 %s150, 1
      %s152 = scalar_select %p149, %s150, %s151
      %p155 = pneg %p149
      %p156 = scmp.eq.s32.totalorder %s14, 1
      %p157 = por %p155, %p156
      %p158 = scmp.ne.s32.totalorder %s150, %s153
      %p159 = scmp.eq.s32.totalorder %s14, 0
      %p160 = por %p158, %p159
      %p161 = scmp.ne.s32.totalorder %s150, %s153
      %p162 = scmp.eq.s32.totalorder %s19, 1
      %p163 = por %p161, %p162
      %p164 = scmp.ne.s32.totalorder %s153, %s154
      %p165 = scmp.eq.s32.totalorder %s19, 0
      %p166 = por %p164, %p165
      %p167 = scmp.ne.s32.totalorder %s153, %s154
      %p168 = scmp.eq.s32.totalorder %s20, 1
      %p169 = por %p167, %p168
      %p171 = scmp.ne.s32.totalorder %s154, %s170
      %p172 = scmp.eq.s32.totalorder %s20, 0
      %p173 = por %p171, %p172
      %p174 = scmp.le.s32.totalorder 1, %s14
      %p175 = scmp.lt.s32.totalorder %s14, 3
      %p176 = pnand %p174, %p175
      %p177 = pneg %p176
      // Predicated region
      $region9: #{gpt2_decoder_forward.20} parent=5 // pred_check
        _
      $region10: #{gpt2_decoder_forward.20} parent=5 // pred_check_branch
        %179 = sbr.rel (%p176) target = $region12
      $region11: #{gpt2_decoder_forward.20} parent=5 // pred_region
        %s180 = ssub.s32 %s14, 1
      $region12: #{gpt2_decoder_forward.20} parent=5 // pred_fallthru
        _
      %p181 = scmp.lt.s32.totalorder %s14, 2
      // Predicated region
      $region13: #{gpt2_decoder_forward.20} parent=5 // pred_check
        %p182 = pneg %p181
      $region14: #{gpt2_decoder_forward.20} parent=5 // pred_check_branch
        %184 = sbr.rel (%p182) target = $region16
      $region15: #{gpt2_decoder_forward.20} parent=5 // pred_region
        // Predicated region
        $region17: #{gpt2_decoder_forward.20} parent=15 // pred_check
          %p185 = pneg %p48
        $region18: #{gpt2_decoder_forward.20} parent=15 // pred_check_branch
          %187 = sbr.rel (%p185) target = $region20
        $region19: #{gpt2_decoder_forward.20} parent=15 // pred_region
          %s188 = smul.u32 4, %s22
          %p189 = scmp.lt.s32.totalorder %s21, 1
          %s190 = scalar_select %p189, %s21, 1
          %p191 = scmp.lt.s32.totalorder %s188, 3
          %s192 = scalar_select %p191, %s188, 3
          %s193 = smul.addr %s190, 12
          %s194 = sadd.s32 %s192, %s193
          %s195 = smul.addr %s194, 8
          %s196 = scalar_lea.vmem %s0, %s195
          %s197 = smul.u32 4, %s22
        $region20: #{gpt2_decoder_forward.20} parent=15 // pred_fallthru
          _
        // Predicated region
        $region21: #{gpt2_decoder_forward.20} parent=15 // pred_check
          %p198 = pneg %p76
        $region22: #{gpt2_decoder_forward.20} parent=15 // pred_check_branch
          %200 = sbr.rel (%p198) target = $region24
        $region23: #{gpt2_decoder_forward.20} parent=15 // pred_region
          %s201 = smul.u32 4, %s22
          %p202 = scmp.lt.s32.totalorder %s21, 1
          %s203 = scalar_select %p202, %s21, 1
          %p204 = scmp.lt.s32.totalorder %s201, 3
          %s205 = scalar_select %p204, %s201, 3
          %s206 = sadd.s32 %s205, 4
          %s207 = smul.addr %s203, 12
          %s208 = sadd.s32 %s206, %s207
          %s209 = smul.addr %s208, 8
          %s210 = scalar_lea.vmem %s1, %s209
          %s211 = smul.u32 4, %s22
        $region24: #{gpt2_decoder_forward.20} parent=15 // pred_fallthru
          _
        // Predicated region
        $region25: #{gpt2_decoder_forward.20} parent=15 // pred_check
          %p212 = pneg %p104
        $region26: #{gpt2_decoder_forward.20} parent=15 // pred_check_branch
          %214 = sbr.rel (%p212) target = $region28
        $region27: #{gpt2_decoder_forward.20} parent=15 // pred_region
          %s215 = smul.u32 4, %s22
          %p216 = scmp.lt.s32.totalorder %s21, 1
          %s217 = scalar_select %p216, %s21, 1
          %p218 = scmp.lt.s32.totalorder %s215, 3
          %s219 = scalar_select %p218, %s215, 3
          %s220 = sadd.s32 %s219, 8
          %s221 = smul.addr %s217, 12
          %s222 = sadd.s32 %s220, %s221
          %s223 = smul.addr %s222, 8
          %s224 = scalar_lea.vmem %s2, %s223
          %s225 = smul.u32 4, %s22
        $region28: #{gpt2_decoder_forward.20} parent=15 // pred_fallthru
          _
      $region16: #{gpt2_decoder_forward.20} parent=5 // pred_fallthru
        _
      %p226 = scmp.le.s32.totalorder 1, %s14
      %p227 = scmp.lt.s32.totalorder %s14, 3
      %p228 = pnand %p226, %p227
      %p229 = pneg %p228
      // Predicated region
      $region29: #{gpt2_decoder_forward.20} parent=5 // pred_check
        _
      $region30: #{gpt2_decoder_forward.20} parent=5 // pred_check_branch
        %231 = sbr.rel (%p228) target = $region32
      $region31: #{gpt2_decoder_forward.20} parent=5 // pred_region
        %s232 = ssub.s32 %s14, 1
        %s233 = smul.u32 4, %s24
        %p234 = scmp.lt.s32.totalorder %s23, 1
        %s235 = scalar_select %p234, %s23, 1
        %p236 = scmp.lt.s32.totalorder %s233, 3
        %s237 = scalar_select %p236, %s233, 3
        %s238 = smul.addr %s235, 12
        %s239 = sadd.s32 %s237, %s238
        %s240 = smul.addr %s239, 8
        %s241 = scalar_lea.vmem %s0, %s240
        %p242 = pneg %p54
        %p243 = pneg %p51
        %s244 = smul.u32 4, %s24
        %p245 = scmp.lt.s32.totalorder %s23, 1
        %s246 = scalar_select %p245, %s23, 1
        %p247 = scmp.lt.s32.totalorder %s244, 3
        %s248 = scalar_select %p247, %s244, 3
        %s249 = sadd.s32 %s248, 4
        %s250 = smul.addr %s246, 12
        %s251 = sadd.s32 %s249, %s250
        %s252 = smul.addr %s251, 8
        %s253 = scalar_lea.vmem %s1, %s252
        %p254 = pneg %p82
        %p255 = pneg %p79
        %s256 = smul.u32 4, %s24
        %p257 = scmp.lt.s32.totalorder %s23, 1
        %s258 = scalar_select %p257, %s23, 1
        %p259 = scmp.lt.s32.totalorder %s256, 3
        %s260 = scalar_select %p259, %s256, 3
        %s261 = sadd.s32 %s260, 8
        %s262 = smul.addr %s258, 12
        %s263 = sadd.s32 %s261, %s262
        %s264 = smul.addr %s263, 8
        %s265 = scalar_lea.vmem %s2, %s264
        %p266 = pneg %p110
        %p267 = pneg %p107
        %p268 = pneg %p138
        %p269 = pneg %p135
        %p270 = scmp.lt.s32.totalorder %s23, 1
        %s271 = scalar_select %p270, %s23, 1
        %p272 = scmp.lt.s32.totalorder %s24, 0
        %s273 = scalar_select %p272, %s24, 0
        %s274 = sadd.s32 %s273, %s271
        %s275 = smul.addr %s274, 4
        %s276 = scalar_lea.vmem %s3, %s275
        %p277 = pneg %p166
        %p278 = pneg %p163
        %s279 = sand.u32 %s153, 1
        %s280 = scalar_lea.sflag [#allocation3], %s279
        %s281 = sand.u32 %s153, 1
        %s282 = smul.addr %s281, 32
        %s283 = scalar_lea.vmem [#allocation2], %s282
        %s284 = smul.u32 4, %s24
        %p285 = scmp.lt.s32.totalorder %s23, 1
        %s286 = scalar_select %p285, %s23, 1
        %p287 = scmp.lt.s32.totalorder %s284, 3
        %s288 = scalar_select %p287, %s284, 3
        %s289 = smul.addr %s286, 12
        %s290 = sadd.s32 %s288, %s289
        %s291 = smul.addr %s290, 8
        %s292 = scalar_lea.vmem %s0, %s291
        %s293 = smul.u32 4, %s24
        %s294 = smul.u32 4, %s24
        %p295 = scmp.lt.s32.totalorder %s23, 1
        %s296 = scalar_select %p295, %s23, 1
        %p297 = scmp.lt.s32.totalorder %s294, 3
        %s298 = scalar_select %p297, %s294, 3
        %s299 = sadd.s32 %s298, 4
        %s300 = smul.addr %s296, 12
        %s301 = sadd.s32 %s299, %s300
        %s302 = smul.addr %s301, 8
        %s303 = scalar_lea.vmem %s1, %s302
        %s304 = smul.u32 4, %s24
        %s305 = smul.u32 4, %s24
        %p306 = scmp.lt.s32.totalorder %s23, 1
        %s307 = scalar_select %p306, %s23, 1
        %p308 = scmp.lt.s32.totalorder %s305, 3
        %s309 = scalar_select %p308, %s305, 3
        %s310 = sadd.s32 %s309, 8
        %s311 = smul.addr %s307, 12
        %s312 = sadd.s32 %s310, %s311
        %s313 = smul.addr %s312, 8
        %s314 = scalar_lea.vmem %s2, %s313
        %s315 = smul.u32 4, %s24
        %p316 = scmp.lt.s32.totalorder %s23, 1
        %s317 = scalar_select %p316, %s23, 1
        %p318 = scmp.lt.s32.totalorder %s24, 0
        %s319 = scalar_select %p318, %s24, 0
        %s320 = sadd.s32 %s319, %s317
        %s321 = smul.addr %s320, 4
        %s322 = scalar_lea.vmem %s3, %s321
        %s323 = smul.u32 4, %s24
        %v325 = vlaneseq
        %v326 = vshrl.u32 %v325, 7
        %v327 = vlaneseq
        %v328 = vand.u32 %v327, 127
        %vm329 = vcmp.ge.s32.totalorder %v326, %v328
        %v330 = vld [vmem:[%s292] sm:$0xff]
        %v331 = vpack.c.bf16 %v330, %v330
        %v332 = vld [vmem:[%s303] sm:$0xff]
        %v333 = vpack.c.bf16 %v332, %v332
        %v334 = vld [vmem:[%s314] sm:$0xff]
        %v335 = vpack.c.bf16 %v334, %v334
        %vm336 = vcmask 64512
        %v338 = vsel %vm336, %v331, 0
        %v341 = vsel %vm336, %v333, 0
        %343 = vmatprep.subr.bf16.mxu0 0
        %344 = vmatpush1.bf16.xpose.msra.mxu0 0
        %345 = vmatprep.subr.bf16.mxu0 0
        %346 = vmatpush1.bf16.xpose.msra.mxu0 0
        %347 = vmatprep.subr.bf16.mxu0 0
        %348 = vmatpush1.bf16.xpose.msra.mxu0 0
        %349 = vmatprep.subr.bf16.mxu0 0
        %350 = vmatpush1.bf16.xpose.msra.mxu0 0
        %351 = vmatprep.subr.bf16.mxu0 0
        %352 = vmatpush1.bf16.xpose.msra.mxu0 0
        %353 = vmatprep.subr.bf16.mxu0 0
        %354 = vmatpush1.bf16.xpose.msra.mxu0 0
        %355 = vmatprep.subr.bf16.mxu0 0
        %356 = vmatpush1.bf16.xpose.msra.mxu0 0
        %357 = vmatprep.subr.bf16.mxu0 0
        %358 = vmatpush1.bf16.xpose.msra.mxu0 %v341
        %359 = vmatprep.subr.bf16.mxu0 0
        %360 = vmatpush2.bf16.xpose.msra.mxu0 0
        %361 = vmatprep.subr.bf16.mxu0 0
        %362 = vmatpush2.bf16.xpose.msra.mxu0 0
        %363 = vmatprep.subr.bf16.mxu0 0
        %364 = vmatpush2.bf16.xpose.msra.mxu0 0
        %365 = vmatprep.subr.bf16.mxu0 0
        %366 = vmatpush2.bf16.xpose.msra.mxu0 0
        %367 = vmatprep.subr.bf16.mxu0 0
        %368 = vmatpush2.bf16.xpose.msra.mxu0 0
        %369 = vmatprep.subr.bf16.mxu0 0
        %370 = vmatpush2.bf16.xpose.msra.mxu0 0
        %371 = vmatprep.subr.bf16.mxu0 0
        %372 = vmatpush2.bf16.xpose.msra.mxu0 0
        %373 = vmatprep.subr.bf16.mxu0 0
        %374 = vmatpush2.bf16.xpose.msra.mxu0 0
        %375 = vmatprep.mubr.bf16.mxu0 0
        %376 = vmatmul.mubr.bf16.gmra.mxu0 %v338
        %v377 = vpop.f32.mrf.mxu0
        %v378 = vadd.f32 0.0, %v377
        %v379 = vpop.f32.mrf.mxu0
        %v380 = vpop.f32.mrf.mxu0
        %v381 = vpop.f32.mrf.mxu0
        %382 = vdwg.mxu0
        %v383 = vmul.f32 %v378, 0.35355338
        %v384 = vsel %vm329, %v383, -1e+30
        %v385 = vsel %vm336, %v384, -inf
        %386 = vmax.xlane.f32.xlu0 %v385
        %v387 = vpop.xlane.xlu0 %386
        %v388 = vsub.f32 %v384, %v387
        %v389 = vmul.f32 %v388, 1.442695
        %v390 = vpow.pop %v389
        %v391 = vsel %vm336, %v390, 0.0
        %392 = vadd.xlane.f32.xlu0 %v391
        %v393 = vpop.xlane.xlu0 %392
        %v394 = vrcp.pop %v393
        %v395 = vmul.f32 %v390, %v394
        %396 = vst.msk [vmem:[%s283] sm:$0xff] %vm336, %v395
        %v397 = vpack.c.bf16 %v395, %v395
        %v399 = vsel %vm336, %v397, 0
        %vm401 = vcmask 1043456
        %v403 = vsel %vm401, %v335, 0
        %405 = vmatprep.subr.bf16.mxu0 0
        %406 = vmatpush1.bf16.msra.mxu0 0
        %407 = vmatprep.subr.bf16.mxu0 0
        %408 = vmatpush1.bf16.msra.mxu0 0
        %409 = vmatprep.subr.bf16.mxu0 0
        %410 = vmatpush1.bf16.msra.mxu0 0
        %411 = vmatprep.subr.bf16.mxu0 0
        %412 = vmatpush1.bf16.msra.mxu0 0
        %413 = vmatprep.subr.bf16.mxu0 0
        %414 = vmatpush1.bf16.msra.mxu0 0
        %415 = vmatprep.subr.bf16.mxu0 0
        %416 = vmatpush1.bf16.msra.mxu0 0
        %417 = vmatprep.subr.bf16.mxu0 0
        %418 = vmatpush1.bf16.msra.mxu0 0
        %419 = vmatprep.subr.bf16.mxu0 0
        %420 = vmatpush1.bf16.msra.mxu0 %v403
        %421 = vmatprep.subr.bf16.mxu0 0
        %422 = vmatpush2.bf16.msra.mxu0 0
        %423 = vmatprep.subr.bf16.mxu0 0
        %424 = vmatpush2.bf16.msra.mxu0 0
        %425 = vmatprep.subr.bf16.mxu0 0
        %426 = vmatpush2.bf16.msra.mxu0 0
        %427 = vmatprep.subr.bf16.mxu0 0
        %428 = vmatpush2.bf16.msra.mxu0 0
        %429 = vmatprep.subr.bf16.mxu0 0
        %430 = vmatpush2.bf16.msra.mxu0 0
        %431 = vmatprep.subr.bf16.mxu0 0
        %432 = vmatpush2.bf16.msra.mxu0 0
        %433 = vmatprep.subr.bf16.mxu0 0
        %434 = vmatpush2.bf16.msra.mxu0 0
        %435 = vmatprep.subr.bf16.mxu0 0
        %436 = vmatpush2.bf16.msra.mxu0 0
        %437 = vmatprep.mubr.bf16.mxu0 0
        %438 = vmatmul.mubr.bf16.gmra.mxu0 %v399
        %v439 = vpop.f32.mrf.mxu0
        %v440 = vadd.f32 0.0, %v439
        %v441 = vpop.f32.mrf.mxu0
        %v442 = vpop.f32.mrf.mxu0
        %v443 = vpop.f32.mrf.mxu0
        %444 = vdwg.mxu0
        %s445 = scalar_lea.vmem %s292, 8
        %v446 = vld [vmem:[%s445] sm:$0xff]
        %v447 = vpack.c.bf16 %v446, %v446
        %s448 = scalar_lea.vmem %s303, 8
        %v449 = vld [vmem:[%s448] sm:$0xff]
        %v450 = vpack.c.bf16 %v449, %v449
        %s451 = scalar_lea.vmem %s314, 8
        %v452 = vld [vmem:[%s451] sm:$0xff]
        %v453 = vpack.c.bf16 %v452, %v452
        %v455 = vsel %vm336, %v447, 0
        %v458 = vsel %vm336, %v450, 0
        %460 = vmatprep.subr.bf16.mxu0 0
        %461 = vmatpush1.bf16.xpose.msra.mxu0 0
        %462 = vmatprep.subr.bf16.mxu0 0
        %463 = vmatpush1.bf16.xpose.msra.mxu0 0
        %464 = vmatprep.subr.bf16.mxu0 0
        %465 = vmatpush1.bf16.xpose.msra.mxu0 0
        %466 = vmatprep.subr.bf16.mxu0 0
        %467 = vmatpush1.bf16.xpose.msra.mxu0 0
        %468 = vmatprep.subr.bf16.mxu0 0
        %469 = vmatpush1.bf16.xpose.msra.mxu0 0
        %470 = vmatprep.subr.bf16.mxu0 0
        %471 = vmatpush1.bf16.xpose.msra.mxu0 0
        %472 = vmatprep.subr.bf16.mxu0 0
        %473 = vmatpush1.bf16.xpose.msra.mxu0 0
        %474 = vmatprep.subr.bf16.mxu0 0
        %475 = vmatpush1.bf16.xpose.msra.mxu0 %v458
        %476 = vmatprep.subr.bf16.mxu0 0
        %477 = vmatpush2.bf16.xpose.msra.mxu0 0
        %478 = vmatprep.subr.bf16.mxu0 0
        %479 = vmatpush2.bf16.xpose.msra.mxu0 0
        %480 = vmatprep.subr.bf16.mxu0 0
        %481 = vmatpush2.bf16.xpose.msra.mxu0 0
        %482 = vmatprep.subr.bf16.mxu0 0
        %483 = vmatpush2.bf16.xpose.msra.mxu0 0
        %484 = vmatprep.subr.bf16.mxu0 0
        %485 = vmatpush2.bf16.xpose.msra.mxu0 0
        %486 = vmatprep.subr.bf16.mxu0 0
        %487 = vmatpush2.bf16.xpose.msra.mxu0 0
        %488 = vmatprep.subr.bf16.mxu0 0
        %489 = vmatpush2.bf16.xpose.msra.mxu0 0
        %490 = vmatprep.subr.bf16.mxu0 0
        %491 = vmatpush2.bf16.xpose.msra.mxu0 0
        %492 = vmatprep.mubr.bf16.mxu0 0
        %493 = vmatmul.mubr.bf16.gmra.mxu0 %v455
        %v494 = vpop.f32.mrf.mxu0
        %v495 = vadd.f32 0.0, %v494
        %v496 = vpop.f32.mrf.mxu0
        %v497 = vpop.f32.mrf.mxu0
        %v498 = vpop.f32.mrf.mxu0
        %499 = vdwg.mxu0
        %v500 = vmul.f32 %v495, 0.35355338
        %v501 = vsel %vm329, %v500, -1e+30
        %v502 = vsel %vm336, %v501, -inf
        %503 = vmax.xlane.f32.xlu0 %v502
        %v504 = vpop.xlane.xlu0 %503
        %v505 = vsub.f32 %v501, %v504
        %v506 = vmul.f32 %v505, 1.442695
        %v507 = vpow.pop %v506
        %v508 = vsel %vm336, %v507, 0.0
        %509 = vadd.xlane.f32.xlu0 %v508
        %v510 = vpop.xlane.xlu0 %509
        %v511 = vrcp.pop %v510
        %v512 = vmul.f32 %v507, %v511
        %s513 = scalar_lea.vmem %s283, 8 [#allocation2]
        %514 = vst.msk [vmem:[%s513] sm:$0xff] %vm336, %v512
        %v515 = vpack.c.bf16 %v512, %v512
        %v517 = vsel %vm336, %v515, 0
        %v520 = vsel %vm401, %v453, 0
        %522 = vmatprep.subr.bf16.mxu0 0
        %523 = vmatpush1.bf16.msra.mxu0 0
        %524 = vmatprep.subr.bf16.mxu0 0
        %525 = vmatpush1.bf16.msra.mxu0 0
        %526 = vmatprep.subr.bf16.mxu0 0
        %527 = vmatpush1.bf16.msra.mxu0 0
        %528 = vmatprep.subr.bf16.mxu0 0
        %529 = vmatpush1.bf16.msra.mxu0 0
        %530 = vmatprep.subr.bf16.mxu0 0
        %531 = vmatpush1.bf16.msra.mxu0 0
        %532 = vmatprep.subr.bf16.mxu0 0
        %533 = vmatpush1.bf16.msra.mxu0 0
        %534 = vmatprep.subr.bf16.mxu0 0
        %535 = vmatpush1.bf16.msra.mxu0 0
        %536 = vmatprep.subr.bf16.mxu0 0
        %537 = vmatpush1.bf16.msra.mxu0 %v520
        %538 = vmatprep.subr.bf16.mxu0 0
        %539 = vmatpush2.bf16.msra.mxu0 0
        %540 = vmatprep.subr.bf16.mxu0 0
        %541 = vmatpush2.bf16.msra.mxu0 0
        %542 = vmatprep.subr.bf16.mxu0 0
        %543 = vmatpush2.bf16.msra.mxu0 0
        %544 = vmatprep.subr.bf16.mxu0 0
        %545 = vmatpush2.bf16.msra.mxu0 0
        %546 = vmatprep.subr.bf16.mxu0 0
        %547 = vmatpush2.bf16.msra.mxu0 0
        %548 = vmatprep.subr.bf16.mxu0 0
        %549 = vmatpush2.bf16.msra.mxu0 0
        %550 = vmatprep.subr.bf16.mxu0 0
        %551 = vmatpush2.bf16.msra.mxu0 0
        %552 = vmatprep.subr.bf16.mxu0 0
        %553 = vmatpush2.bf16.msra.mxu0 0
        %554 = vmatprep.mubr.bf16.mxu0 0
        %555 = vmatmul.mubr.bf16.gmra.mxu0 %v517
        %v556 = vpop.f32.mrf.mxu0
        %v557 = vadd.f32 0.0, %v556
        %v558 = vpop.f32.mrf.mxu0
        %v559 = vpop.f32.mrf.mxu0
        %v560 = vpop.f32.mrf.mxu0
        %561 = vdwg.mxu0
        %s562 = scalar_lea.vmem %s292, 16
        %v563 = vld [vmem:[%s562] sm:$0xff]
        %v564 = vpack.c.bf16 %v563, %v563
        %s565 = scalar_lea.vmem %s303, 16
        %v566 = vld [vmem:[%s565] sm:$0xff]
        %v567 = vpack.c.bf16 %v566, %v566
        %s568 = scalar_lea.vmem %s314, 16
        %v569 = vld [vmem:[%s568] sm:$0xff]
        %v570 = vpack.c.bf16 %v569, %v569
        %v572 = vsel %vm336, %v564, 0
        %v575 = vsel %vm336, %v567, 0
        %577 = vmatprep.subr.bf16.mxu0 0
        %578 = vmatpush1.bf16.xpose.msra.mxu0 0
        %579 = vmatprep.subr.bf16.mxu0 0
        %580 = vmatpush1.bf16.xpose.msra.mxu0 0
        %581 = vmatprep.subr.bf16.mxu0 0
        %582 = vmatpush1.bf16.xpose.msra.mxu0 0
        %583 = vmatprep.subr.bf16.mxu0 0
        %584 = vmatpush1.bf16.xpose.msra.mxu0 0
        %585 = vmatprep.subr.bf16.mxu0 0
        %586 = vmatpush1.bf16.xpose.msra.mxu0 0
        %587 = vmatprep.subr.bf16.mxu0 0
        %588 = vmatpush1.bf16.xpose.msra.mxu0 0
        %589 = vmatprep.subr.bf16.mxu0 0
        %590 = vmatpush1.bf16.xpose.msra.mxu0 0
        %591 = vmatprep.subr.bf16.mxu0 0
        %592 = vmatpush1.bf16.xpose.msra.mxu0 %v575
        %593 = vmatprep.subr.bf16.mxu0 0
        %594 = vmatpush2.bf16.xpose.msra.mxu0 0
        %595 = vmatprep.subr.bf16.mxu0 0
        %596 = vmatpush2.bf16.xpose.msra.mxu0 0
        %597 = vmatprep.subr.bf16.mxu0 0
        %598 = vmatpush2.bf16.xpose.msra.mxu0 0
        %599 = vmatprep.subr.bf16.mxu0 0
        %600 = vmatpush2.bf16.xpose.msra.mxu0 0
        %601 = vmatprep.subr.bf16.mxu0 0
        %602 = vmatpush2.bf16.xpose.msra.mxu0 0
        %603 = vmatprep.subr.bf16.mxu0 0
        %604 = vmatpush2.bf16.xpose.msra.mxu0 0
        %605 = vmatprep.subr.bf16.mxu0 0
        %606 = vmatpush2.bf16.xpose.msra.mxu0 0
        %607 = vmatprep.subr.bf16.mxu0 0
        %608 = vmatpush2.bf16.xpose.msra.mxu0 0
        %609 = vmatprep.mubr.bf16.mxu0 0
        %610 = vmatmul.mubr.bf16.gmra.mxu0 %v572
        %v611 = vpop.f32.mrf.mxu0
        %v612 = vadd.f32 0.0, %v611
        %v613 = vpop.f32.mrf.mxu0
        %v614 = vpop.f32.mrf.mxu0
        %v615 = vpop.f32.mrf.mxu0
        %616 = vdwg.mxu0
        %v617 = vmul.f32 %v612, 0.35355338
        %v618 = vsel %vm329, %v617, -1e+30
        %v619 = vsel %vm336, %v618, -inf
        %620 = vmax.xlane.f32.xlu0 %v619
        %v621 = vpop.xlane.xlu0 %620
        %v622 = vsub.f32 %v618, %v621
        %v623 = vmul.f32 %v622, 1.442695
        %v624 = vpow.pop %v623
        %v625 = vsel %vm336, %v624, 0.0
        %626 = vadd.xlane.f32.xlu0 %v625
        %v627 = vpop.xlane.xlu0 %626
        %v628 = vrcp.pop %v627
        %v629 = vmul.f32 %v624, %v628
        %s630 = scalar_lea.vmem %s283, 16 [#allocation2]
        %631 = vst.msk [vmem:[%s630] sm:$0xff] %vm336, %v629
        %v632 = vpack.c.bf16 %v629, %v629
        %v634 = vsel %vm336, %v632, 0
        %v637 = vsel %vm401, %v570, 0
        %639 = vmatprep.subr.bf16.mxu0 0
        %640 = vmatpush1.bf16.msra.mxu0 0
        %641 = vmatprep.subr.bf16.mxu0 0
        %642 = vmatpush1.bf16.msra.mxu0 0
        %643 = vmatprep.subr.bf16.mxu0 0
        %644 = vmatpush1.bf16.msra.mxu0 0
        %645 = vmatprep.subr.bf16.mxu0 0
        %646 = vmatpush1.bf16.msra.mxu0 0
        %647 = vmatprep.subr.bf16.mxu0 0
        %648 = vmatpush1.bf16.msra.mxu0 0
        %649 = vmatprep.subr.bf16.mxu0 0
        %650 = vmatpush1.bf16.msra.mxu0 0
        %651 = vmatprep.subr.bf16.mxu0 0
        %652 = vmatpush1.bf16.msra.mxu0 0
        %653 = vmatprep.subr.bf16.mxu0 0
        %654 = vmatpush1.bf16.msra.mxu0 %v637
        %655 = vmatprep.subr.bf16.mxu0 0
        %656 = vmatpush2.bf16.msra.mxu0 0
        %657 = vmatprep.subr.bf16.mxu0 0
        %658 = vmatpush2.bf16.msra.mxu0 0
        %659 = vmatprep.subr.bf16.mxu0 0
        %660 = vmatpush2.bf16.msra.mxu0 0
        %661 = vmatprep.subr.bf16.mxu0 0
        %662 = vmatpush2.bf16.msra.mxu0 0
        %663 = vmatprep.subr.bf16.mxu0 0
        %664 = vmatpush2.bf16.msra.mxu0 0
        %665 = vmatprep.subr.bf16.mxu0 0
        %666 = vmatpush2.bf16.msra.mxu0 0
        %667 = vmatprep.subr.bf16.mxu0 0
        %668 = vmatpush2.bf16.msra.mxu0 0
        %669 = vmatprep.subr.bf16.mxu0 0
        %670 = vmatpush2.bf16.msra.mxu0 0
        %671 = vmatprep.mubr.bf16.mxu0 0
        %672 = vmatmul.mubr.bf16.gmra.mxu0 %v634
        %v673 = vpop.f32.mrf.mxu0
        %v674 = vadd.f32 0.0, %v673
        %v675 = vpop.f32.mrf.mxu0
        %v676 = vpop.f32.mrf.mxu0
        %v677 = vpop.f32.mrf.mxu0
        %678 = vdwg.mxu0
        %s679 = scalar_lea.vmem %s292, 24
        %v680 = vld [vmem:[%s679] sm:$0xff]
        %v681 = vpack.c.bf16 %v680, %v680
        %s682 = scalar_lea.vmem %s303, 24
        %v683 = vld [vmem:[%s682] sm:$0xff]
        %v684 = vpack.c.bf16 %v683, %v683
        %s685 = scalar_lea.vmem %s314, 24
        %v686 = vld [vmem:[%s685] sm:$0xff]
        %v687 = vpack.c.bf16 %v686, %v686
        %v689 = vsel %vm336, %v681, 0
        %v692 = vsel %vm336, %v684, 0
        %694 = vmatprep.subr.bf16.mxu0 0
        %695 = vmatpush1.bf16.xpose.msra.mxu0 0
        %696 = vmatprep.subr.bf16.mxu0 0
        %697 = vmatpush1.bf16.xpose.msra.mxu0 0
        %698 = vmatprep.subr.bf16.mxu0 0
        %699 = vmatpush1.bf16.xpose.msra.mxu0 0
        %700 = vmatprep.subr.bf16.mxu0 0
        %701 = vmatpush1.bf16.xpose.msra.mxu0 0
        %702 = vmatprep.subr.bf16.mxu0 0
        %703 = vmatpush1.bf16.xpose.msra.mxu0 0
        %704 = vmatprep.subr.bf16.mxu0 0
        %705 = vmatpush1.bf16.xpose.msra.mxu0 0
        %706 = vmatprep.subr.bf16.mxu0 0
        %707 = vmatpush1.bf16.xpose.msra.mxu0 0
        %708 = vmatprep.subr.bf16.mxu0 0
        %709 = vmatpush1.bf16.xpose.msra.mxu0 %v692
        %710 = vmatprep.subr.bf16.mxu0 0
        %711 = vmatpush2.bf16.xpose.msra.mxu0 0
        %712 = vmatprep.subr.bf16.mxu0 0
        %713 = vmatpush2.bf16.xpose.msra.mxu0 0
        %714 = vmatprep.subr.bf16.mxu0 0
        %715 = vmatpush2.bf16.xpose.msra.mxu0 0
        %716 = vmatprep.subr.bf16.mxu0 0
        %717 = vmatpush2.bf16.xpose.msra.mxu0 0
        %718 = vmatprep.subr.bf16.mxu0 0
        %719 = vmatpush2.bf16.xpose.msra.mxu0 0
        %720 = vmatprep.subr.bf16.mxu0 0
        %721 = vmatpush2.bf16.xpose.msra.mxu0 0
        %722 = vmatprep.subr.bf16.mxu0 0
        %723 = vmatpush2.bf16.xpose.msra.mxu0 0
        %724 = vmatprep.subr.bf16.mxu0 0
        %725 = vmatpush2.bf16.xpose.msra.mxu0 0
        %726 = vmatprep.mubr.bf16.mxu0 0
        %727 = vmatmul.mubr.bf16.gmra.mxu0 %v689
        %v728 = vpop.f32.mrf.mxu0
        %v729 = vadd.f32 0.0, %v728
        %v730 = vpop.f32.mrf.mxu0
        %v731 = vpop.f32.mrf.mxu0
        %v732 = vpop.f32.mrf.mxu0
        %733 = vdwg.mxu0
        %v734 = vmul.f32 %v729, 0.35355338
        %v735 = vsel %vm329, %v734, -1e+30
        %v736 = vsel %vm336, %v735, -inf
        %737 = vmax.xlane.f32.xlu0 %v736
        %v738 = vpop.xlane.xlu0 %737
        %v739 = vsub.f32 %v735, %v738
        %v740 = vmul.f32 %v739, 1.442695
        %v741 = vpow.pop %v740
        %v742 = vsel %vm336, %v741, 0.0
        %743 = vadd.xlane.f32.xlu0 %v742
        %v744 = vpop.xlane.xlu0 %743
        %v745 = vrcp.pop %v744
        %v746 = vmul.f32 %v741, %v745
        %s747 = scalar_lea.vmem %s283, 24 [#allocation2]
        %748 = vst.msk [vmem:[%s747] sm:$0xff] %vm336, %v746
        %v749 = vpack.c.bf16 %v746, %v746
        %v751 = vsel %vm336, %v749, 0
        %v754 = vsel %vm401, %v687, 0
        %756 = vmatprep.subr.bf16.mxu0 0
        %757 = vmatpush1.bf16.msra.mxu0 0
        %758 = vmatprep.subr.bf16.mxu0 0
        %759 = vmatpush1.bf16.msra.mxu0 0
        %760 = vmatprep.subr.bf16.mxu0 0
        %761 = vmatpush1.bf16.msra.mxu0 0
        %762 = vmatprep.subr.bf16.mxu0 0
        %763 = vmatpush1.bf16.msra.mxu0 0
        %764 = vmatprep.subr.bf16.mxu0 0
        %765 = vmatpush1.bf16.msra.mxu0 0
        %766 = vmatprep.subr.bf16.mxu0 0
        %767 = vmatpush1.bf16.msra.mxu0 0
        %768 = vmatprep.subr.bf16.mxu0 0
        %769 = vmatpush1.bf16.msra.mxu0 0
        %770 = vmatprep.subr.bf16.mxu0 0
        %771 = vmatpush1.bf16.msra.mxu0 %v754
        %772 = vmatprep.subr.bf16.mxu0 0
        %773 = vmatpush2.bf16.msra.mxu0 0
        %774 = vmatprep.subr.bf16.mxu0 0
        %775 = vmatpush2.bf16.msra.mxu0 0
        %776 = vmatprep.subr.bf16.mxu0 0
        %777 = vmatpush2.bf16.msra.mxu0 0
        %778 = vmatprep.subr.bf16.mxu0 0
        %779 = vmatpush2.bf16.msra.mxu0 0
        %780 = vmatprep.subr.bf16.mxu0 0
        %781 = vmatpush2.bf16.msra.mxu0 0
        %782 = vmatprep.subr.bf16.mxu0 0
        %783 = vmatpush2.bf16.msra.mxu0 0
        %784 = vmatprep.subr.bf16.mxu0 0
        %785 = vmatpush2.bf16.msra.mxu0 0
        %786 = vmatprep.subr.bf16.mxu0 0
        %787 = vmatpush2.bf16.msra.mxu0 0
        %788 = vmatprep.mubr.bf16.mxu0 0
        %789 = vmatmul.mubr.bf16.gmra.mxu0 %v751
        %v790 = vpop.f32.mrf.mxu0
        %v791 = vadd.f32 0.0, %v790
        %v792 = vpop.f32.mrf.mxu0
        %v793 = vpop.f32.mrf.mxu0
        %v794 = vpop.f32.mrf.mxu0
        %795 = vdwg.mxu0
        %797 = vrot.lane.b32.xlu0 %v557, 8
        %v798 = vpop.permute.xlu0 %797
        %801 = vrot.lane.b32.xlu0 %v674, 16
        %v802 = vpop.permute.xlu0 %801
        %805 = vrot.lane.b32.xlu0 %v791, 24
        %v806 = vpop.permute.xlu0 %805
        %v808 = vsel %vm336, %v440, %v798
        %vm809 = vcmask 130048
        %v810 = vsel %vm809, %v808, %v802
        %vm811 = vcmask 195584
        %v812 = vsel %vm811, %v810, %v806
        %v813 = vpack.c.bf16 %v812, %v812
        %vm814 = vcmask 257024
        %815 = vst.msk [vmem:[%s322] sm:$0xf] %vm814, %v813
        %p816 = scmp.lt.s32.totalorder %s23, 1
        %s817 = scalar_select %p816, %s23, 1
        %p818 = scmp.lt.s32.totalorder %s24, 0
        %s819 = scalar_select %p818, %s24, 0
        %s820 = sadd.s32 %s819, %s817
        %s821 = smul.addr %s820, 4
        %s822 = scalar_lea.vmem %s3, %s821
        %s823 = sand.u32 %s153, 1
        %s824 = scalar_lea.sflag [#allocation3], %s823
        %s825 = sand.u32 %s153, 1
        %s826 = smul.addr %s825, 32
        %s827 = scalar_lea.vmem [#allocation2], %s826
        // Predicated region
        $region33: #{gpt2_decoder_forward.20} parent=31 // pred_check
          %p828 = pneg %p135
        $region34: #{gpt2_decoder_forward.20} parent=31 // pred_check_branch
          %830 = sbr.rel (%p828) target = $region36
        $region35: #{gpt2_decoder_forward.20} parent=31 // pred_region
          _
        $region36: #{gpt2_decoder_forward.20} parent=31 // pred_fallthru
          _
        // Predicated region
        $region37: #{gpt2_decoder_forward.20} parent=31 // pred_check
          %p831 = pneg %p163
        $region38: #{gpt2_decoder_forward.20} parent=31 // pred_check_branch
          %833 = sbr.rel (%p831) target = $region40
        $region39: #{gpt2_decoder_forward.20} parent=31 // pred_region
          %s834 = smul.u32 4, %s24
          %s836 = ssub.s32 512, 512
          %837 = vsyncadd %s824, %s836
          %s838 = smul.addr %s23, 4
          %s839 = sadd.s32 %s834, %s838
          %s840 = smul.addr %s839, 128
          %s841 = scalar_lea.hbm %s4, %s840
          %s842 = sshll.u32 %s827, 4
          %s843 = int_to_ptr.vmem [resolvable:$true] %s842
          %848 = dma.vmem_to_hbm [thread:$0]  %s843, 512, %s841, %s824, 128, 128, 8
        $region40: #{gpt2_decoder_forward.20} parent=31 // pred_fallthru
          _
      $region32: #{gpt2_decoder_forward.20} parent=5 // pred_fallthru
        _
      %p849 = scmp.le.s32.totalorder 2, %s14
      // Predicated region
      $region41: #{gpt2_decoder_forward.20} parent=5 // pred_check
        %p850 = pneg %p849
      $region42: #{gpt2_decoder_forward.20} parent=5 // pred_check_branch
        %852 = sbr.rel (%p850) target = $region44
      $region43: #{gpt2_decoder_forward.20} parent=5 // pred_region
        %s853 = ssub.s32 %s14, 2
        // Predicated region
        $region45: #{gpt2_decoder_forward.20} parent=43 // pred_check
          %p854 = pneg %p141
        $region46: #{gpt2_decoder_forward.20} parent=43 // pred_check_branch
          %856 = sbr.rel (%p854) target = $region48
        $region47: #{gpt2_decoder_forward.20} parent=43 // pred_region
          %p857 = scmp.lt.s32.totalorder %s25, 1
          %s858 = scalar_select %p857, %s25, 1
          %p859 = scmp.lt.s32.totalorder %s26, 0
          %s860 = scalar_select %p859, %s26, 0
          %s861 = sadd.s32 %s860, %s858
          %s862 = smul.addr %s861, 4
          %s863 = scalar_lea.vmem %s3, %s862
        $region48: #{gpt2_decoder_forward.20} parent=43 // pred_fallthru
          _
        // Predicated region
        $region49: #{gpt2_decoder_forward.20} parent=43 // pred_check
          %p864 = pneg %p169
        $region50: #{gpt2_decoder_forward.20} parent=43 // pred_check_branch
          %866 = sbr.rel (%p864) target = $region52
        $region51: #{gpt2_decoder_forward.20} parent=43 // pred_region
          %s867 = sand.u32 %s154, 1
          %s868 = scalar_lea.sflag [#allocation3], %s867
          %s869 = sand.u32 %s154, 1
          %s870 = smul.addr %s869, 32
          %s871 = scalar_lea.vmem [#allocation2], %s870
          %872 = dma.done %s868, 512
        $region52: #{gpt2_decoder_forward.20} parent=43 // pred_fallthru
          _
      $region44: #{gpt2_decoder_forward.20} parent=5 // pred_fallthru
        _
    $region6: #{gpt2_decoder_forward.20} parent=1 // loop_footer
      %s18 = sadd.s32 1, %s14
    $region7: #{gpt2_decoder_forward.20} parent=1 // loop_footer_branch
      %13 = sbr.rel target = $region3
    $region8: #{gpt2_decoder_forward.20} parent=1 // loop_exit
      _
    %873 = vsyncpa [#allocation3], 1
    %s874 = scalar_lea.sflag [#allocation3], 1
    %875 = vsyncpa %s874, 1

// kernel: gpt2_decoder_forward.23
$region0: #{gpt2_decoder_forward.23}
  #allocation0 [shape = 'u32[]', space=smem, size = 0x4, offset = 0x4, fixed_abs, tag = 'smem constant byte address 0x4 - core index']
  #allocation1 [shape = 'u32[144,128]{1,0:T(1,128)}', space=vmem, size = 0x12000, scoped, tag = 'internal scratch']
  %s0 = inlined_call_operand.vmem [shape: f32[32,32], index: 0, kind: input, shape index: {}]
  %s1 = inlined_call_operand.vmem [shape: f32[1,32], index: 1, kind: input, shape index: {}]
  %s2 = inlined_call_operand.vmem [shape: f32[1,32], index: 2, kind: input, shape index: {}]
  %s3 = inlined_call_operand.vmem [shape: bf16[32,64], index: 3, kind: input, shape index: {}]
  %s4 = inlined_call_operand.vmem [shape: f32[1,64], index: 4, kind: input, shape index: {}]
  %s5 = inlined_call_operand.vmem [shape: bf16[32,64], index: 5, kind: output, shape index: {}]
  %s6 = sld [smem:[#allocation0]]
  $region30: #{gpt2_decoder_forward.23} parent=0
    _
  %s8 = ssub.s32 1, %s6
  %s9 = scalar_select 0, %s8, %s6
  // Predicated region
  $region2: #{gpt2_decoder_forward.23} parent=0 // pred_check
    _
  $region3: #{gpt2_decoder_forward.23} parent=0 // pred_check_branch
    %11 = sbr.rel (0) target = $region5
  $region4: #{gpt2_decoder_forward.23} parent=0 // pred_region
    _
  $region5: #{gpt2_decoder_forward.23} parent=0 // pred_fallthru
    _
  // Predicated region
  $region6: #{gpt2_decoder_forward.23} parent=0 // pred_check
    _
  $region7: #{gpt2_decoder_forward.23} parent=0 // pred_check_branch
    %13 = sbr.rel (0) target = $region9
  $region8: #{gpt2_decoder_forward.23} parent=0 // pred_region
    _
  $region9: #{gpt2_decoder_forward.23} parent=0 // pred_fallthru
    _
  // Predicated region
  $region10: #{gpt2_decoder_forward.23} parent=0 // pred_check
    _
  $region11: #{gpt2_decoder_forward.23} parent=0 // pred_check_branch
    %15 = sbr.rel (0) target = $region13
  $region12: #{gpt2_decoder_forward.23} parent=0 // pred_region
    _
  $region13: #{gpt2_decoder_forward.23} parent=0 // pred_fallthru
    _
  // Predicated region
  $region14: #{gpt2_decoder_forward.23} parent=0 // pred_check
    _
  $region15: #{gpt2_decoder_forward.23} parent=0 // pred_check_branch
    %17 = sbr.rel (0) target = $region17
  $region16: #{gpt2_decoder_forward.23} parent=0 // pred_region
    _
  $region17: #{gpt2_decoder_forward.23} parent=0 // pred_fallthru
    _
  // Predicated region
  $region18: #{gpt2_decoder_forward.23} parent=0 // pred_check
    _
  $region19: #{gpt2_decoder_forward.23} parent=0 // pred_check_branch
    %19 = sbr.rel (0) target = $region21
  $region20: #{gpt2_decoder_forward.23} parent=0 // pred_region
    _
  $region21: #{gpt2_decoder_forward.23} parent=0 // pred_fallthru
    _
  %v21 = vld [vmem:[%s0] sm:$0xff]
  %v22 = vld [vmem:[%s0 + $0x8] sm:$0xff]
  %v23 = vld [vmem:[%s0 + $0x10] sm:$0xff]
  %v24 = vld [vmem:[%s0 + $0x18] sm:$0xff]
  %v25 = vpack.c.bf16 %v22, %v21
  %v26 = vpack.c.bf16 %v24, %v23
  %v27 = vld [vmem:[%s3] sm:$0xf]
  %v28 = vld [vmem:[%s3 + $0x4] sm:$0xf]
  %v29 = vld [vmem:[%s3 + $0x8] sm:$0xf]
  %v30 = vld [vmem:[%s3 + $0xc] sm:$0xf]
  %v31 = vld [vmem:[%s4] sm:$0x1]
  %v33 = vlaneseq
  %v34 = vshrl.u32 %v33, 7
  %v35 = vsub.s32 0, %v34
  %v36 = vrot.slane %v31, %v35
  %v42 = vunpack.c.l.b16 %v27
  %v43 = vunpack.c.l.b16 %v28
  %v44 = vunpack.c.l.b16 %v29
  %v45 = vunpack.c.l.b16 %v30
  %v46 = vpack.c.b16 %v43, %v42
  %v47 = vpack.c.b16 %v45, %v44
  %vm50 = vcmask 261120
  %v52 = vsel %vm50, %v25, 0
  %v55 = vsel %vm50, %v26, 0
  %57 = vmatprep.subr.bf16.mxu0 0
  %58 = vmatpush1.bf16.msra.mxu0 0
  %59 = vmatprep.subr.bf16.mxu0 0
  %60 = vmatpush1.bf16.msra.mxu0 0
  %61 = vmatprep.subr.bf16.mxu0 0
  %62 = vmatpush1.bf16.msra.mxu0 0
  %63 = vmatprep.subr.bf16.mxu0 0
  %64 = vmatpush1.bf16.msra.mxu0 0
  %65 = vmatprep.subr.bf16.mxu0 0
  %66 = vmatpush1.bf16.msra.mxu0 0
  %67 = vmatprep.subr.bf16.mxu0 0
  %68 = vmatpush1.bf16.msra.mxu0 0
  %69 = vmatprep.subr.bf16.mxu0 0
  %70 = vmatpush1.bf16.msra.mxu0 %v47
  %71 = vmatprep.subr.bf16.mxu0 0
  %72 = vmatpush1.bf16.msra.mxu0 %v46
  %73 = vmatprep.subr.bf16.mxu0 0
  %74 = vmatpush2.bf16.msra.mxu0 0
  %75 = vmatprep.subr.bf16.mxu0 0
  %76 = vmatpush2.bf16.msra.mxu0 0
  %77 = vmatprep.subr.bf16.mxu0 0
  %78 = vmatpush2.bf16.msra.mxu0 0
  %79 = vmatprep.subr.bf16.mxu0 0
  %80 = vmatpush2.bf16.msra.mxu0 0
  %81 = vmatprep.subr.bf16.mxu0 0
  %82 = vmatpush2.bf16.msra.mxu0 0
  %83 = vmatprep.subr.bf16.mxu0 0
  %84 = vmatpush2.bf16.msra.mxu0 0
  %85 = vmatprep.subr.bf16.mxu0 0
  %86 = vmatpush2.bf16.msra.mxu0 0
  %87 = vmatprep.subr.bf16.mxu0 0
  %88 = vmatpush2.bf16.msra.mxu0 0
  %89 = vmatprep.mubr.bf16.mxu0 0
  %90 = vmatmul.mubr.bf16.gmra.mxu0 %v52
  %v91 = vpop.f32.mrf.mxu0
  %v92 = vadd.f32 %v36, %v91
  %v93 = vpop.f32.mrf.mxu0
  %v94 = vpop.f32.mrf.mxu0
  %v95 = vadd.f32 %v36, %v94
  %v96 = vpop.f32.mrf.mxu0
  %97 = vmatprep.mubr.bf16.mxu0 0
  %98 = vmatmul.mubr.bf16.gmra.mxu0 %v55
  %v99 = vpop.f32.mrf.mxu0
  %v100 = vadd.f32 %v36, %v99
  %v101 = vpop.f32.mrf.mxu0
  %v102 = vpop.f32.mrf.mxu0
  %v103 = vadd.f32 %v36, %v102
  %v104 = vpop.f32.mrf.mxu0
  %105 = vdwg.mxu0
  %v106 = vpack.c.bf16 %v95, %v92
  %v107 = vpack.c.bf16 %v103, %v100
  %v110 = vunpack.c.l.b16 %v106
  %v111 = vunpack.c.h.b16 %v106
  %v112 = vunpack.c.l.b16 %v107
  %v113 = vunpack.c.h.b16 %v107
  %v114 = vpack.c.b16 %v110, %v110
  %v115 = vpack.c.b16 %v111, %v111
  %v116 = vpack.c.b16 %v112, %v112
  %v117 = vpack.c.b16 %v113, %v113
  %vm122 = vcmask 519168
  %123 = vst.msk [vmem:[%s5] sm:$0xf] %vm122, %v114
  %124 = vst.msk [vmem:[%s5 + $0x4] sm:$0xf] %vm122, %v115
  %125 = vst.msk [vmem:[%s5 + $0x8] sm:$0xf] %vm122, %v116
  %126 = vst.msk [vmem:[%s5 + $0xc] sm:$0xf] %vm122, %v117
  // Predicated region
  $region22: #{gpt2_decoder_forward.23} parent=0 // pred_check
    _
  $region23: #{gpt2_decoder_forward.23} parent=0 // pred_check_branch
    %128 = sbr.rel (0) target = $region25
  $region24: #{gpt2_decoder_forward.23} parent=0 // pred_region
    _
  $region25: #{gpt2_decoder_forward.23} parent=0 // pred_fallthru
    _
  // Predicated region
  $region26: #{gpt2_decoder_forward.23} parent=0 // pred_check
    _
  $region27: #{gpt2_decoder_forward.23} parent=0 // pred_check_branch
    %130 = sbr.rel (0) target = $region29
  $region28: #{gpt2_decoder_forward.23} parent=0 // pred_region
    _
  $region29: #{gpt2_decoder_forward.23} parent=0 // pred_fallthru
    _

// kernel: gpt2_decoder_forward.26
$region0: #{gpt2_decoder_forward.26}
  #allocation0 [shape = 'u32[]', space=smem, size = 0x4, offset = 0x4, fixed_abs, tag = 'smem constant byte address 0x4 - core index']
  #allocation1 [shape = 'u32[144,128]{1,0:T(1,128)}', space=vmem, size = 0x12000, scoped, tag = 'internal scratch']
  %s0 = inlined_call_operand.vmem [shape: f32[16,32], index: 0, kind: input, shape index: {}]
  %s1 = inlined_call_operand.vmem [shape: f32[1,32], index: 1, kind: input, shape index: {}]
  %s2 = inlined_call_operand.vmem [shape: f32[1,32], index: 2, kind: input, shape index: {}]
  %s3 = inlined_call_operand.vmem [shape: bf16[32,128], index: 3, kind: input, shape index: {}]
  %s4 = inlined_call_operand.vmem [shape: f32[1,128], index: 4, kind: input, shape index: {}]
  %s5 = inlined_call_operand.vmem [shape: bf16[16,128], index: 5, kind: output, shape index: {}]
  %s6 = sld [smem:[#allocation0]]
  $region30: #{gpt2_decoder_forward.26} parent=0
    _
  %s8 = ssub.s32 1, %s6
  %s9 = scalar_select 0, %s8, %s6
  // Predicated region
  $region2: #{gpt2_decoder_forward.26} parent=0 // pred_check
    _
  $region3: #{gpt2_decoder_forward.26} parent=0 // pred_check_branch
    %11 = sbr.rel (0) target = $region5
  $region4: #{gpt2_decoder_forward.26} parent=0 // pred_region
    _
  $region5: #{gpt2_decoder_forward.26} parent=0 // pred_fallthru
    _
  // Predicated region
  $region6: #{gpt2_decoder_forward.26} parent=0 // pred_check
    _
  $region7: #{gpt2_decoder_forward.26} parent=0 // pred_check_branch
    %13 = sbr.rel (0) target = $region9
  $region8: #{gpt2_decoder_forward.26} parent=0 // pred_region
    _
  $region9: #{gpt2_decoder_forward.26} parent=0 // pred_fallthru
    _
  // Predicated region
  $region10: #{gpt2_decoder_forward.26} parent=0 // pred_check
    _
  $region11: #{gpt2_decoder_forward.26} parent=0 // pred_check_branch
    %15 = sbr.rel (0) target = $region13
  $region12: #{gpt2_decoder_forward.26} parent=0 // pred_region
    _
  $region13: #{gpt2_decoder_forward.26} parent=0 // pred_fallthru
    _
  // Predicated region
  $region14: #{gpt2_decoder_forward.26} parent=0 // pred_check
    _
  $region15: #{gpt2_decoder_forward.26} parent=0 // pred_check_branch
    %17 = sbr.rel (0) target = $region17
  $region16: #{gpt2_decoder_forward.26} parent=0 // pred_region
    _
  $region17: #{gpt2_decoder_forward.26} parent=0 // pred_fallthru
    _
  // Predicated region
  $region18: #{gpt2_decoder_forward.26} parent=0 // pred_check
    _
  $region19: #{gpt2_decoder_forward.26} parent=0 // pred_check_branch
    %19 = sbr.rel (0) target = $region21
  $region20: #{gpt2_decoder_forward.26} parent=0 // pred_region
    _
  $region21: #{gpt2_decoder_forward.26} parent=0 // pred_fallthru
    _
  %v21 = vld [vmem:[%s0] sm:$0xff]
  %v22 = vld [vmem:[%s0 + $0x8] sm:$0xff]
  %vm23 = vcmask 261120
  %v24 = vsel %vm23, %v21, 0.0
  %25 = vadd.xlane.f32.xlu0 %v24
  %v26 = vpop.xlane.xlu0 %25
  %v27 = vsel %vm23, %v22, 0.0
  %28 = vadd.xlane.f32.xlu0 %v27
  %v29 = vpop.xlane.xlu0 %28
  %v30 = vrcp.pop 32.0
  %v31 = vmul.f32 %v26, %v30
  %v32 = vmul.f32 %v29, %v30
  %v33 = vsub.f32 %v21, %v31
  %v34 = vsub.f32 %v22, %v32
  %v35 = vmul.f32 %v33, %v33
  %v36 = vmul.f32 %v34, %v34
  %v37 = vsel %vm23, %v35, 0.0
  %38 = vadd.xlane.f32.xlu0 %v37
  %v39 = vpop.xlane.xlu0 %38
  %v40 = vsel %vm23, %v36, 0.0
  %41 = vadd.xlane.f32.xlu0 %v40
  %v42 = vpop.xlane.xlu0 %41
  %v43 = vmul.f32 %v39, %v30
  %v44 = vmul.f32 %v42, %v30
  %v45 = vadd.f32 %v43, 1e-05
  %v46 = vadd.f32 %v44, 1e-05
  %v47 = vrsqrt.pop %v45
  %v48 = vrsqrt.pop %v46
  %v49 = vmul.f32 %v33, %v47
  %v50 = vmul.f32 %v34, %v48
  %v51 = vld [vmem:[%s1] sm:$0x1]
  %v53 = vlaneseq
  %v54 = vshrl.u32 %v53, 7
  %v55 = vsub.s32 0, %v54
  %v56 = vrot.slane %v51, %v55
  %v58 = vmul.f32 %v49, %v56
  %v59 = vmul.f32 %v50, %v56
  %v60 = vld [vmem:[%s2] sm:$0x1]
  %v62 = vlaneseq
  %v63 = vshrl.u32 %v62, 7
  %v64 = vsub.s32 0, %v63
  %v65 = vrot.slane %v60, %v64
  %v67 = vadd.f32 %v58, %v65
  %v68 = vadd.f32 %v59, %v65
  %v69 = vpack.c.bf16 %v68, %v67
  %v70 = vld [vmem:[%s3] sm:$0xf]
  %v71 = vld [vmem:[%s3 + $0x4] sm:$0xf]
  %v72 = vld [vmem:[%s3 + $0x8] sm:$0xf]
  %v73 = vld [vmem:[%s3 + $0xc] sm:$0xf]
  %v74 = vld [vmem:[%s4] sm:$0x1]
  %v76 = vlaneseq
  %v77 = vshrl.u32 %v76, 7
  %v78 = vsub.s32 0, %v77
  %v79 = vrot.slane %v74, %v78
  %v85 = vunpack.c.l.b16 %v70
  %v86 = vunpack.c.l.b16 %v71
  %v87 = vunpack.c.l.b16 %v72
  %v88 = vunpack.c.l.b16 %v73
  %v89 = vpack.c.b16 %v86, %v85
  %v90 = vpack.c.b16 %v88, %v87
  %v94 = vsel %vm23, %v69, 0
  %96 = vmatprep.subr.bf16.mxu0 0
  %97 = vmatpush1.bf16.msra.mxu0 0
  %98 = vmatprep.subr.bf16.mxu0 0
  %99 = vmatpush1.bf16.msra.mxu0 0
  %100 = vmatprep.subr.bf16.mxu0 0
  %101 = vmatpush1.bf16.msra.mxu0 0
  %102 = vmatprep.subr.bf16.mxu0 0
  %103 = vmatpush1.bf16.msra.mxu0 0
  %104 = vmatprep.subr.bf16.mxu0 0
  %105 = vmatpush1.bf16.msra.mxu0 0
  %106 = vmatprep.subr.bf16.mxu0 0
  %107 = vmatpush1.bf16.msra.mxu0 0
  %108 = vmatprep.subr.bf16.mxu0 0
  %109 = vmatpush1.bf16.msra.mxu0 %v90
  %110 = vmatprep.subr.bf16.mxu0 0
  %111 = vmatpush1.bf16.msra.mxu0 %v89
  %112 = vmatprep.subr.bf16.mxu0 0
  %113 = vmatpush2.bf16.msra.mxu0 0
  %114 = vmatprep.subr.bf16.mxu0 0
  %115 = vmatpush2.bf16.msra.mxu0 0
  %116 = vmatprep.subr.bf16.mxu0 0
  %117 = vmatpush2.bf16.msra.mxu0 0
  %118 = vmatprep.subr.bf16.mxu0 0
  %119 = vmatpush2.bf16.msra.mxu0 0
  %120 = vmatprep.subr.bf16.mxu0 0
  %121 = vmatpush2.bf16.msra.mxu0 0
  %122 = vmatprep.subr.bf16.mxu0 0
  %123 = vmatpush2.bf16.msra.mxu0 0
  %124 = vmatprep.subr.bf16.mxu0 0
  %125 = vmatpush2.bf16.msra.mxu0 0
  %126 = vmatprep.subr.bf16.mxu0 0
  %127 = vmatpush2.bf16.msra.mxu0 0
  %128 = vmatprep.mubr.bf16.mxu0 0
  %129 = vmatmul.mubr.bf16.gmra.mxu0 %v94
  %v130 = vpop.f32.mrf.mxu0
  %v131 = vadd.f32 %v79, %v130
  %v132 = vpop.f32.mrf.mxu0
  %v133 = vpop.f32.mrf.mxu0
  %v134 = vadd.f32 %v79, %v133
  %v135 = vpop.f32.mrf.mxu0
  %136 = vdwg.mxu0
  %v137 = vmul.f32 %v131, 0.5
  %v138 = vmul.f32 %v134, 0.5
  %v139 = vmul.f32 %v131, 0.044715
  %v140 = vmul.f32 %v134, 0.044715
  %v141 = vmul.f32 %v139, %v131
  %v142 = vmul.f32 %v140, %v134
  %v143 = vmul.f32 %v141, %v131
  %v144 = vmul.f32 %v142, %v134
  %v145 = vadd.f32 %v131, %v143
  %v146 = vadd.f32 %v134, %v144
  %v147 = vmul.f32 %v145, 0.7978846
  %v148 = vmul.f32 %v146, 0.7978846
  %v149 = vtanh.pop %v147
  %v150 = vtanh.pop %v148
  %v151 = vadd.f32 %v149, 1.0
  %v152 = vadd.f32 %v150, 1.0
  %v153 = vmul.f32 %v137, %v151
  %v154 = vmul.f32 %v138, %v152
  %v155 = vpack.c.bf16 %v154, %v153
  %v157 = vunpack.c.l.b16 %v155
  %v158 = vunpack.c.h.b16 %v155
  %v159 = vpack.c.b16 %v157, %v157
  %v160 = vpack.c.b16 %v158, %v158
  %163 = vst [vmem:[%s5] sm:$0xf] %v159
  %164 = vst [vmem:[%s5 + $0x4] sm:$0xf] %v160
  // Predicated region
  $region22: #{gpt2_decoder_forward.26} parent=0 // pred_check
    _
  $region23: #{gpt2_decoder_forward.26} parent=0 // pred_check_branch
    %166 = sbr.rel (0) target = $region25
  $region24: #{gpt2_decoder_forward.26} parent=0 // pred_region
    _
  $region25: #{gpt2_decoder_forward.26} parent=0 // pred_fallthru
    _
  // Predicated region
  $region26: #{gpt2_decoder_forward.26} parent=0 // pred_check
    _
  $region27: #{gpt2_decoder_forward.26} parent=0 // pred_check_branch
    %168 = sbr.rel (0) target = $region29
  $region28: #{gpt2_decoder_forward.26} parent=0 // pred_region
    _
  $region29: #{gpt2_decoder_forward.26} parent=0 // pred_fallthru
    _

// kernel: gpt2_decoder_forward.27
$region0: #{gpt2_decoder_forward.27}
  #allocation0 [shape = 'u32[]', space=smem, size = 0x4, offset = 0x4, fixed_abs, tag = 'smem constant byte address 0x4 - core index']
  #allocation1 [shape = 'u32[144,128]{1,0:T(1,128)}', space=vmem, size = 0x12000, scoped, tag = 'internal scratch']
  %s0 = inlined_call_operand.vmem [shape: bf16[16,128], index: 0, kind: input, shape index: {}]
  %s1 = inlined_call_operand.vmem [shape: bf16[128,32], index: 1, kind: input, shape index: {}]
  %s2 = inlined_call_operand.vmem [shape: f32[1,32], index: 2, kind: input, shape index: {}]
  %s3 = inlined_call_operand.vmem [shape: f32[16,32], index: 3, kind: input, shape index: {}]
  %s4 = inlined_call_operand.vmem [shape: f32[16,32], index: 4, kind: output, shape index: {}]
  %s5 = sld [smem:[#allocation0]]
  $region26: #{gpt2_decoder_forward.27} parent=0
    _
  %s7 = ssub.s32 1, %s5
  %s8 = scalar_select 0, %s7, %s5
  // Predicated region
  $region2: #{gpt2_decoder_forward.27} parent=0 // pred_check
    _
  $region3: #{gpt2_decoder_forward.27} parent=0 // pred_check_branch
    %10 = sbr.rel (0) target = $region5
  $region4: #{gpt2_decoder_forward.27} parent=0 // pred_region
    _
  $region5: #{gpt2_decoder_forward.27} parent=0 // pred_fallthru
    _
  // Predicated region
  $region6: #{gpt2_decoder_forward.27} parent=0 // pred_check
    _
  $region7: #{gpt2_decoder_forward.27} parent=0 // pred_check_branch
    %12 = sbr.rel (0) target = $region9
  $region8: #{gpt2_decoder_forward.27} parent=0 // pred_region
    _
  $region9: #{gpt2_decoder_forward.27} parent=0 // pred_fallthru
    _
  // Predicated region
  $region10: #{gpt2_decoder_forward.27} parent=0 // pred_check
    _
  $region11: #{gpt2_decoder_forward.27} parent=0 // pred_check_branch
    %14 = sbr.rel (0) target = $region13
  $region12: #{gpt2_decoder_forward.27} parent=0 // pred_region
    _
  $region13: #{gpt2_decoder_forward.27} parent=0 // pred_fallthru
    _
  // Predicated region
  $region14: #{gpt2_decoder_forward.27} parent=0 // pred_check
    _
  $region15: #{gpt2_decoder_forward.27} parent=0 // pred_check_branch
    %16 = sbr.rel (0) target = $region17
  $region16: #{gpt2_decoder_forward.27} parent=0 // pred_region
    _
  $region17: #{gpt2_decoder_forward.27} parent=0 // pred_fallthru
    _
  %v18 = vld [vmem:[%s0] sm:$0xf]
  %v19 = vld [vmem:[%s0 + $0x4] sm:$0xf]
  %v20 = vld [vmem:[%s1] sm:$0xf]
  %v21 = vld [vmem:[%s1 + $0x4] sm:$0xf]
  %v22 = vld [vmem:[%s1 + $0x8] sm:$0xf]
  %v23 = vld [vmem:[%s1 + $0xc] sm:$0xf]
  %v24 = vld [vmem:[%s1 + $0x10] sm:$0xf]
  %v25 = vld [vmem:[%s1 + $0x14] sm:$0xf]
  %v26 = vld [vmem:[%s1 + $0x18] sm:$0xf]
  %v27 = vld [vmem:[%s1 + $0x1c] sm:$0xf]
  %v28 = vld [vmem:[%s1 + $0x20] sm:$0xf]
  %v29 = vld [vmem:[%s1 + $0x24] sm:$0xf]
  %v30 = vld [vmem:[%s1 + $0x28] sm:$0xf]
  %v31 = vld [vmem:[%s1 + $0x2c] sm:$0xf]
  %v32 = vld [vmem:[%s1 + $0x30] sm:$0xf]
  %v33 = vld [vmem:[%s1 + $0x34] sm:$0xf]
  %v34 = vld [vmem:[%s1 + $0x38] sm:$0xf]
  %v35 = vld [vmem:[%s1 + $0x3c] sm:$0xf]
  %v36 = vld [vmem:[%s2] sm:$0x1]
  %v38 = vlaneseq
  %v39 = vshrl.u32 %v38, 7
  %v40 = vsub.s32 0, %v39
  %v41 = vrot.slane %v36, %v40
  %v45 = vunpack.c.l.b16 %v18
  %v46 = vunpack.c.l.b16 %v19
  %v47 = vpack.c.b16 %v46, %v45
  %v65 = vunpack.c.l.b16 %v20
  %v66 = vunpack.c.l.b16 %v21
  %v67 = vunpack.c.l.b16 %v22
  %v68 = vunpack.c.l.b16 %v23
  %v69 = vunpack.c.l.b16 %v24
  %v70 = vunpack.c.l.b16 %v25
  %v71 = vunpack.c.l.b16 %v26
  %v72 = vunpack.c.l.b16 %v27
  %v73 = vunpack.c.l.b16 %v28
  %v74 = vunpack.c.l.b16 %v29
  %v75 = vunpack.c.l.b16 %v30
  %v76 = vunpack.c.l.b16 %v31
  %v77 = vunpack.c.l.b16 %v32
  %v78 = vunpack.c.l.b16 %v33
  %v79 = vunpack.c.l.b16 %v34
  %v80 = vunpack.c.l.b16 %v35
  %v81 = vpack.c.b16 %v66, %v65
  %v82 = vpack.c.b16 %v68, %v67
  %v83 = vpack.c.b16 %v70, %v69
  %v84 = vpack.c.b16 %v72, %v71
  %v85 = vpack.c.b16 %v74, %v73
  %v86 = vpack.c.b16 %v76, %v75
  %v87 = vpack.c.b16 %v78, %v77
  %v88 = vpack.c.b16 %v80, %v79
  %97 = vmatprep.subr.bf16.mxu0 0
  %98 = vmatpush1.bf16.msra.mxu0 %v88
  %99 = vmatprep.subr.bf16.mxu0 0
  %100 = vmatpush1.bf16.msra.mxu0 %v87
  %101 = vmatprep.subr.bf16.mxu0 0
  %102 = vmatpush1.bf16.msra.mxu0 %v86
  %103 = vmatprep.subr.bf16.mxu0 0
  %104 = vmatpush1.bf16.msra.mxu0 %v85
  %105 = vmatprep.subr.bf16.mxu0 0
  %106 = vmatpush1.bf16.msra.mxu0 %v84
  %107 = vmatprep.subr.bf16.mxu0 0
  %108 = vmatpush1.bf16.msra.mxu0 %v83
  %109 = vmatprep.subr.bf16.mxu0 0
  %110 = vmatpush1.bf16.msra.mxu0 %v82
  %111 = vmatprep.subr.bf16.mxu0 0
  %112 = vmatpush1.bf16.msra.mxu0 %v81
  %113 = vmatprep.subr.bf16.mxu0 0
  %114 = vmatpush2.bf16.msra.mxu0 0
  %115 = vmatprep.subr.bf16.mxu0 0
  %116 = vmatpush2.bf16.msra.mxu0 0
  %117 = vmatprep.subr.bf16.mxu0 0
  %118 = vmatpush2.bf16.msra.mxu0 0
  %119 = vmatprep.subr.bf16.mxu0 0
  %120 = vmatpush2.bf16.msra.mxu0 0
  %121 = vmatprep.subr.bf16.mxu0 0
  %122 = vmatpush2.bf16.msra.mxu0 0
  %123 = vmatprep.subr.bf16.mxu0 0
  %124 = vmatpush2.bf16.msra.mxu0 0
  %125 = vmatprep.subr.bf16.mxu0 0
  %126 = vmatpush2.bf16.msra.mxu0 0
  %127 = vmatprep.subr.bf16.mxu0 0
  %128 = vmatpush2.bf16.msra.mxu0 0
  %129 = vmatprep.mubr.bf16.mxu0 0
  %130 = vmatmul.mubr.bf16.gmra.mxu0 %v47
  %v131 = vpop.f32.mrf.mxu0
  %v132 = vadd.f32 %v41, %v131
  %v133 = vpop.f32.mrf.mxu0
  %v134 = vpop.f32.mrf.mxu0
  %v135 = vadd.f32 %v41, %v134
  %v136 = vpop.f32.mrf.mxu0
  %137 = vdwg.mxu0
  %v138 = vld [vmem:[%s3] sm:$0xff]
  %v139 = vld [vmem:[%s3 + $0x8] sm:$0xff]
  %v140 = vadd.f32 %v132, %v138
  %v141 = vadd.f32 %v135, %v139
  %vm142 = vcmask 261120
  %143 = vst.msk [vmem:[%s4] sm:$0xff] %vm142, %v140
  %144 = vst.msk [vmem:[%s4 + $0x8] sm:$0xff] %vm142, %v141
  // Predicated region
  $region18: #{gpt2_decoder_forward.27} parent=0 // pred_check
    _
  $region19: #{gpt2_decoder_forward.27} parent=0 // pred_check_branch
    %146 = sbr.rel (0) target = $region21
  $region20: #{gpt2_decoder_forward.27} parent=0 // pred_region
    _
  $region21: #{gpt2_decoder_forward.27} parent=0 // pred_fallthru
    _
  // Predicated region
  $region22: #{gpt2_decoder_forward.27} parent=0 // pred_check
    _
  $region23: #{gpt2_decoder_forward.27} parent=0 // pred_check_branch
    %148 = sbr.rel (0) target = $region25
  $region24: #{gpt2_decoder_forward.27} parent=0 // pred_region
    _
  $region25: #{gpt2_decoder_forward.27} parent=0 // pred_fallthru
    _

// kernel: gpt2_decoder_forward.24
$region0: #{gpt2_decoder_forward.24}
  #allocation0 [shape = 'u32[]', space=smem, size = 0x4, offset = 0x4, fixed_abs, tag = 'smem constant byte address 0x4 - core index']
  #allocation1 [shape = 'u32[144,128]{1,0:T(1,128)}', space=vmem, size = 0x12000, scoped, tag = 'internal scratch']
  %s0 = inlined_call_operand.vmem [shape: bf16[2,1,4,8,8], index: 0, kind: input, shape index: {}]
  %s1 = inlined_call_operand.vmem [shape: bf16[2,2,4,16,8], index: 1, kind: input, shape index: {}, may-alias: {1,2}]
  %s2 = inlined_call_operand.vmem [shape: bf16[2,2,4,16,8], index: 2, kind: input, shape index: {}, may-alias: {1,2}]
  %s3 = inlined_call_operand.vmem [shape: bf16[2,8,32], index: 3, kind: output, shape index: {0}]
  %s4 = inlined_call_operand.hbm [shape: f32[2,4,8,16], index: 4, kind: output, shape index: {1}]
  %5 = xla_tuple %s3, %s4
  %s6 = sld [smem:[#allocation0]]
  $region53: #{gpt2_decoder_forward.24} parent=0
    _
  %s8 = ssub.s32 1, %s6
  %s9 = scalar_select 0, %s8, %s6
  $region1: #{gpt2_decoder_forward.24} parent=0
    #allocation2 [shape = 'u8[32768]{0}', space=vmem, size = 0x8000, scoped, tag = 'output window, operand 1']
    #allocation3 [shape = 's32[2]{0}', space=sflag, size = 0x8, scoped, tag = 'scoped memory for gpt2_decoder_forward.24']
    %10 = vsyncpa [#allocation3], 0
    %s11 = scalar_lea.sflag [#allocation3], 1
    %12 = vsyncpa %s11, 0
    loop: start=0, step=1, limit=4
    $region2: #{gpt2_decoder_forward.24} parent=1 // loop_pre_header
      _
    $region3: #{gpt2_decoder_forward.24} parent=1 // loop_header
      %s14 = sphi 0, %s18
      %p15 = scmp.ge.s32.totalorder %s14, 4
      %s21 = sphi 0, %s33
      %s22 = sphi 0, %s29
      %s23 = sphi 0, %s21
      %s24 = sphi 0, %s22
      %s25 = sphi 0, %s23
      %s26 = sphi 0, %s24
      %s38 = sphi 0, %s40
      %s41 = sphi 0, %s38
      %s42 = sphi 0, %s41
      %s58 = sphi 0, %s42
      %s66 = sphi 0, %s68
      %s69 = sphi 0, %s66
      %s70 = sphi 0, %s69
      %s86 = sphi 0, %s70
      %s94 = sphi 0, %s96
      %s97 = sphi 0, %s94
      %s98 = sphi 0, %s97
      %s114 = sphi 0, %s98
      %s122 = sphi 0, %s124
      %s125 = sphi 0, %s122
      %s126 = sphi 0, %s125
      %s142 = sphi 0, %s126
      %s150 = sphi 0, %s152
      %s153 = sphi 0, %s150
      %s154 = sphi 0, %s153
      %s170 = sphi 0, %s154
    $region4: #{gpt2_decoder_forward.24} parent=1 // loop_header_branch
      %17 = sbr.rel (%p15) target = $region8
    $region5: #{gpt2_decoder_forward.24} parent=1 // loop_body
      %s19 = ssub.s32 %s14, 1
      %s20 = ssub.s32 %s14, 2
      %s27 = sadd.s32 1, %s22
      %p28 = scmp.ge.s32.totalorder %s27, 1
      %s29 = scalar_select %p28, 0, %s27
      %s30 = sadd.s32 1, %s21
      %s31 = scalar_select %p28, %s30, %s21
      %p32 = scmp.ge.s32.totalorder %s31, 2
      %s33 = scalar_select %p32, 0, %s31
      %s34 = ssub.s32 %s21, %s33
      %s35 = ssub.s32 %s22, %s29
      %s36 = sor.u32 %s34, %s35
      %p37 = scmp.eq.s32.totalorder %s36, 0
      %s39 = sadd.s32 %s38, 1
      %s40 = scalar_select %p37, %s38, %s39
      %p43 = pneg %p37
      %p44 = scmp.eq.s32.totalorder %s14, 1
      %p45 = por %p43, %p44
      %p46 = scmp.ne.s32.totalorder %s38, %s41
      %p47 = scmp.eq.s32.totalorder %s14, 0
      %p48 = por %p46, %p47
      %p49 = scmp.ne.s32.totalorder %s38, %s41
      %p50 = scmp.eq.s32.totalorder %s19, 1
      %p51 = por %p49, %p50
      %p52 = scmp.ne.s32.totalorder %s41, %s42
      %p53 = scmp.eq.s32.totalorder %s19, 0
      %p54 = por %p52, %p53
      %p55 = scmp.ne.s32.totalorder %s41, %s42
      %p56 = scmp.eq.s32.totalorder %s20, 1
      %p57 = por %p55, %p56
      %p59 = scmp.ne.s32.totalorder %s42, %s58
      %p60 = scmp.eq.s32.totalorder %s20, 0
      %p61 = por %p59, %p60
      %s62 = ssub.s32 %s21, %s33
      %s63 = ssub.s32 %s22, %s29
      %s64 = sor.u32 %s62, %s63
      %p65 = scmp.eq.s32.totalorder %s64, 0
      %s67 = sadd.s32 %s66, 1
      %s68 = scalar_select %p65, %s66, %s67
      %p71 = pneg %p65
      %p72 = scmp.eq.s32.totalorder %s14, 1
      %p73 = por %p71, %p72
      %p74 = scmp.ne.s32.totalorder %s66, %s69
      %p75 = scmp.eq.s32.totalorder %s14, 0
      %p76 = por %p74, %p75
      %p77 = scmp.ne.s32.totalorder %s66, %s69
      %p78 = scmp.eq.s32.totalorder %s19, 1
      %p79 = por %p77, %p78
      %p80 = scmp.ne.s32.totalorder %s69, %s70
      %p81 = scmp.eq.s32.totalorder %s19, 0
      %p82 = por %p80, %p81
      %p83 = scmp.ne.s32.totalorder %s69, %s70
      %p84 = scmp.eq.s32.totalorder %s20, 1
      %p85 = por %p83, %p84
      %p87 = scmp.ne.s32.totalorder %s70, %s86
      %p88 = scmp.eq.s32.totalorder %s20, 0
      %p89 = por %p87, %p88
      %s90 = ssub.s32 %s21, %s33
      %s91 = ssub.s32 %s22, %s29
      %s92 = sor.u32 %s90, %s91
      %p93 = scmp.eq.s32.totalorder %s92, 0
      %s95 = sadd.s32 %s94, 1
      %s96 = scalar_select %p93, %s94, %s95
      %p99 = pneg %p93
      %p100 = scmp.eq.s32.totalorder %s14, 1
      %p101 = por %p99, %p100
      %p102 = scmp.ne.s32.totalorder %s94, %s97
      %p103 = scmp.eq.s32.totalorder %s14, 0
      %p104 = por %p102, %p103
      %p105 = scmp.ne.s32.totalorder %s94, %s97
      %p106 = scmp.eq.s32.totalorder %s19, 1
      %p107 = por %p105, %p106
      %p108 = scmp.ne.s32.totalorder %s97, %s98
      %p109 = scmp.eq.s32.totalorder %s19, 0
      %p110 = por %p108, %p109
      %p111 = scmp.ne.s32.totalorder %s97, %s98
      %p112 = scmp.eq.s32.totalorder %s20, 1
      %p113 = por %p111, %p112
      %p115 = scmp.ne.s32.totalorder %s98, %s114
      %p116 = scmp.eq.s32.totalorder %s20, 0
      %p117 = por %p115, %p116
      %s118 = ssub.s32 %s21, %s33
      %s119 = ssub.s32 %s22, %s29
      %s120 = sor.u32 %s118, %s119
      %p121 = scmp.eq.s32.totalorder %s120, 0
      %s123 = sadd.s32 %s122, 1
      %s124 = scalar_select %p121, %s122, %s123
      %p127 = pneg %p121
      %p128 = scmp.eq.s32.totalorder %s14, 1
      %p129 = por %p127, %p128
      %p130 = scmp.ne.s32.totalorder %s122, %s125
      %p131 = scmp.eq.s32.totalorder %s14, 0
      %p132 = por %p130, %p131
      %p133 = scmp.ne.s32.totalorder %s122, %s125
      %p134 = scmp.eq.s32.totalorder %s19, 1
      %p135 = por %p133, %p134
      %p136 = scmp.ne.s32.totalorder %s125, %s126
      %p137 = scmp.eq.s32.totalorder %s19, 0
      %p138 = por %p136, %p137
      %p139 = scmp.ne.s32.totalorder %s125, %s126
      %p140 = scmp.eq.s32.totalorder %s20, 1
      %p141 = por %p139, %p140
      %p143 = scmp.ne.s32.totalorder %s126, %s142
      %p144 = scmp.eq.s32.totalorder %s20, 0
      %p145 = por %p143, %p144
      %s146 = ssub.s32 %s21, %s33
      %s147 = ssub.s32 %s22, %s29
      %s148 = sor.u32 %s146, %s147
      %p149 = scmp.eq.s32.totalorder %s148, 0
      %s151 = sadd.s32 %s150, 1
      %s152 = scalar_select %p149, %s150, %s151
      %p155 = pneg %p149
      %p156 = scmp.eq.s32.totalorder %s14, 1
      %p157 = por %p155, %p156
      %p158 = scmp.ne.s32.totalorder %s150, %s153
      %p159 = scmp.eq.s32.totalorder %s14, 0
      %p160 = por %p158, %p159
      %p161 = scmp.ne.s32.totalorder %s150, %s153
      %p162 = scmp.eq.s32.totalorder %s19, 1
      %p163 = por %p161, %p162
      %p164 = scmp.ne.s32.totalorder %s153, %s154
      %p165 = scmp.eq.s32.totalorder %s19, 0
      %p166 = por %p164, %p165
      %p167 = scmp.ne.s32.totalorder %s153, %s154
      %p168 = scmp.eq.s32.totalorder %s20, 1
      %p169 = por %p167, %p168
      %p171 = scmp.ne.s32.totalorder %s154, %s170
      %p172 = scmp.eq.s32.totalorder %s20, 0
      %p173 = por %p171, %p172
      %p174 = scmp.le.s32.totalorder 1, %s14
      %p175 = scmp.lt.s32.totalorder %s14, 3
      %p176 = pnand %p174, %p175
      %p177 = pneg %p176
      // Predicated region
      $region9: #{gpt2_decoder_forward.24} parent=5 // pred_check
        _
      $region10: #{gpt2_decoder_forward.24} parent=5 // pred_check_branch
        %179 = sbr.rel (%p176) target = $region12
      $region11: #{gpt2_decoder_forward.24} parent=5 // pred_region
        %s180 = ssub.s32 %s14, 1
      $region12: #{gpt2_decoder_forward.24} parent=5 // pred_fallthru
        _
      %p181 = scmp.lt.s32.totalorder %s14, 2
      // Predicated region
      $region13: #{gpt2_decoder_forward.24} parent=5 // pred_check
        %p182 = pneg %p181
      $region14: #{gpt2_decoder_forward.24} parent=5 // pred_check_branch
        %184 = sbr.rel (%p182) target = $region16
      $region15: #{gpt2_decoder_forward.24} parent=5 // pred_region
        // Predicated region
        $region17: #{gpt2_decoder_forward.24} parent=15 // pred_check
          %p185 = pneg %p48
        $region18: #{gpt2_decoder_forward.24} parent=15 // pred_check_branch
          %187 = sbr.rel (%p185) target = $region20
        $region19: #{gpt2_decoder_forward.24} parent=15 // pred_region
          %s188 = smul.u32 4, %s22
          %p189 = scmp.lt.s32.totalorder %s21, 1
          %s190 = scalar_select %p189, %s21, 1
          %p191 = scmp.lt.s32.totalorder %s188, 3
          %s192 = scalar_select %p191, %s188, 3
          %s193 = smul.addr %s190, 4
          %s194 = sadd.s32 %s192, %s193
          %s195 = smul.addr %s194, 4
          %s196 = scalar_lea.vmem %s0, %s195
          %s197 = smul.u32 4, %s22
        $region20: #{gpt2_decoder_forward.24} parent=15 // pred_fallthru
          _
        // Predicated region
        $region21: #{gpt2_decoder_forward.24} parent=15 // pred_check
          %p198 = pneg %p76
        $region22: #{gpt2_decoder_forward.24} parent=15 // pred_check_branch
          %200 = sbr.rel (%p198) target = $region24
        $region23: #{gpt2_decoder_forward.24} parent=15 // pred_region
          %s201 = smul.u32 4, %s22
          %p202 = scmp.lt.s32.totalorder %s21, 1
          %s203 = scalar_select %p202, %s21, 1
          %p204 = scmp.lt.s32.totalorder %s201, 3
          %s205 = scalar_select %p204, %s201, 3
          %s206 = smul.addr %s205, 2
          %s207 = smul.addr %s203, 16
          %s208 = sadd.s32 %s206, %s207
          %s209 = smul.addr %s208, 4
          %s210 = scalar_lea.vmem %s1, %s209
          %s211 = smul.u32 4, %s22
        $region24: #{gpt2_decoder_forward.24} parent=15 // pred_fallthru
          _
        // Predicated region
        $region25: #{gpt2_decoder_forward.24} parent=15 // pred_check
          %p212 = pneg %p104
        $region26: #{gpt2_decoder_forward.24} parent=15 // pred_check_branch
          %214 = sbr.rel (%p212) target = $region28
        $region27: #{gpt2_decoder_forward.24} parent=15 // pred_region
          %s215 = smul.u32 4, %s22
          %p216 = scmp.lt.s32.totalorder %s21, 1
          %s217 = scalar_select %p216, %s21, 1
          %p218 = scmp.lt.s32.totalorder %s215, 3
          %s219 = scalar_select %p218, %s215, 3
          %s220 = smul.addr %s219, 2
          %s221 = sadd.s32 %s220, 8
          %s222 = smul.addr %s217, 16
          %s223 = sadd.s32 %s221, %s222
          %s224 = smul.addr %s223, 4
          %s225 = scalar_lea.vmem %s2, %s224
          %s226 = smul.u32 4, %s22
        $region28: #{gpt2_decoder_forward.24} parent=15 // pred_fallthru
          _
      $region16: #{gpt2_decoder_forward.24} parent=5 // pred_fallthru
        _
      %p227 = scmp.le.s32.totalorder 1, %s14
      %p228 = scmp.lt.s32.totalorder %s14, 3
      %p229 = pnand %p227, %p228
      %p230 = pneg %p229
      // Predicated region
      $region29: #{gpt2_decoder_forward.24} parent=5 // pred_check
        _
      $region30: #{gpt2_decoder_forward.24} parent=5 // pred_check_branch
        %232 = sbr.rel (%p229) target = $region32
      $region31: #{gpt2_decoder_forward.24} parent=5 // pred_region
        %s233 = ssub.s32 %s14, 1
        %s234 = smul.u32 4, %s24
        %p235 = scmp.lt.s32.totalorder %s23, 1
        %s236 = scalar_select %p235, %s23, 1
        %p237 = scmp.lt.s32.totalorder %s234, 3
        %s238 = scalar_select %p237, %s234, 3
        %s239 = smul.addr %s236, 4
        %s240 = sadd.s32 %s238, %s239
        %s241 = smul.addr %s240, 4
        %s242 = scalar_lea.vmem %s0, %s241
        %p243 = pneg %p54
        %p244 = pneg %p51
        %s245 = smul.u32 4, %s24
        %p246 = scmp.lt.s32.totalorder %s23, 1
        %s247 = scalar_select %p246, %s23, 1
        %p248 = scmp.lt.s32.totalorder %s245, 3
        %s249 = scalar_select %p248, %s245, 3
        %s250 = smul.addr %s249, 2
        %s251 = smul.addr %s247, 16
        %s252 = sadd.s32 %s250, %s251
        %s253 = smul.addr %s252, 4
        %s254 = scalar_lea.vmem %s1, %s253
        %p255 = pneg %p82
        %p256 = pneg %p79
        %s257 = smul.u32 4, %s24
        %p258 = scmp.lt.s32.totalorder %s23, 1
        %s259 = scalar_select %p258, %s23, 1
        %p260 = scmp.lt.s32.totalorder %s257, 3
        %s261 = scalar_select %p260, %s257, 3
        %s262 = smul.addr %s261, 2
        %s263 = sadd.s32 %s262, 8
        %s264 = smul.addr %s259, 16
        %s265 = sadd.s32 %s263, %s264
        %s266 = smul.addr %s265, 4
        %s267 = scalar_lea.vmem %s2, %s266
        %p268 = pneg %p110
        %p269 = pneg %p107
        %p270 = pneg %p138
        %p271 = pneg %p135
        %p272 = scmp.lt.s32.totalorder %s23, 1
        %s273 = scalar_select %p272, %s23, 1
        %p274 = scmp.lt.s32.totalorder %s24, 0
        %s275 = scalar_select %p274, %s24, 0
        %s276 = sadd.s32 %s275, %s273
        %s277 = smul.addr %s276, 4
        %s278 = scalar_lea.vmem %s3, %s277
        %p279 = pneg %p166
        %p280 = pneg %p163
        %s281 = sand.u32 %s153, 1
        %s282 = scalar_lea.sflag [#allocation3], %s281
        %s283 = sand.u32 %s153, 1
        %s284 = smul.addr %s283, 32
        %s285 = scalar_lea.vmem [#allocation2], %s284
        %s286 = smul.u32 4, %s24
        %p287 = scmp.lt.s32.totalorder %s23, 1
        %s288 = scalar_select %p287, %s23, 1
        %p289 = scmp.lt.s32.totalorder %s286, 3
        %s290 = scalar_select %p289, %s286, 3
        %s291 = smul.addr %s288, 4
        %s292 = sadd.s32 %s290, %s291
        %s293 = smul.addr %s292, 4
        %s294 = scalar_lea.vmem %s0, %s293
        %s295 = smul.u32 4, %s24
        %s296 = smul.u32 4, %s24
        %p297 = scmp.lt.s32.totalorder %s23, 1
        %s298 = scalar_select %p297, %s23, 1
        %p299 = scmp.lt.s32.totalorder %s296, 3
        %s300 = scalar_select %p299, %s296, 3
        %s301 = smul.addr %s300, 2
        %s302 = smul.addr %s298, 16
        %s303 = sadd.s32 %s301, %s302
        %s304 = smul.addr %s303, 4
        %s305 = scalar_lea.vmem %s1, %s304
        %s306 = smul.u32 4, %s24
        %s307 = smul.u32 4, %s24
        %p308 = scmp.lt.s32.totalorder %s23, 1
        %s309 = scalar_select %p308, %s23, 1
        %p310 = scmp.lt.s32.totalorder %s307, 3
        %s311 = scalar_select %p310, %s307, 3
        %s312 = smul.addr %s311, 2
        %s313 = sadd.s32 %s312, 8
        %s314 = smul.addr %s309, 16
        %s315 = sadd.s32 %s313, %s314
        %s316 = smul.addr %s315, 4
        %s317 = scalar_lea.vmem %s2, %s316
        %s318 = smul.u32 4, %s24
        %p319 = scmp.lt.s32.totalorder %s23, 1
        %s320 = scalar_select %p319, %s23, 1
        %p321 = scmp.lt.s32.totalorder %s24, 0
        %s322 = scalar_select %p321, %s24, 0
        %s323 = sadd.s32 %s322, %s320
        %s324 = smul.addr %s323, 4
        %s325 = scalar_lea.vmem %s3, %s324
        %s326 = smul.u32 4, %s24
        %v328 = vld [vmem:[%s294] sm:$0xf]
        %v329 = vld [vmem:[%s305] sm:$0xf]
        %v330 = vld [vmem:[%s305 + $0x4] sm:$0xf]
        %v331 = vld [vmem:[%s317] sm:$0xf]
        %v332 = vld [vmem:[%s317 + $0x4] sm:$0xf]
        %v335 = vunpack.c.l.b16 %v329
        %v336 = vunpack.c.l.b16 %v330
        %v337 = vpack.c.b16 %v336, %v335
        %vm338 = vcmask 64512
        %v340 = vsel %vm338, %v328, 0
        %v343 = vsel %vm338, %v337, 0
        %345 = vmatprep.subr.bf16.mxu0 0
        %346 = vmatpush1.bf16.xpose.msra.mxu0 0
        %347 = vmatprep.subr.bf16.mxu0 0
        %348 = vmatpush1.bf16.xpose.msra.mxu0 0
        %349 = vmatprep.subr.bf16.mxu0 0
        %350 = vmatpush1.bf16.xpose.msra.mxu0 0
        %351 = vmatprep.subr.bf16.mxu0 0
        %352 = vmatpush1.bf16.xpose.msra.mxu0 0
        %353 = vmatprep.subr.bf16.mxu0 0
        %354 = vmatpush1.bf16.xpose.msra.mxu0 0
        %355 = vmatprep.subr.bf16.mxu0 0
        %356 = vmatpush1.bf16.xpose.msra.mxu0 0
        %357 = vmatprep.subr.bf16.mxu0 0
        %358 = vmatpush1.bf16.xpose.msra.mxu0 0
        %359 = vmatprep.subr.bf16.mxu0 0
        %360 = vmatpush1.bf16.xpose.msra.mxu0 %v343
        %361 = vmatprep.subr.bf16.mxu0 0
        %362 = vmatpush2.bf16.xpose.msra.mxu0 0
        %363 = vmatprep.subr.bf16.mxu0 0
        %364 = vmatpush2.bf16.xpose.msra.mxu0 0
        %365 = vmatprep.subr.bf16.mxu0 0
        %366 = vmatpush2.bf16.xpose.msra.mxu0 0
        %367 = vmatprep.subr.bf16.mxu0 0
        %368 = vmatpush2.bf16.xpose.msra.mxu0 0
        %369 = vmatprep.subr.bf16.mxu0 0
        %370 = vmatpush2.bf16.xpose.msra.mxu0 0
        %371 = vmatprep.subr.bf16.mxu0 0
        %372 = vmatpush2.bf16.xpose.msra.mxu0 0
        %373 = vmatprep.subr.bf16.mxu0 0
        %374 = vmatpush2.bf16.xpose.msra.mxu0 0
        %375 = vmatprep.subr.bf16.mxu0 0
        %376 = vmatpush2.bf16.xpose.msra.mxu0 0
        %377 = vmatprep.mubr.bf16.mxu0 0
        %378 = vmatmul.mubr.bf16.gmra.mxu0 %v340
        %v379 = vpop.f32.mrf.mxu0
        %v380 = vadd.f32 0.0, %v379
        %v381 = vpop.f32.mrf.mxu0
        %v382 = vpop.f32.mrf.mxu0
        %v383 = vpop.f32.mrf.mxu0
        %384 = vdwg.mxu0
        %v385 = vmul.f32 %v380, 0.35355338
        %vm386 = vcmask 130048
        %v387 = vsel %vm386, %v385, -inf
        %388 = vmax.xlane.f32.xlu0 %v387
        %v389 = vpop.xlane.xlu0 %388
        %v390 = vsub.f32 %v385, %v389
        %v391 = vmul.f32 %v390, 1.442695
        %v392 = vpow.pop %v391
        %v393 = vsel %vm386, %v392, 0.0
        %394 = vadd.xlane.f32.xlu0 %v393
        %v395 = vpop.xlane.xlu0 %394
        %v396 = vrcp.pop %v395
        %v397 = vmul.f32 %v392, %v396
        %398 = vst.msk [vmem:[%s285] sm:$0xff] %vm386, %v397
        %v399 = vpack.c.bf16 %v397, %v397
        %v402 = vunpack.c.l.b16 %v331
        %v403 = vunpack.c.l.b16 %v332
        %v404 = vpack.c.b16 %v403, %v402
        %v407 = vsel %vm386, %v399, 0
        %409 = vmatprep.subr.bf16.mxu0 0
        %410 = vmatpush1.bf16.msra.mxu0 0
        %411 = vmatprep.subr.bf16.mxu0 0
        %412 = vmatpush1.bf16.msra.mxu0 0
        %413 = vmatprep.subr.bf16.mxu0 0
        %414 = vmatpush1.bf16.msra.mxu0 0
        %415 = vmatprep.subr.bf16.mxu0 0
        %416 = vmatpush1.bf16.msra.mxu0 0
        %417 = vmatprep.subr.bf16.mxu0 0
        %418 = vmatpush1.bf16.msra.mxu0 0
        %419 = vmatprep.subr.bf16.mxu0 0
        %420 = vmatpush1.bf16.msra.mxu0 0
        %421 = vmatprep.subr.bf16.mxu0 0
        %422 = vmatpush1.bf16.msra.mxu0 0
        %423 = vmatprep.subr.bf16.mxu0 0
        %424 = vmatpush1.bf16.msra.mxu0 %v404
        %425 = vmatprep.subr.bf16.mxu0 0
        %426 = vmatpush2.bf16.msra.mxu0 0
        %427 = vmatprep.subr.bf16.mxu0 0
        %428 = vmatpush2.bf16.msra.mxu0 0
        %429 = vmatprep.subr.bf16.mxu0 0
        %430 = vmatpush2.bf16.msra.mxu0 0
        %431 = vmatprep.subr.bf16.mxu0 0
        %432 = vmatpush2.bf16.msra.mxu0 0
        %433 = vmatprep.subr.bf16.mxu0 0
        %434 = vmatpush2.bf16.msra.mxu0 0
        %435 = vmatprep.subr.bf16.mxu0 0
        %436 = vmatpush2.bf16.msra.mxu0 0
        %437 = vmatprep.subr.bf16.mxu0 0
        %438 = vmatpush2.bf16.msra.mxu0 0
        %439 = vmatprep.subr.bf16.mxu0 0
        %440 = vmatpush2.bf16.msra.mxu0 0
        %441 = vmatprep.mubr.bf16.mxu0 0
        %442 = vmatmul.mubr.bf16.gmra.mxu0 %v407
        %v443 = vpop.f32.mrf.mxu0
        %v444 = vadd.f32 0.0, %v443
        %v445 = vpop.f32.mrf.mxu0
        %v446 = vpop.f32.mrf.mxu0
        %v447 = vpop.f32.mrf.mxu0
        %448 = vdwg.mxu0
        %s449 = scalar_lea.vmem %s294, 4
        %v450 = vld [vmem:[%s449] sm:$0xf]
        %s451 = scalar_lea.vmem %s305, 8
        %v452 = vld [vmem:[%s451] sm:$0xf]
        %v453 = vld [vmem:[%s451 + $0x4] sm:$0xf]
        %s454 = scalar_lea.vmem %s317, 8
        %v455 = vld [vmem:[%s454] sm:$0xf]
        %v456 = vld [vmem:[%s454 + $0x4] sm:$0xf]
        %v459 = vunpack.c.l.b16 %v452
        %v460 = vunpack.c.l.b16 %v453
        %v461 = vpack.c.b16 %v460, %v459
        %v463 = vsel %vm338, %v450, 0
        %v466 = vsel %vm338, %v461, 0
        %468 = vmatprep.subr.bf16.mxu0 0
        %469 = vmatpush1.bf16.xpose.msra.mxu0 0
        %470 = vmatprep.subr.bf16.mxu0 0
        %471 = vmatpush1.bf16.xpose.msra.mxu0 0
        %472 = vmatprep.subr.bf16.mxu0 0
        %473 = vmatpush1.bf16.xpose.msra.mxu0 0
        %474 = vmatprep.subr.bf16.mxu0 0
        %475 = vmatpush1.bf16.xpose.msra.mxu0 0
        %476 = vmatprep.subr.bf16.mxu0 0
        %477 = vmatpush1.bf16.xpose.msra.mxu0 0
        %478 = vmatprep.subr.bf16.mxu0 0
        %479 = vmatpush1.bf16.xpose.msra.mxu0 0
        %480 = vmatprep.subr.bf16.mxu0 0
        %481 = vmatpush1.bf16.xpose.msra.mxu0 0
        %482 = vmatprep.subr.bf16.mxu0 0
        %483 = vmatpush1.bf16.xpose.msra.mxu0 %v466
        %484 = vmatprep.subr.bf16.mxu0 0
        %485 = vmatpush2.bf16.xpose.msra.mxu0 0
        %486 = vmatprep.subr.bf16.mxu0 0
        %487 = vmatpush2.bf16.xpose.msra.mxu0 0
        %488 = vmatprep.subr.bf16.mxu0 0
        %489 = vmatpush2.bf16.xpose.msra.mxu0 0
        %490 = vmatprep.subr.bf16.mxu0 0
        %491 = vmatpush2.bf16.xpose.msra.mxu0 0
        %492 = vmatprep.subr.bf16.mxu0 0
        %493 = vmatpush2.bf16.xpose.msra.mxu0 0
        %494 = vmatprep.subr.bf16.mxu0 0
        %495 = vmatpush2.bf16.xpose.msra.mxu0 0
        %496 = vmatprep.subr.bf16.mxu0 0
        %497 = vmatpush2.bf16.xpose.msra.mxu0 0
        %498 = vmatprep.subr.bf16.mxu0 0
        %499 = vmatpush2.bf16.xpose.msra.mxu0 0
        %500 = vmatprep.mubr.bf16.mxu0 0
        %501 = vmatmul.mubr.bf16.gmra.mxu0 %v463
        %v502 = vpop.f32.mrf.mxu0
        %v503 = vadd.f32 0.0, %v502
        %v504 = vpop.f32.mrf.mxu0
        %v505 = vpop.f32.mrf.mxu0
        %v506 = vpop.f32.mrf.mxu0
        %507 = vdwg.mxu0
        %v508 = vmul.f32 %v503, 0.35355338
        %v509 = vsel %vm386, %v508, -inf
        %510 = vmax.xlane.f32.xlu0 %v509
        %v511 = vpop.xlane.xlu0 %510
        %v512 = vsub.f32 %v508, %v511
        %v513 = vmul.f32 %v512, 1.442695
        %v514 = vpow.pop %v513
        %v515 = vsel %vm386, %v514, 0.0
        %516 = vadd.xlane.f32.xlu0 %v515
        %v517 = vpop.xlane.xlu0 %516
        %v518 = vrcp.pop %v517
        %v519 = vmul.f32 %v514, %v518
        %s520 = scalar_lea.vmem %s285, 8 [#allocation2]
        %521 = vst.msk [vmem:[%s520] sm:$0xff] %vm386, %v519
        %v522 = vpack.c.bf16 %v519, %v519
        %v525 = vunpack.c.l.b16 %v455
        %v526 = vunpack.c.l.b16 %v456
        %v527 = vpack.c.b16 %v526, %v525
        %v530 = vsel %vm386, %v522, 0
        %532 = vmatprep.subr.bf16.mxu0 0
        %533 = vmatpush1.bf16.msra.mxu0 0
        %534 = vmatprep.subr.bf16.mxu0 0
        %535 = vmatpush1.bf16.msra.mxu0 0
        %536 = vmatprep.subr.bf16.mxu0 0
        %537 = vmatpush1.bf16.msra.mxu0 0
        %538 = vmatprep.subr.bf16.mxu0 0
        %539 = vmatpush1.bf16.msra.mxu0 0
        %540 = vmatprep.subr.bf16.mxu0 0
        %541 = vmatpush1.bf16.msra.mxu0 0
        %542 = vmatprep.subr.bf16.mxu0 0
        %543 = vmatpush1.bf16.msra.mxu0 0
        %544 = vmatprep.subr.bf16.mxu0 0
        %545 = vmatpush1.bf16.msra.mxu0 0
        %546 = vmatprep.subr.bf16.mxu0 0
        %547 = vmatpush1.bf16.msra.mxu0 %v527
        %548 = vmatprep.subr.bf16.mxu0 0
        %549 = vmatpush2.bf16.msra.mxu0 0
        %550 = vmatprep.subr.bf16.mxu0 0
        %551 = vmatpush2.bf16.msra.mxu0 0
        %552 = vmatprep.subr.bf16.mxu0 0
        %553 = vmatpush2.bf16.msra.mxu0 0
        %554 = vmatprep.subr.bf16.mxu0 0
        %555 = vmatpush2.bf16.msra.mxu0 0
        %556 = vmatprep.subr.bf16.mxu0 0
        %557 = vmatpush2.bf16.msra.mxu0 0
        %558 = vmatprep.subr.bf16.mxu0 0
        %559 = vmatpush2.bf16.msra.mxu0 0
        %560 = vmatprep.subr.bf16.mxu0 0
        %561 = vmatpush2.bf16.msra.mxu0 0
        %562 = vmatprep.subr.bf16.mxu0 0
        %563 = vmatpush2.bf16.msra.mxu0 0
        %564 = vmatprep.mubr.bf16.mxu0 0
        %565 = vmatmul.mubr.bf16.gmra.mxu0 %v530
        %v566 = vpop.f32.mrf.mxu0
        %v567 = vadd.f32 0.0, %v566
        %v568 = vpop.f32.mrf.mxu0
        %v569 = vpop.f32.mrf.mxu0
        %v570 = vpop.f32.mrf.mxu0
        %571 = vdwg.mxu0
        %s572 = scalar_lea.vmem %s294, 8
        %v573 = vld [vmem:[%s572] sm:$0xf]
        %s574 = scalar_lea.vmem %s305, 16
        %v575 = vld [vmem:[%s574] sm:$0xf]
        %v576 = vld [vmem:[%s574 + $0x4] sm:$0xf]
        %s577 = scalar_lea.vmem %s317, 16
        %v578 = vld [vmem:[%s577] sm:$0xf]
        %v579 = vld [vmem:[%s577 + $0x4] sm:$0xf]
        %v582 = vunpack.c.l.b16 %v575
        %v583 = vunpack.c.l.b16 %v576
        %v584 = vpack.c.b16 %v583, %v582
        %v586 = vsel %vm338, %v573, 0
        %v589 = vsel %vm338, %v584, 0
        %591 = vmatprep.subr.bf16.mxu0 0
        %592 = vmatpush1.bf16.xpose.msra.mxu0 0
        %593 = vmatprep.subr.bf16.mxu0 0
        %594 = vmatpush1.bf16.xpose.msra.mxu0 0
        %595 = vmatprep.subr.bf16.mxu0 0
        %596 = vmatpush1.bf16.xpose.msra.mxu0 0
        %597 = vmatprep.subr.bf16.mxu0 0
        %598 = vmatpush1.bf16.xpose.msra.mxu0 0
        %599 = vmatprep.subr.bf16.mxu0 0
        %600 = vmatpush1.bf16.xpose.msra.mxu0 0
        %601 = vmatprep.subr.bf16.mxu0 0
        %602 = vmatpush1.bf16.xpose.msra.mxu0 0
        %603 = vmatprep.subr.bf16.mxu0 0
        %604 = vmatpush1.bf16.xpose.msra.mxu0 0
        %605 = vmatprep.subr.bf16.mxu0 0
        %606 = vmatpush1.bf16.xpose.msra.mxu0 %v589
        %607 = vmatprep.subr.bf16.mxu0 0
        %608 = vmatpush2.bf16.xpose.msra.mxu0 0
        %609 = vmatprep.subr.bf16.mxu0 0
        %610 = vmatpush2.bf16.xpose.msra.mxu0 0
        %611 = vmatprep.subr.bf16.mxu0 0
        %612 = vmatpush2.bf16.xpose.msra.mxu0 0
        %613 = vmatprep.subr.bf16.mxu0 0
        %614 = vmatpush2.bf16.xpose.msra.mxu0 0
        %615 = vmatprep.subr.bf16.mxu0 0
        %616 = vmatpush2.bf16.xpose.msra.mxu0 0
        %617 = vmatprep.subr.bf16.mxu0 0
        %618 = vmatpush2.bf16.xpose.msra.mxu0 0
        %619 = vmatprep.subr.bf16.mxu0 0
        %620 = vmatpush2.bf16.xpose.msra.mxu0 0
        %621 = vmatprep.subr.bf16.mxu0 0
        %622 = vmatpush2.bf16.xpose.msra.mxu0 0
        %623 = vmatprep.mubr.bf16.mxu0 0
        %624 = vmatmul.mubr.bf16.gmra.mxu0 %v586
        %v625 = vpop.f32.mrf.mxu0
        %v626 = vadd.f32 0.0, %v625
        %v627 = vpop.f32.mrf.mxu0
        %v628 = vpop.f32.mrf.mxu0
        %v629 = vpop.f32.mrf.mxu0
        %630 = vdwg.mxu0
        %v631 = vmul.f32 %v626, 0.35355338
        %v632 = vsel %vm386, %v631, -inf
        %633 = vmax.xlane.f32.xlu0 %v632
        %v634 = vpop.xlane.xlu0 %633
        %v635 = vsub.f32 %v631, %v634
        %v636 = vmul.f32 %v635, 1.442695
        %v637 = vpow.pop %v636
        %v638 = vsel %vm386, %v637, 0.0
        %639 = vadd.xlane.f32.xlu0 %v638
        %v640 = vpop.xlane.xlu0 %639
        %v641 = vrcp.pop %v640
        %v642 = vmul.f32 %v637, %v641
        %s643 = scalar_lea.vmem %s285, 16 [#allocation2]
        %644 = vst.msk [vmem:[%s643] sm:$0xff] %vm386, %v642
        %v645 = vpack.c.bf16 %v642, %v642
        %v648 = vunpack.c.l.b16 %v578
        %v649 = vunpack.c.l.b16 %v579
        %v650 = vpack.c.b16 %v649, %v648
        %v653 = vsel %vm386, %v645, 0
        %655 = vmatprep.subr.bf16.mxu0 0
        %656 = vmatpush1.bf16.msra.mxu0 0
        %657 = vmatprep.subr.bf16.mxu0 0
        %658 = vmatpush1.bf16.msra.mxu0 0
        %659 = vmatprep.subr.bf16.mxu0 0
        %660 = vmatpush1.bf16.msra.mxu0 0
        %661 = vmatprep.subr.bf16.mxu0 0
        %662 = vmatpush1.bf16.msra.mxu0 0
        %663 = vmatprep.subr.bf16.mxu0 0
        %664 = vmatpush1.bf16.msra.mxu0 0
        %665 = vmatprep.subr.bf16.mxu0 0
        %666 = vmatpush1.bf16.msra.mxu0 0
        %667 = vmatprep.subr.bf16.mxu0 0
        %668 = vmatpush1.bf16.msra.mxu0 0
        %669 = vmatprep.subr.bf16.mxu0 0
        %670 = vmatpush1.bf16.msra.mxu0 %v650
        %671 = vmatprep.subr.bf16.mxu0 0
        %672 = vmatpush2.bf16.msra.mxu0 0
        %673 = vmatprep.subr.bf16.mxu0 0
        %674 = vmatpush2.bf16.msra.mxu0 0
        %675 = vmatprep.subr.bf16.mxu0 0
        %676 = vmatpush2.bf16.msra.mxu0 0
        %677 = vmatprep.subr.bf16.mxu0 0
        %678 = vmatpush2.bf16.msra.mxu0 0
        %679 = vmatprep.subr.bf16.mxu0 0
        %680 = vmatpush2.bf16.msra.mxu0 0
        %681 = vmatprep.subr.bf16.mxu0 0
        %682 = vmatpush2.bf16.msra.mxu0 0
        %683 = vmatprep.subr.bf16.mxu0 0
        %684 = vmatpush2.bf16.msra.mxu0 0
        %685 = vmatprep.subr.bf16.mxu0 0
        %686 = vmatpush2.bf16.msra.mxu0 0
        %687 = vmatprep.mubr.bf16.mxu0 0
        %688 = vmatmul.mubr.bf16.gmra.mxu0 %v653
        %v689 = vpop.f32.mrf.mxu0
        %v690 = vadd.f32 0.0, %v689
        %v691 = vpop.f32.mrf.mxu0
        %v692 = vpop.f32.mrf.mxu0
        %v693 = vpop.f32.mrf.mxu0
        %694 = vdwg.mxu0
        %s695 = scalar_lea.vmem %s294, 12
        %v696 = vld [vmem:[%s695] sm:$0xf]
        %s697 = scalar_lea.vmem %s305, 24
        %v698 = vld [vmem:[%s697] sm:$0xf]
        %v699 = vld [vmem:[%s697 + $0x4] sm:$0xf]
        %s700 = scalar_lea.vmem %s317, 24
        %v701 = vld [vmem:[%s700] sm:$0xf]
        %v702 = vld [vmem:[%s700 + $0x4] sm:$0xf]
        %v705 = vunpack.c.l.b16 %v698
        %v706 = vunpack.c.l.b16 %v699
        %v707 = vpack.c.b16 %v706, %v705
        %v709 = vsel %vm338, %v696, 0
        %v712 = vsel %vm338, %v707, 0
        %714 = vmatprep.subr.bf16.mxu0 0
        %715 = vmatpush1.bf16.xpose.msra.mxu0 0
        %716 = vmatprep.subr.bf16.mxu0 0
        %717 = vmatpush1.bf16.xpose.msra.mxu0 0
        %718 = vmatprep.subr.bf16.mxu0 0
        %719 = vmatpush1.bf16.xpose.msra.mxu0 0
        %720 = vmatprep.subr.bf16.mxu0 0
        %721 = vmatpush1.bf16.xpose.msra.mxu0 0
        %722 = vmatprep.subr.bf16.mxu0 0
        %723 = vmatpush1.bf16.xpose.msra.mxu0 0
        %724 = vmatprep.subr.bf16.mxu0 0
        %725 = vmatpush1.bf16.xpose.msra.mxu0 0
        %726 = vmatprep.subr.bf16.mxu0 0
        %727 = vmatpush1.bf16.xpose.msra.mxu0 0
        %728 = vmatprep.subr.bf16.mxu0 0
        %729 = vmatpush1.bf16.xpose.msra.mxu0 %v712
        %730 = vmatprep.subr.bf16.mxu0 0
        %731 = vmatpush2.bf16.xpose.msra.mxu0 0
        %732 = vmatprep.subr.bf16.mxu0 0
        %733 = vmatpush2.bf16.xpose.msra.mxu0 0
        %734 = vmatprep.subr.bf16.mxu0 0
        %735 = vmatpush2.bf16.xpose.msra.mxu0 0
        %736 = vmatprep.subr.bf16.mxu0 0
        %737 = vmatpush2.bf16.xpose.msra.mxu0 0
        %738 = vmatprep.subr.bf16.mxu0 0
        %739 = vmatpush2.bf16.xpose.msra.mxu0 0
        %740 = vmatprep.subr.bf16.mxu0 0
        %741 = vmatpush2.bf16.xpose.msra.mxu0 0
        %742 = vmatprep.subr.bf16.mxu0 0
        %743 = vmatpush2.bf16.xpose.msra.mxu0 0
        %744 = vmatprep.subr.bf16.mxu0 0
        %745 = vmatpush2.bf16.xpose.msra.mxu0 0
        %746 = vmatprep.mubr.bf16.mxu0 0
        %747 = vmatmul.mubr.bf16.gmra.mxu0 %v709
        %v748 = vpop.f32.mrf.mxu0
        %v749 = vadd.f32 0.0, %v748
        %v750 = vpop.f32.mrf.mxu0
        %v751 = vpop.f32.mrf.mxu0
        %v752 = vpop.f32.mrf.mxu0
        %753 = vdwg.mxu0
        %v754 = vmul.f32 %v749, 0.35355338
        %v755 = vsel %vm386, %v754, -inf
        %756 = vmax.xlane.f32.xlu0 %v755
        %v757 = vpop.xlane.xlu0 %756
        %v758 = vsub.f32 %v754, %v757
        %v759 = vmul.f32 %v758, 1.442695
        %v760 = vpow.pop %v759
        %v761 = vsel %vm386, %v760, 0.0
        %762 = vadd.xlane.f32.xlu0 %v761
        %v763 = vpop.xlane.xlu0 %762
        %v764 = vrcp.pop %v763
        %v765 = vmul.f32 %v760, %v764
        %s766 = scalar_lea.vmem %s285, 24 [#allocation2]
        %767 = vst.msk [vmem:[%s766] sm:$0xff] %vm386, %v765
        %v768 = vpack.c.bf16 %v765, %v765
        %v771 = vunpack.c.l.b16 %v701
        %v772 = vunpack.c.l.b16 %v702
        %v773 = vpack.c.b16 %v772, %v771
        %v776 = vsel %vm386, %v768, 0
        %778 = vmatprep.subr.bf16.mxu0 0
        %779 = vmatpush1.bf16.msra.mxu0 0
        %780 = vmatprep.subr.bf16.mxu0 0
        %781 = vmatpush1.bf16.msra.mxu0 0
        %782 = vmatprep.subr.bf16.mxu0 0
        %783 = vmatpush1.bf16.msra.mxu0 0
        %784 = vmatprep.subr.bf16.mxu0 0
        %785 = vmatpush1.bf16.msra.mxu0 0
        %786 = vmatprep.subr.bf16.mxu0 0
        %787 = vmatpush1.bf16.msra.mxu0 0
        %788 = vmatprep.subr.bf16.mxu0 0
        %789 = vmatpush1.bf16.msra.mxu0 0
        %790 = vmatprep.subr.bf16.mxu0 0
        %791 = vmatpush1.bf16.msra.mxu0 0
        %792 = vmatprep.subr.bf16.mxu0 0
        %793 = vmatpush1.bf16.msra.mxu0 %v773
        %794 = vmatprep.subr.bf16.mxu0 0
        %795 = vmatpush2.bf16.msra.mxu0 0
        %796 = vmatprep.subr.bf16.mxu0 0
        %797 = vmatpush2.bf16.msra.mxu0 0
        %798 = vmatprep.subr.bf16.mxu0 0
        %799 = vmatpush2.bf16.msra.mxu0 0
        %800 = vmatprep.subr.bf16.mxu0 0
        %801 = vmatpush2.bf16.msra.mxu0 0
        %802 = vmatprep.subr.bf16.mxu0 0
        %803 = vmatpush2.bf16.msra.mxu0 0
        %804 = vmatprep.subr.bf16.mxu0 0
        %805 = vmatpush2.bf16.msra.mxu0 0
        %806 = vmatprep.subr.bf16.mxu0 0
        %807 = vmatpush2.bf16.msra.mxu0 0
        %808 = vmatprep.subr.bf16.mxu0 0
        %809 = vmatpush2.bf16.msra.mxu0 0
        %810 = vmatprep.mubr.bf16.mxu0 0
        %811 = vmatmul.mubr.bf16.gmra.mxu0 %v776
        %v812 = vpop.f32.mrf.mxu0
        %v813 = vadd.f32 0.0, %v812
        %v814 = vpop.f32.mrf.mxu0
        %v815 = vpop.f32.mrf.mxu0
        %v816 = vpop.f32.mrf.mxu0
        %817 = vdwg.mxu0
        %819 = vrot.lane.b32.xlu0 %v567, 8
        %v820 = vpop.permute.xlu0 %819
        %823 = vrot.lane.b32.xlu0 %v690, 16
        %v824 = vpop.permute.xlu0 %823
        %827 = vrot.lane.b32.xlu0 %v813, 24
        %v828 = vpop.permute.xlu0 %827
        %v830 = vsel %vm338, %v444, %v820
        %v831 = vsel %vm386, %v830, %v824
        %vm832 = vcmask 195584
        %v833 = vsel %vm832, %v831, %v828
        %v834 = vpack.c.bf16 %v833, %v833
        %vm835 = vcmask 257024
        %836 = vst.msk [vmem:[%s325] sm:$0xf] %vm835, %v834
        %p837 = scmp.lt.s32.totalorder %s23, 1
        %s838 = scalar_select %p837, %s23, 1
        %p839 = scmp.lt.s32.totalorder %s24, 0
        %s840 = scalar_select %p839, %s24, 0
        %s841 = sadd.s32 %s840, %s838
        %s842 = smul.addr %s841, 4
        %s843 = scalar_lea.vmem %s3, %s842
        %s844 = sand.u32 %s153, 1
        %s845 = scalar_lea.sflag [#allocation3], %s844
        %s846 = sand.u32 %s153, 1
        %s847 = smul.addr %s846, 32
        %s848 = scalar_lea.vmem [#allocation2], %s847
        // Predicated region
        $region33: #{gpt2_decoder_forward.24} parent=31 // pred_check
          %p849 = pneg %p135
        $region34: #{gpt2_decoder_forward.24} parent=31 // pred_check_branch
          %851 = sbr.rel (%p849) target = $region36
        $region35: #{gpt2_decoder_forward.24} parent=31 // pred_region
          _
        $region36: #{gpt2_decoder_forward.24} parent=31 // pred_fallthru
          _
        // Predicated region
        $region37: #{gpt2_decoder_forward.24} parent=31 // pred_check
          %p852 = pneg %p163
        $region38: #{gpt2_decoder_forward.24} parent=31 // pred_check_branch
          %854 = sbr.rel (%p852) target = $region40
        $region39: #{gpt2_decoder_forward.24} parent=31 // pred_region
          %s855 = smul.u32 4, %s24
          %s857 = ssub.s32 512, 512
          %858 = vsyncadd %s845, %s857
          %s859 = smul.addr %s23, 4
          %s860 = sadd.s32 %s855, %s859
          %s861 = smul.addr %s860, 128
          %s862 = scalar_lea.hbm %s4, %s861
          %s863 = sshll.u32 %s848, 4
          %s864 = int_to_ptr.vmem [resolvable:$true] %s863
          %869 = dma.vmem_to_hbm [thread:$0]  %s864, 512, %s862, %s845, 128, 128, 8
        $region40: #{gpt2_decoder_forward.24} parent=31 // pred_fallthru
          _
      $region32: #{gpt2_decoder_forward.24} parent=5 // pred_fallthru
        _
      %p870 = scmp.le.s32.totalorder 2, %s14
      // Predicated region
      $region41: #{gpt2_decoder_forward.24} parent=5 // pred_check
        %p871 = pneg %p870
      $region42: #{gpt2_decoder_forward.24} parent=5 // pred_check_branch
        %873 = sbr.rel (%p871) target = $region44
      $region43: #{gpt2_decoder_forward.24} parent=5 // pred_region
        %s874 = ssub.s32 %s14, 2
        // Predicated region
        $region45: #{gpt2_decoder_forward.24} parent=43 // pred_check
          %p875 = pneg %p141
        $region46: #{gpt2_decoder_forward.24} parent=43 // pred_check_branch
          %877 = sbr.rel (%p875) target = $region48
        $region47: #{gpt2_decoder_forward.24} parent=43 // pred_region
          %p878 = scmp.lt.s32.totalorder %s25, 1
          %s879 = scalar_select %p878, %s25, 1
          %p880 = scmp.lt.s32.totalorder %s26, 0
          %s881 = scalar_select %p880, %s26, 0
          %s882 = sadd.s32 %s881, %s879
          %s883 = smul.addr %s882, 4
          %s884 = scalar_lea.vmem %s3, %s883
        $region48: #{gpt2_decoder_forward.24} parent=43 // pred_fallthru
          _
        // Predicated region
        $region49: #{gpt2_decoder_forward.24} parent=43 // pred_check
          %p885 = pneg %p169
        $region50: #{gpt2_decoder_forward.24} parent=43 // pred_check_branch
          %887 = sbr.rel (%p885) target = $region52
        $region51: #{gpt2_decoder_forward.24} parent=43 // pred_region
          %s888 = sand.u32 %s154, 1
          %s889 = scalar_lea.sflag [#allocation3], %s888
          %s890 = sand.u32 %s154, 1
          %s891 = smul.addr %s890, 32
          %s892 = scalar_lea.vmem [#allocation2], %s891
          %893 = dma.done %s889, 512
        $region52: #{gpt2_decoder_forward.24} parent=43 // pred_fallthru
          _
      $region44: #{gpt2_decoder_forward.24} parent=5 // pred_fallthru
        _
    $region6: #{gpt2_decoder_forward.24} parent=1 // loop_footer
      %s18 = sadd.s32 1, %s14
    $region7: #{gpt2_decoder_forward.24} parent=1 // loop_footer_branch
      %13 = sbr.rel target = $region3
    $region8: #{gpt2_decoder_forward.24} parent=1 // loop_exit
      _
    %894 = vsyncpa [#allocation3], 1
    %s895 = scalar_lea.sflag [#allocation3], 1
    %896 = vsyncpa %s895, 1

// kernel: gpt2_decoder_forward.37
$region0: #{gpt2_decoder_forward.37}
  #allocation0 [shape = 'u32[]', space=smem, size = 0x4, offset = 0x4, fixed_abs, tag = 'smem constant byte address 0x4 - core index']
  #allocation1 [shape = 'u32[144,128]{1,0:T(1,128)}', space=vmem, size = 0x12000, scoped, tag = 'internal scratch']
  %s0 = inlined_call_operand.vmem [shape: f32[16,32], index: 0, kind: input, shape index: {}]
  %s1 = inlined_call_operand.vmem [shape: f32[1,32], index: 1, kind: input, shape index: {}]
  %s2 = inlined_call_operand.vmem [shape: f32[1,32], index: 2, kind: input, shape index: {}]
  %s3 = inlined_call_operand.vmem [shape: f32[16,32], index: 3, kind: output, shape index: {}]
  %s4 = sld [smem:[#allocation0]]
  $region22: #{gpt2_decoder_forward.37} parent=0
    _
  %s6 = ssub.s32 1, %s4
  %s7 = scalar_select 0, %s6, %s4
  // Predicated region
  $region2: #{gpt2_decoder_forward.37} parent=0 // pred_check
    _
  $region3: #{gpt2_decoder_forward.37} parent=0 // pred_check_branch
    %9 = sbr.rel (0) target = $region5
  $region4: #{gpt2_decoder_forward.37} parent=0 // pred_region
    _
  $region5: #{gpt2_decoder_forward.37} parent=0 // pred_fallthru
    _
  // Predicated region
  $region6: #{gpt2_decoder_forward.37} parent=0 // pred_check
    _
  $region7: #{gpt2_decoder_forward.37} parent=0 // pred_check_branch
    %11 = sbr.rel (0) target = $region9
  $region8: #{gpt2_decoder_forward.37} parent=0 // pred_region
    _
  $region9: #{gpt2_decoder_forward.37} parent=0 // pred_fallthru
    _
  // Predicated region
  $region10: #{gpt2_decoder_forward.37} parent=0 // pred_check
    _
  $region11: #{gpt2_decoder_forward.37} parent=0 // pred_check_branch
    %13 = sbr.rel (0) target = $region13
  $region12: #{gpt2_decoder_forward.37} parent=0 // pred_region
    _
  $region13: #{gpt2_decoder_forward.37} parent=0 // pred_fallthru
    _
  %v14 = vld [vmem:[%s0] sm:$0xff]
  %v15 = vld [vmem:[%s0 + $0x8] sm:$0xff]
  %vm16 = vcmask 261120
  %v17 = vsel %vm16, %v14, 0.0
  %18 = vadd.xlane.f32.xlu0 %v17
  %v19 = vpop.xlane.xlu0 %18
  %v20 = vsel %vm16, %v15, 0.0
  %21 = vadd.xlane.f32.xlu0 %v20
  %v22 = vpop.xlane.xlu0 %21
  %v23 = vrcp.pop 32.0
  %v24 = vmul.f32 %v19, %v23
  %v25 = vmul.f32 %v22, %v23
  %v26 = vsub.f32 %v14, %v24
  %v27 = vsub.f32 %v15, %v25
  %v28 = vmul.f32 %v26, %v26
  %v29 = vmul.f32 %v27, %v27
  %v30 = vsel %vm16, %v28, 0.0
  %31 = vadd.xlane.f32.xlu0 %v30
  %v32 = vpop.xlane.xlu0 %31
  %v33 = vsel %vm16, %v29, 0.0
  %34 = vadd.xlane.f32.xlu0 %v33
  %v35 = vpop.xlane.xlu0 %34
  %v36 = vmul.f32 %v32, %v23
  %v37 = vmul.f32 %v35, %v23
  %v38 = vadd.f32 %v36, 1e-05
  %v39 = vadd.f32 %v37, 1e-05
  %v40 = vrsqrt.pop %v38
  %v41 = vrsqrt.pop %v39
  %v42 = vmul.f32 %v26, %v40
  %v43 = vmul.f32 %v27, %v41
  %v44 = vld [vmem:[%s1] sm:$0x1]
  %v46 = vlaneseq
  %v47 = vshrl.u32 %v46, 7
  %v48 = vsub.s32 0, %v47
  %v49 = vrot.slane %v44, %v48
  %v51 = vmul.f32 %v42, %v49
  %v52 = vmul.f32 %v43, %v49
  %v53 = vld [vmem:[%s2] sm:$0x1]
  %v55 = vlaneseq
  %v56 = vshrl.u32 %v55, 7
  %v57 = vsub.s32 0, %v56
  %v58 = vrot.slane %v53, %v57
  %v60 = vadd.f32 %v51, %v58
  %v61 = vadd.f32 %v52, %v58
  %62 = vst.msk [vmem:[%s3] sm:$0xff] %vm16, %v60
  %63 = vst.msk [vmem:[%s3 + $0x8] sm:$0xff] %vm16, %v61
  // Predicated region
  $region14: #{gpt2_decoder_forward.37} parent=0 // pred_check
    _
  $region15: #{gpt2_decoder_forward.37} parent=0 // pred_check_branch
    %65 = sbr.rel (0) target = $region17
  $region16: #{gpt2_decoder_forward.37} parent=0 // pred_region
    _
  $region17: #{gpt2_decoder_forward.37} parent=0 // pred_fallthru
    _
  // Predicated region
  $region18: #{gpt2_decoder_forward.37} parent=0 // pred_check
    _
  $region19: #{gpt2_decoder_forward.37} parent=0 // pred_check_branch
    %67 = sbr.rel (0) target = $region21
  $region20: #{gpt2_decoder_forward.37} parent=0 // pred_region
    _
  $region21: #{gpt2_decoder_forward.37} parent=0 // pred_fallthru
    _

</llo_original>
